<compile_context>
chip_gen: v6e
topology: v6e:2x2x1
jax: 0.10.0
libtpu: 0.0.40
codegen_flags: <defaults>
</compile_context>

<pallas_src>
import functools

import numpy as np
import jax
import jax.numpy as jnp
from jax.experimental import pallas as pl
from jax.experimental.pallas import tpu as pltpu

CP = 128                      # padded channel width (lane-dense everywhere)
_VMEM_LIMIT = 64 * 1024 * 1024


# ----------------------------------------------------------------------------
# Kernel 1: fused GEMM + bias + per-channel ReLU mask   (used for all 1x1 convs)
# ----------------------------------------------------------------------------
def _gemm_kernel(a_ref, w_ref, b_ref, m_ref, o_ref):
    acc = jnp.dot(a_ref[...], w_ref[...], preferred_element_type=jnp.float32)
    acc = acc + b_ref[...]
    acc = jnp.where(m_ref[...] != 0.0, jnp.maximum(acc, 0.0), acc)
    o_ref[...] = acc.astype(o_ref.dtype)


def gemm_bias_act(a, w, b, m, tm=512):
    """a: (M, K) bf16, w: (K, Cout) bf16, b/m: (1, Cout) f32 -> (M, Cout) bf16."""
    M, K = a.shape
    Cout = w.shape[1]
    Mp = ((M + 7) // 8) * 8
    if Mp <= tm:
        tm = Mp
    else:
        Mp = ((M + tm - 1) // tm) * tm
    if Mp != M:
        a = jnp.pad(a, ((0, Mp - M), (0, 0)))
    out = pl.pallas_call(
        _gemm_kernel,
        out_shape=jax.ShapeDtypeStruct((Mp, Cout), jnp.bfloat16),
        grid=(Mp // tm,),
        in_specs=[
            pl.BlockSpec((tm, K), lambda i: (i, 0)),
            pl.BlockSpec((K, Cout), lambda i: (0, 0)),
            pl.BlockSpec((1, Cout), lambda i: (0, 0)),
            pl.BlockSpec((1, Cout), lambda i: (0, 0)),
        ],
        out_specs=pl.BlockSpec((tm, Cout), lambda i: (i, 0)),
        compiler_params=pltpu.CompilerParams(
            dimension_semantics=("parallel",),
            vmem_limit_bytes=_VMEM_LIMIT),
    )(a, w, b, m)
    if Mp != M:
        out = out[:M]
    return out


def conv1x1(x, p):
    """x: (N, H, W, CP) bf16 -> (N, H, W, CP) bf16 via one lane-dense GEMM."""
    N, H, W, C = x.shape
    out = gemm_bias_act(x.reshape(N * H * W, C), p["w"], p["b"], p["m"])
    return out.reshape(N, H, W, -1)


# ----------------------------------------------------------------------------
# Kernel 2: 3x3 conv (stride 1 or 2) + bias + ReLU, no im2col materialization.
# Grid = (N, OH); the whole padded image block is revisited across OH (one DMA
# per image); each step computes one output row with 9 shifted MXU dots.
# ----------------------------------------------------------------------------
def _conv3x3_kernel(x_ref, w_ref, b_ref, o_ref, *, stride, ow, cp):
    oh = pl.program_id(1)
    cout = w_ref.shape[2]
    acc = jnp.zeros((ow, cout), jnp.float32)
    for di in range(3):
        row = x_ref[0, oh * stride + di]          # (Wp', cp) or (Wp//2, 2*cp)
        for dj in range(3):
            if stride == 1:
                lhs = row[dj:dj + ow, :]
            else:
                par, coff = dj % 2, dj // 2       # even/odd column plane, +0/+1 shift
                lhs = row[coff:coff + ow, par * cp:(par + 1) * cp]
            acc = acc + jnp.dot(lhs, w_ref[di * 3 + dj],
                                preferred_element_type=jnp.float32)
    acc = jnp.maximum(acc + b_ref[...], 0.0)
    o_ref[0, 0] = acc.astype(o_ref.dtype)


def conv3x3(x, p, stride=1):
    """x: (N, H, W, CP) bf16, pad=1 -> (N, H/stride, W/stride, CP) bf16 (ReLU)."""
    N, H, W, C = x.shape
    OH, OW = H // stride, W // stride
    xp = jnp.pad(x, ((0, 0), (1, 1), (1, 1), (0, 0)))
    if stride == 2:
        # even/odd column split so every in-kernel tap is an unstrided, 128-aligned slice
        xin = jnp.concatenate([xp[:, :, 0::2, :], xp[:, :, 1::2, :]], axis=-1)
    else:
        xin = xp
    cout = p["w"].shape[2]
    return pl.pallas_call(
        functools.partial(_conv3x3_kernel, stride=stride, ow=OW, cp=C),
        out_shape=jax.ShapeDtypeStruct((N, OH, OW, cout), jnp.bfloat16),
        grid=(N, OH),
        in_specs=[
            pl.BlockSpec((1,) + xin.shape[1:], lambda n, oh: (n, 0, 0, 0)),
            pl.BlockSpec(p["w"].shape, lambda n, oh: (0, 0, 0)),
            pl.BlockSpec((1, cout), lambda n, oh: (0, 0)),
        ],
        out_specs=pl.BlockSpec((1, 1, OW, cout), lambda n, oh: (n, oh, 0, 0)),
        compiler_params=pltpu.CompilerParams(
            dimension_semantics=("parallel", "parallel"),
            vmem_limit_bytes=_VMEM_LIMIT),
    )(xin, p["w"], p["b"])


# ----------------------------------------------------------------------------
# Kernel 3: bilinear 2x upsample (align_corners=True), C kept in the lane dim.
# Height pass = one lane-dense GEMM, width pass = 128-aligned weighted slice adds.
# Optional fused "add" operand (used to merge the low-level features -> no concat).
# ----------------------------------------------------------------------------
def _bilinear_matrix(out_size, in_size):
    if in_size == 1 or out_size == 1:
        return jnp.asarray(np.full((out_size, in_size), 1.0 / in_size, np.float32))
    pos = np.arange(out_size, dtype=np.float64) * (in_size - 1) / (out_size - 1)
    lo = np.floor(pos).astype(np.int64)
    hi = np.minimum(lo + 1, in_size - 1)
    frac = (pos - lo).astype(np.float32)
    m = np.zeros((out_size, in_size), np.float32)
    m[np.arange(out_size), lo] += 1.0 - frac
    m[np.arange(out_size), hi] += frac
    return jnp.asarray(m)


def _bilinear_lut(out_size, in_size):
    lut = []
    for o in range(out_size):
        if in_size == 1 or out_size == 1:
            lut.append((0, 0, 1.0, 0.0))
            continue
        pos = o * (in_size - 1) / (out_size - 1)
        lo = int(np.floor(pos))
        hi = min(lo + 1, in_size - 1)
        f = float(pos - lo)
        lut.append((lo, hi, 1.0 - f, f))
    return tuple(lut)


def _resize2x_kernel(*refs, wlut, c, has_add):
    if has_add:
        x_ref, uh_ref, add_ref, o_ref = refs
    else:
        x_ref, uh_ref, o_ref = refs
    x = x_ref[0].astype(jnp.float32)                         # (hin, win*C)
    t = jnp.dot(uh_ref[...], x, preferred_element_type=jnp.float32)  # (hout, win*C)
    cols = []
    for (lo, hi, w0, w1) in wlut:                            # 128-aligned lane slices
        a = t[:, lo * c:(lo + 1) * c]
        b = t[:, hi * c:(hi + 1) * c]
        cols.append(w0 * a + w1 * b)
    out = jnp.concatenate(cols, axis=1)                      # (hout, wout*C)
    if has_add:
        out = out + add_ref[0].astype(jnp.float32)
    o_ref[0] = out.astype(o_ref.dtype)


def resize2x(x, add=None, out_dtype=jnp.bfloat16):
    """x: (N, h, w, C) -> (N, 2h, 2w, C), optional fused '+ add' (same output shape)."""
    N, h, w, C = x.shape
    hout, wout = 2 * h, 2 * w
    uh = _bilinear_matrix(hout, h)
    wlut = _bilinear_lut(wout, w)
    x2 = x.reshape(N, h, w * C)
    args = [x2, uh]
    in_specs = [
        pl.BlockSpec((1, h, w * C), lambda n: (n, 0, 0)),
        pl.BlockSpec((hout, h), lambda n: (0, 0)),
    ]
    if add is not None:
        args.append(add.reshape(N, hout, wout * C))
        in_specs.append(pl.BlockSpec((1, hout, wout * C), lambda n: (n, 0, 0)))
    out = pl.pallas_call(
        functools.partial(_resize2x_kernel, wlut=wlut, c=C, has_add=add is not None),
        out_shape=jax.ShapeDtypeStruct((N, hout, wout * C), out_dtype),
        grid=(N,),
        in_specs=in_specs,
        out_specs=pl.BlockSpec((1, hout, wout * C), lambda n: (n, 0, 0)),
        compiler_params=pltpu.CompilerParams(
            dimension_semantics=("parallel",),
            vmem_limit_bytes=_VMEM_LIMIT),
    )(*args)
    return out.reshape(N, hout, wout, C)


# ----------------------------------------------------------------------------
# Parameters (deterministic; BN scale folded into weights; K/Cout padded to 128)
# ----------------------------------------------------------------------------
def _make_conv3x3(key, cin, cout):
    k1, k2, k3 = jax.random.split(key, 3)
    w = jax.random.normal(k1, (9, cin, cout), jnp.float32) / np.sqrt(9 * cin)
    scale = 1.0 + 0.1 * jax.random.normal(k2, (cout,), jnp.float32)
    bias = 0.1 * jax.random.normal(k3, (cout,), jnp.float32)
    w = w * scale                                   # fold BN scale into weights
    wp = jnp.zeros((9, CP, CP), jnp.float32).at[:, :cin, :cout].set(w)
    bp = jnp.zeros((1, CP), jnp.float32).at[0, :cout].set(bias)
    return {"w": wp.astype(jnp.bfloat16), "b": bp}


def _make_conv1x1(key, cin, cout, out_off=0, relu=True, with_bn=True):
    k1, k2, k3 = jax.random.split(key, 3)
    w = jax.random.normal(k1, (cin, cout), jnp.float32) / np.sqrt(cin)
    if with_bn:
        scale = 1.0 + 0.1 * jax.random.normal(k2, (cout,), jnp.float32)
        bias = 0.1 * jax.random.normal(k3, (cout,), jnp.float32)
        w = w * scale
    else:
        bias = 0.05 * jax.random.normal(k3, (cout,), jnp.float32)
    wp = jnp.zeros((CP, CP), jnp.float32).at[:cin, out_off:out_off + cout].set(w)
    bp = jnp.zeros((1, CP), jnp.float32).at[0, out_off:out_off + cout].set(bias)
    mp = jnp.zeros((1, CP), jnp.float32)
    if relu:
        mp = mp.at[0, out_off:out_off + cout].set(1.0)
    return {"w": wp.astype(jnp.bfloat16), "b": bp, "m": mp}


def init_branch_params(key, in_ch, num_classes, rep_dim=32):
    assert 64 + num_classes <= CP and rep_dim <= 64
    ks = jax.random.split(key, 8)
    p = {}
    p["stem"] = _make_conv3x3(ks[0], in_ch, 32)
    p["layer"] = _make_conv3x3(ks[1], 32, 64)
    p["aspp"] = _make_conv1x1(ks[2], 64, 64, relu=True)
    # low-level projection writes into channels [64:80] so the decoder "concat"
    # becomes a fused add inside the upsample kernel.
    p["low_proj"] = _make_conv1x1(ks[3], 32, 16, out_off=64, relu=True)
    p["decoder"] = _make_conv3x3(ks[4], 80, 64)
    # fused head GEMM: rep1 (ReLU) in cols [0:64], classifier (no ReLU) in [64:64+nc]
    rep1 = _make_conv1x1(ks[5], 64, 64, out_off=0, relu=True)
    cls = _make_conv1x1(ks[6], 64, num_classes, out_off=64, relu=False, with_bn=False)
    p["head"] = {
        "w": (rep1["w"].astype(jnp.float32) + cls["w"].astype(jnp.float32)).astype(jnp.bfloat16),
        "b": rep1["b"] + cls["b"],
        "m": rep1["m"] + cls["m"],
    }
    p["rep2"] = _make_conv1x1(ks[7], 64, rep_dim, relu=False, with_bn=False)
    return p


# ----------------------------------------------------------------------------
# One DeepLabv3+-style branch (returns (pred, representation), both NCHW f32)
# ----------------------------------------------------------------------------
def branch_forward(params, data_nchw, num_classes, rep_dim):
    x = jnp.transpose(data_nchw, (0, 2, 3, 1)).astype(jnp.float32)   # NHWC
    N, H, W, Cin = x.shape
    x = jnp.pad(x, ((0, 0), (0, 0), (0, 0), (0, CP - Cin))).astype(jnp.bfloat16)

    f1 = conv3x3(x, params["stem"], stride=2)        # (N, H/2, W/2, CP)  [32 valid]
    f2 = conv3x3(f1, params["layer"], stride=2)      # (N, H/4, W/4, CP)  [64 valid]
    aspp = conv1x1(f2, params["aspp"])               # (N, H/4, W/4, CP)  [64 valid]
    low = conv1x1(f1, params["low_proj"])            # (N, H/2, W/2, CP)  [cols 64:80]
    dec_in = resize2x(aspp, add=low)                 # fused upsample + "concat"
    dec = conv3x3(dec_in, params["decoder"])         # (N, H/2, W/2, CP)  [64 valid]

    head = conv1x1(dec, params["head"])              # [0:64]=relu(rep1), [64:64+nc]=cls
    rep = conv1x1(head, params["rep2"])              # [0:rep_dim]=representation

    pred_full = resize2x(head, out_dtype=jnp.float32)   # (N, H, W, CP)
    rep_full = resize2x(rep, out_dtype=jnp.float32)     # (N, H, W, CP)

    pred = jnp.transpose(pred_full[..., 64:64 + num_classes], (0, 3, 1, 2))
    representation = jnp.transpose(rep_full[..., :rep_dim], (0, 3, 1, 2))
    return pred, representation


_branch_forward_jit = jax.jit(branch_forward, static_argnums=(2, 3))


# ----------------------------------------------------------------------------
# Network: two branches, step-selected, training/eval behaviour as in PyTorch
# ----------------------------------------------------------------------------
class Network:
    def __init__(self, num_classes, key, in_ch=4, rep_dim=32):
        k1, k2 = jax.random.split(key)
        self.num_classes = num_classes
        self.rep_dim = rep_dim
        self.branch1 = init_branch_params(k1, in_ch, num_classes, rep_dim)
        self.branch2 = init_branch_params(k2, in_ch, num_classes, rep_dim)
        self.training = True

    def __call__(self, data, step=1):
        if step == 1:
            params = self.branch1
        elif step == 2:
            params = self.branch2
        else:
            return None
        pred, rep = _branch_forward_jit(params, data, self.num_classes, self.rep_dim)
        if not self.training:
            return pred
        return pred, rep


# ----------------------------------------------------------------------------
if __name__ == "__main__":
    num_classes = 5
    N, C, H, W = 2, 4, 16, 16

    key = jax.random.PRNGKey(0)
    kx, kp = jax.random.split(key)
    x = jax.random.normal(kx, (N, C, H, W), jnp.float32)

    net = Network(num_classes, kp, in_ch=C, rep_dim=32)

    # training mode, both branches
    net.training = True
    pred1, rep1 = net(x, step=1)
    pred2, rep2 = net(x, step=2)
    jax.block_until_ready((pred1, rep1, pred2, rep2))
    assert pred1.shape == (N, num_classes, H, W), pred1.shape
    assert rep1.shape == (N, 32, H, W), rep1.shape
    assert pred2.shape == (N, num_classes, H, W), pred2.shape

    # eval mode
    net.training = False
    pred_eval = net(x, step=1)
    jax.block_until_ready(pred_eval)
    assert pred_eval.shape == (N, num_classes, H, W)
    assert bool(jnp.all(jnp.isfinite(pred_eval)))
    assert bool(jnp.all(jnp.isfinite(rep1)))

    print("KERNEL_OK")
</pallas_src>

<mosaic_0001>
module attributes {stable_mosaic.version = 11 : i64} {
  func.func @_conv3x3_kernel(%arg0: i32, %arg1: i32, %arg2: memref<1x18x9x256xbf16, #tpu.memory_space<vmem>>, %arg3: memref<9x128x128xbf16, #tpu.memory_space<vmem>>, %arg4: memref<1x128xf32, #tpu.memory_space<vmem>>, %arg5: memref<1x1x8x128xbf16, #tpu.memory_space<vmem>>) attributes {dimension_semantics = [#tpu.dimension_semantics<parallel>, #tpu.dimension_semantics<parallel>], iteration_bounds = array<i64: 2, 8>, scalar_prefetch = 0 : i64, scratch_operands = 0 : i64, tpu.core_type = #tpu.core_type<tc>, window_params = [{transform_indices = @transform_0, window_bounds = array<i64: 1, 18, 9, 256>}, {pipeline_mode = #tpu.pipeline_mode<synchronous>, transform_indices = @transform_1, window_bounds = array<i64: 9, 128, 128>}, {pipeline_mode = #tpu.pipeline_mode<synchronous>, transform_indices = @transform_2, window_bounds = array<i64: 1, 128>}, {transform_indices = @transform_3, window_bounds = array<i64: 1, 1, 8, 128>}]} {
    %cst = arith.constant 0.000000e+00 : f32
    %0 = vector.broadcast %cst : f32 to vector<8x128xf32>
    %c2_i32 = arith.constant 2 : i32
    %1 = arith.muli %arg1, %c2_i32 : i32
    %c0_i32 = arith.constant 0 : i32
    %2 = arith.addi %1, %c0_i32 : i32
    %c0 = arith.constant 0 : index
    %3 = arith.index_cast %2 : i32 to index
    %c0_0 = arith.constant 0 : index
    %c0_1 = arith.constant 0 : index
    %4 = vector.load %arg2[%c0, %3, %c0_0, %c0_1] : memref<1x18x9x256xbf16, #tpu.memory_space<vmem>>, vector<1x1x9x256xbf16>
    %5 = vector.shape_cast %4 : vector<1x1x9x256xbf16> to vector<9x256xbf16>
    %6 = vector.extract_strided_slice %5 {offsets = [0, 0], sizes = [8, 128], strides = [1, 1]} : vector<9x256xbf16> to vector<8x128xbf16>
    %c0_2 = arith.constant 0 : index
    %c0_3 = arith.constant 0 : index
    %c0_4 = arith.constant 0 : index
    %7 = vector.load %arg3[%c0_2, %c0_3, %c0_4] : memref<9x128x128xbf16, #tpu.memory_space<vmem>>, vector<1x128x128xbf16>
    %8 = vector.shape_cast %7 : vector<1x128x128xbf16> to vector<128x128xbf16>
    %cst_5 = arith.constant dense<0.000000e+00> : vector<8x128xf32>
    %9 = tpu.matmul %6, %8, %cst_5 {dimension_numbers = #tpu.dot_dimension_numbers<[1], [0], [0], [1], [0, 0, 1, 1], [], []>} : vector<8x128xbf16>, vector<128x128xbf16>, vector<8x128xf32> -> vector<8x128xf32>
    %10 = arith.addf %0, %9 : vector<8x128xf32>
    %11 = vector.extract_strided_slice %5 {offsets = [0, 128], sizes = [8, 128], strides = [1, 1]} : vector<9x256xbf16> to vector<8x128xbf16>
    %c1 = arith.constant 1 : index
    %c0_6 = arith.constant 0 : index
    %c0_7 = arith.constant 0 : index
    %12 = vector.load %arg3[%c1, %c0_6, %c0_7] : memref<9x128x128xbf16, #tpu.memory_space<vmem>>, vector<1x128x128xbf16>
    %13 = vector.shape_cast %12 : vector<1x128x128xbf16> to vector<128x128xbf16>
    %cst_8 = arith.constant dense<0.000000e+00> : vector<8x128xf32>
    %14 = tpu.matmul %11, %13, %cst_8 {dimension_numbers = #tpu.dot_dimension_numbers<[1], [0], [0], [1], [0, 0, 1, 1], [], []>} : vector<8x128xbf16>, vector<128x128xbf16>, vector<8x128xf32> -> vector<8x128xf32>
    %15 = arith.addf %10, %14 : vector<8x128xf32>
    %16 = vector.extract_strided_slice %5 {offsets = [1, 0], sizes = [8, 128], strides = [1, 1]} : vector<9x256xbf16> to vector<8x128xbf16>
    %c2 = arith.constant 2 : index
    %c0_9 = arith.constant 0 : index
    %c0_10 = arith.constant 0 : index
    %17 = vector.load %arg3[%c2, %c0_9, %c0_10] : memref<9x128x128xbf16, #tpu.memory_space<vmem>>, vector<1x128x128xbf16>
    %18 = vector.shape_cast %17 : vector<1x128x128xbf16> to vector<128x128xbf16>
    %cst_11 = arith.constant dense<0.000000e+00> : vector<8x128xf32>
    %19 = tpu.matmul %16, %18, %cst_11 {dimension_numbers = #tpu.dot_dimension_numbers<[1], [0], [0], [1], [0, 0, 1, 1], [], []>} : vector<8x128xbf16>, vector<128x128xbf16>, vector<8x128xf32> -> vector<8x128xf32>
    %20 = arith.addf %15, %19 : vector<8x128xf32>
    %c2_i32_12 = arith.constant 2 : i32
    %21 = arith.muli %arg1, %c2_i32_12 : i32
    %c1_i32 = arith.constant 1 : i32
    %22 = arith.addi %21, %c1_i32 : i32
    %c0_13 = arith.constant 0 : index
    %23 = arith.index_cast %22 : i32 to index
    %c0_14 = arith.constant 0 : index
    %c0_15 = arith.constant 0 : index
    %24 = vector.load %arg2[%c0_13, %23, %c0_14, %c0_15] : memref<1x18x9x256xbf16, #tpu.memory_space<vmem>>, vector<1x1x9x256xbf16>
    %25 = vector.shape_cast %24 : vector<1x1x9x256xbf16> to vector<9x256xbf16>
    %26 = vector.extract_strided_slice %25 {offsets = [0, 0], sizes = [8, 128], strides = [1, 1]} : vector<9x256xbf16> to vector<8x128xbf16>
    %c3 = arith.constant 3 : index
    %c0_16 = arith.constant 0 : index
    %c0_17 = arith.constant 0 : index
    %27 = vector.load %arg3[%c3, %c0_16, %c0_17] : memref<9x128x128xbf16, #tpu.memory_space<vmem>>, vector<1x128x128xbf16>
    %28 = vector.shape_cast %27 : vector<1x128x128xbf16> to vector<128x128xbf16>
    %cst_18 = arith.constant dense<0.000000e+00> : vector<8x128xf32>
    %29 = tpu.matmul %26, %28, %cst_18 {dimension_numbers = #tpu.dot_dimension_numbers<[1], [0], [0], [1], [0, 0, 1, 1], [], []>} : vector<8x128xbf16>, vector<128x128xbf16>, vector<8x128xf32> -> vector<8x128xf32>
    %30 = arith.addf %20, %29 : vector<8x128xf32>
    %31 = vector.extract_strided_slice %25 {offsets = [0, 128], sizes = [8, 128], strides = [1, 1]} : vector<9x256xbf16> to vector<8x128xbf16>
    %c4 = arith.constant 4 : index
    %c0_19 = arith.constant 0 : index
    %c0_20 = arith.constant 0 : index
    %32 = vector.load %arg3[%c4, %c0_19, %c0_20] : memref<9x128x128xbf16, #tpu.memory_space<vmem>>, vector<1x128x128xbf16>
    %33 = vector.shape_cast %32 : vector<1x128x128xbf16> to vector<128x128xbf16>
    %cst_21 = arith.constant dense<0.000000e+00> : vector<8x128xf32>
    %34 = tpu.matmul %31, %33, %cst_21 {dimension_numbers = #tpu.dot_dimension_numbers<[1], [0], [0], [1], [0, 0, 1, 1], [], []>} : vector<8x128xbf16>, vector<128x128xbf16>, vector<8x128xf32> -> vector<8x128xf32>
    %35 = arith.addf %30, %34 : vector<8x128xf32>
    %36 = vector.extract_strided_slice %25 {offsets = [1, 0], sizes = [8, 128], strides = [1, 1]} : vector<9x256xbf16> to vector<8x128xbf16>
    %c5 = arith.constant 5 : index
    %c0_22 = arith.constant 0 : index
    %c0_23 = arith.constant 0 : index
    %37 = vector.load %arg3[%c5, %c0_22, %c0_23] : memref<9x128x128xbf16, #tpu.memory_space<vmem>>, vector<1x128x128xbf16>
    %38 = vector.shape_cast %37 : vector<1x128x128xbf16> to vector<128x128xbf16>
    %cst_24 = arith.constant dense<0.000000e+00> : vector<8x128xf32>
    %39 = tpu.matmul %36, %38, %cst_24 {dimension_numbers = #tpu.dot_dimension_numbers<[1], [0], [0], [1], [0, 0, 1, 1], [], []>} : vector<8x128xbf16>, vector<128x128xbf16>, vector<8x128xf32> -> vector<8x128xf32>
    %40 = arith.addf %35, %39 : vector<8x128xf32>
    %c2_i32_25 = arith.constant 2 : i32
    %41 = arith.muli %arg1, %c2_i32_25 : i32
    %c2_i32_26 = arith.constant 2 : i32
    %42 = arith.addi %41, %c2_i32_26 : i32
    %c0_27 = arith.constant 0 : index
    %43 = arith.index_cast %42 : i32 to index
    %c0_28 = arith.constant 0 : index
    %c0_29 = arith.constant 0 : index
    %44 = vector.load %arg2[%c0_27, %43, %c0_28, %c0_29] : memref<1x18x9x256xbf16, #tpu.memory_space<vmem>>, vector<1x1x9x256xbf16>
    %45 = vector.shape_cast %44 : vector<1x1x9x256xbf16> to vector<9x256xbf16>
    %46 = vector.extract_strided_slice %45 {offsets = [0, 0], sizes = [8, 128], strides = [1, 1]} : vector<9x256xbf16> to vector<8x128xbf16>
    %c6 = arith.constant 6 : index
    %c0_30 = arith.constant 0 : index
    %c0_31 = arith.constant 0 : index
    %47 = vector.load %arg3[%c6, %c0_30, %c0_31] : memref<9x128x128xbf16, #tpu.memory_space<vmem>>, vector<1x128x128xbf16>
    %48 = vector.shape_cast %47 : vector<1x128x128xbf16> to vector<128x128xbf16>
    %cst_32 = arith.constant dense<0.000000e+00> : vector<8x128xf32>
    %49 = tpu.matmul %46, %48, %cst_32 {dimension_numbers = #tpu.dot_dimension_numbers<[1], [0], [0], [1], [0, 0, 1, 1], [], []>} : vector<8x128xbf16>, vector<128x128xbf16>, vector<8x128xf32> -> vector<8x128xf32>
    %50 = arith.addf %40, %49 : vector<8x128xf32>
    %51 = vector.extract_strided_slice %45 {offsets = [0, 128], sizes = [8, 128], strides = [1, 1]} : vector<9x256xbf16> to vector<8x128xbf16>
    %c7 = arith.constant 7 : index
    %c0_33 = arith.constant 0 : index
    %c0_34 = arith.constant 0 : index
    %52 = vector.load %arg3[%c7, %c0_33, %c0_34] : memref<9x128x128xbf16, #tpu.memory_space<vmem>>, vector<1x128x128xbf16>
    %53 = vector.shape_cast %52 : vector<1x128x128xbf16> to vector<128x128xbf16>
    %cst_35 = arith.constant dense<0.000000e+00> : vector<8x128xf32>
    %54 = tpu.matmul %51, %53, %cst_35 {dimension_numbers = #tpu.dot_dimension_numbers<[1], [0], [0], [1], [0, 0, 1, 1], [], []>} : vector<8x128xbf16>, vector<128x128xbf16>, vector<8x128xf32> -> vector<8x128xf32>
    %55 = arith.addf %50, %54 : vector<8x128xf32>
    %56 = vector.extract_strided_slice %45 {offsets = [1, 0], sizes = [8, 128], strides = [1, 1]} : vector<9x256xbf16> to vector<8x128xbf16>
    %c8 = arith.constant 8 : index
    %c0_36 = arith.constant 0 : index
    %c0_37 = arith.constant 0 : index
    %57 = vector.load %arg3[%c8, %c0_36, %c0_37] : memref<9x128x128xbf16, #tpu.memory_space<vmem>>, vector<1x128x128xbf16>
    %58 = vector.shape_cast %57 : vector<1x128x128xbf16> to vector<128x128xbf16>
    %cst_38 = arith.constant dense<0.000000e+00> : vector<8x128xf32>
    %59 = tpu.matmul %56, %58, %cst_38 {dimension_numbers = #tpu.dot_dimension_numbers<[1], [0], [0], [1], [0, 0, 1, 1], [], []>} : vector<8x128xbf16>, vector<128x128xbf16>, vector<8x128xf32> -> vector<8x128xf32>
    %60 = arith.addf %55, %59 : vector<8x128xf32>
    %c0_39 = arith.constant 0 : index
    %c0_40 = arith.constant 0 : index
    %61 = vector.load %arg4[%c0_39, %c0_40] : memref<1x128xf32, #tpu.memory_space<vmem>>, vector<1x128xf32>
    %62 = vector.broadcast %61 : vector<1x128xf32> to vector<8x128xf32>
    %63 = arith.addf %60, %62 : vector<8x128xf32>
    %cst_41 = arith.constant 0.000000e+00 : f32
    %64 = vector.broadcast %cst_41 : f32 to vector<8x128xf32>
    %65 = arith.maximumf %63, %64 : vector<8x128xf32>
    %66 = arith.truncf %65 : vector<8x128xf32> to vector<8x128xbf16>
    %c0_42 = arith.constant 0 : index
    %c0_43 = arith.constant 0 : index
    %c0_44 = arith.constant 0 : index
    %c0_45 = arith.constant 0 : index
    %67 = vector.load %arg5[%c0_42, %c0_43, %c0_44, %c0_45] : memref<1x1x8x128xbf16, #tpu.memory_space<vmem>>, vector<1x1x8x128xbf16>
    %68 = vector.shape_cast %67 : vector<1x1x8x128xbf16> to vector<8x128xbf16>
    %69 = vector.shape_cast %66 : vector<8x128xbf16> to vector<1x1x8x128xbf16>
    tpu.vector_store %arg5[%c0_42, %c0_43, %c0_44, %c0_45], %69 {strides = array<i32>} : memref<1x1x8x128xbf16, #tpu.memory_space<vmem>>, vector<1x1x8x128xbf16>,
    return
  }
  func.func @transform_0(%arg0: i32, %arg1: i32) -> (i32, i32, i32, i32) {
    %c0_i32 = arith.constant 0 : i32
    %c0_i32_0 = arith.constant 0 : i32
    %c0_i32_1 = arith.constant 0 : i32
    %c0_i32_2 = arith.constant 0 : i32
    return %arg0, %c0_i32, %c0_i32_0, %c0_i32_1 : i32, i32, i32, i32
  }
  func.func @transform_1(%arg0: i32, %arg1: i32) -> (i32, i32, i32) {
    %c0_i32 = arith.constant 0 : i32
    %c0_i32_0 = arith.constant 0 : i32
    %c0_i32_1 = arith.constant 0 : i32
    %c0_i32_2 = arith.constant 0 : i32
    return %c0_i32, %c0_i32_0, %c0_i32_1 : i32, i32, i32
  }
  func.func @transform_2(%arg0: i32, %arg1: i32) -> (i32, i32) {
    %c0_i32 = arith.constant 0 : i32
    %c0_i32_0 = arith.constant 0 : i32
    %c0_i32_1 = arith.constant 0 : i32
    return %c0_i32, %c0_i32_0 : i32, i32
  }
  func.func @transform_3(%arg0: i32, %arg1: i32) -> (i32, i32, i32, i32) {
    %c0_i32 = arith.constant 0 : i32
    %c0_i32_0 = arith.constant 0 : i32
    %c0_i32_1 = arith.constant 0 : i32
    return %arg0, %arg1, %c0_i32, %c0_i32_0 : i32, i32, i32, i32
  }
}

module attributes {stable_mosaic.version = 11 : i64} {
  func.func @_gemm_kernel(%arg0: i32, %arg1: memref<32x128xbf16, #tpu.memory_space<vmem>>, %arg2: memref<128x128xbf16, #tpu.memory_space<vmem>>, %arg3: memref<1x128xf32, #tpu.memory_space<vmem>>, %arg4: memref<1x128xf32, #tpu.memory_space<vmem>>, %arg5: memref<32x128xbf16, #tpu.memory_space<vmem>>) attributes {dimension_semantics = [#tpu.dimension_semantics<parallel>], iteration_bounds = array<i64: 1>, scalar_prefetch = 0 : i64, scratch_operands = 0 : i64, tpu.core_type = #tpu.core_type<tc>, window_params = [{transform_indices = @transform_0, window_bounds = array<i64: 32, 128>}, {pipeline_mode = #tpu.pipeline_mode<synchronous>, transform_indices = @transform_1, window_bounds = array<i64: 128, 128>}, {pipeline_mode = #tpu.pipeline_mode<synchronous>, transform_indices = @transform_2, window_bounds = array<i64: 1, 128>}, {pipeline_mode = #tpu.pipeline_mode<synchronous>, transform_indices = @transform_3, window_bounds = array<i64: 1, 128>}, {transform_indices = @transform_4, window_bounds = array<i64: 32, 128>}]} {
    %c0 = arith.constant 0 : index
    %c0_0 = arith.constant 0 : index
    %0 = vector.load %arg1[%c0, %c0_0] : memref<32x128xbf16, #tpu.memory_space<vmem>>, vector<32x128xbf16>
    %c0_1 = arith.constant 0 : index
    %c0_2 = arith.constant 0 : index
    %1 = vector.load %arg2[%c0_1, %c0_2] : memref<128x128xbf16, #tpu.memory_space<vmem>>, vector<128x128xbf16>
    %cst = arith.constant dense<0.000000e+00> : vector<32x128xf32>
    %2 = tpu.matmul %0, %1, %cst {dimension_numbers = #tpu.dot_dimension_numbers<[1], [0], [0], [1], [0, 0, 1, 1], [], []>} : vector<32x128xbf16>, vector<128x128xbf16>, vector<32x128xf32> -> vector<32x128xf32>
    %c0_3 = arith.constant 0 : index
    %c0_4 = arith.constant 0 : index
    %3 = vector.load %arg3[%c0_3, %c0_4] : memref<1x128xf32, #tpu.memory_space<vmem>>, vector<1x128xf32>
    %4 = vector.broadcast %3 : vector<1x128xf32> to vector<32x128xf32>
    %5 = arith.addf %2, %4 : vector<32x128xf32>
    %c0_5 = arith.constant 0 : index
    %c0_6 = arith.constant 0 : index
    %6 = vector.load %arg4[%c0_5, %c0_6] : memref<1x128xf32, #tpu.memory_space<vmem>>, vector<1x128xf32>
    %cst_7 = arith.constant 0.000000e+00 : f32
    %7 = vector.broadcast %cst_7 : f32 to vector<1x128xf32>
    %8 = arith.cmpf one, %6, %7 : vector<1x128xf32>
    %cst_8 = arith.constant 0.000000e+00 : f32
    %9 = vector.broadcast %cst_8 : f32 to vector<32x128xf32>
    %10 = arith.maximumf %5, %9 : vector<32x128xf32>
    %11 = vector.shape_cast %8 : vector<1x128xi1> to vector<1x128xi1>
    %12 = vector.broadcast %11 : vector<1x128xi1> to vector<32x128xi1>
    %13 = arith.select %12, %10, %5 : vector<32x128xi1>, vector<32x128xf32>
    %14 = arith.truncf %13 : vector<32x128xf32> to vector<32x128xbf16>
    %c0_9 = arith.constant 0 : index
    %c0_10 = arith.constant 0 : index
    %15 = vector.load %arg5[%c0_9, %c0_10] : memref<32x128xbf16, #tpu.memory_space<vmem>>, vector<32x128xbf16>
    tpu.vector_store %arg5[%c0_9, %c0_10], %14 {strides = array<i32>} : memref<32x128xbf16, #tpu.memory_space<vmem>>, vector<32x128xbf16>,
    return
  }
  func.func @transform_0(%arg0: i32) -> (i32, i32) {
    %c0_i32 = arith.constant 0 : i32
    %c0_i32_0 = arith.constant 0 : i32
    return %arg0, %c0_i32 : i32, i32
  }
  func.func @transform_1(%arg0: i32) -> (i32, i32) {
    %c0_i32 = arith.constant 0 : i32
    %c0_i32_0 = arith.constant 0 : i32
    %c0_i32_1 = arith.constant 0 : i32
    return %c0_i32, %c0_i32_0 : i32, i32
  }
  func.func @transform_2(%arg0: i32) -> (i32, i32) {
    %c0_i32 = arith.constant 0 : i32
    %c0_i32_0 = arith.constant 0 : i32
    %c0_i32_1 = arith.constant 0 : i32
    return %c0_i32, %c0_i32_0 : i32, i32
  }
  func.func @transform_3(%arg0: i32) -> (i32, i32) {
    %c0_i32 = arith.constant 0 : i32
    %c0_i32_0 = arith.constant 0 : i32
    %c0_i32_1 = arith.constant 0 : i32
    return %c0_i32, %c0_i32_0 : i32, i32
  }
  func.func @transform_4(%arg0: i32) -> (i32, i32) {
    %c0_i32 = arith.constant 0 : i32
    %c0_i32_0 = arith.constant 0 : i32
    return %arg0, %c0_i32 : i32, i32
  }
}

module attributes {stable_mosaic.version = 11 : i64} {
  func.func @_conv3x3_kernel(%arg0: i32, %arg1: i32, %arg2: memref<1x10x5x256xbf16, #tpu.memory_space<vmem>>, %arg3: memref<9x128x128xbf16, #tpu.memory_space<vmem>>, %arg4: memref<1x128xf32, #tpu.memory_space<vmem>>, %arg5: memref<1x1x4x128xbf16, #tpu.memory_space<vmem>>) attributes {dimension_semantics = [#tpu.dimension_semantics<parallel>, #tpu.dimension_semantics<parallel>], iteration_bounds = array<i64: 2, 4>, scalar_prefetch = 0 : i64, scratch_operands = 0 : i64, tpu.core_type = #tpu.core_type<tc>, window_params = [{transform_indices = @transform_0, window_bounds = array<i64: 1, 10, 5, 256>}, {pipeline_mode = #tpu.pipeline_mode<synchronous>, transform_indices = @transform_1, window_bounds = array<i64: 9, 128, 128>}, {pipeline_mode = #tpu.pipeline_mode<synchronous>, transform_indices = @transform_2, window_bounds = array<i64: 1, 128>}, {transform_indices = @transform_3, window_bounds = array<i64: 1, 1, 4, 128>}]} {
    %cst = arith.constant 0.000000e+00 : f32
    %0 = vector.broadcast %cst : f32 to vector<4x128xf32>
    %c2_i32 = arith.constant 2 : i32
    %1 = arith.muli %arg1, %c2_i32 : i32
    %c0_i32 = arith.constant 0 : i32
    %2 = arith.addi %1, %c0_i32 : i32
    %c0 = arith.constant 0 : index
    %3 = arith.index_cast %2 : i32 to index
    %c0_0 = arith.constant 0 : index
    %c0_1 = arith.constant 0 : index
    %4 = vector.load %arg2[%c0, %3, %c0_0, %c0_1] : memref<1x10x5x256xbf16, #tpu.memory_space<vmem>>, vector<1x1x5x256xbf16>
    %5 = vector.shape_cast %4 : vector<1x1x5x256xbf16> to vector<5x256xbf16>
    %6 = vector.extract_strided_slice %5 {offsets = [0, 0], sizes = [4, 128], strides = [1, 1]} : vector<5x256xbf16> to vector<4x128xbf16>
    %c0_2 = arith.constant 0 : index
    %c0_3 = arith.constant 0 : index
    %c0_4 = arith.constant 0 : index
    %7 = vector.load %arg3[%c0_2, %c0_3, %c0_4] : memref<9x128x128xbf16, #tpu.memory_space<vmem>>, vector<1x128x128xbf16>
    %8 = vector.shape_cast %7 : vector<1x128x128xbf16> to vector<128x128xbf16>
    %cst_5 = arith.constant dense<0.000000e+00> : vector<4x128xf32>
    %9 = tpu.matmul %6, %8, %cst_5 {dimension_numbers = #tpu.dot_dimension_numbers<[1], [0], [0], [1], [0, 0, 1, 1], [], []>} : vector<4x128xbf16>, vector<128x128xbf16>, vector<4x128xf32> -> vector<4x128xf32>
    %10 = arith.addf %0, %9 : vector<4x128xf32>
    %11 = vector.extract_strided_slice %5 {offsets = [0, 128], sizes = [4, 128], strides = [1, 1]} : vector<5x256xbf16> to vector<4x128xbf16>
    %c1 = arith.constant 1 : index
    %c0_6 = arith.constant 0 : index
    %c0_7 = arith.constant 0 : index
    %12 = vector.load %arg3[%c1, %c0_6, %c0_7] : memref<9x128x128xbf16, #tpu.memory_space<vmem>>, vector<1x128x128xbf16>
    %13 = vector.shape_cast %12 : vector<1x128x128xbf16> to vector<128x128xbf16>
    %cst_8 = arith.constant dense<0.000000e+00> : vector<4x128xf32>
    %14 = tpu.matmul %11, %13, %cst_8 {dimension_numbers = #tpu.dot_dimension_numbers<[1], [0], [0], [1], [0, 0, 1, 1], [], []>} : vector<4x128xbf16>, vector<128x128xbf16>, vector<4x128xf32> -> vector<4x128xf32>
    %15 = arith.addf %10, %14 : vector<4x128xf32>
    %16 = vector.extract_strided_slice %5 {offsets = [1, 0], sizes = [4, 128], strides = [1, 1]} : vector<5x256xbf16> to vector<4x128xbf16>
    %c2 = arith.constant 2 : index
    %c0_9 = arith.constant 0 : index
    %c0_10 = arith.constant 0 : index
    %17 = vector.load %arg3[%c2, %c0_9, %c0_10] : memref<9x128x128xbf16, #tpu.memory_space<vmem>>, vector<1x128x128xbf16>
    %18 = vector.shape_cast %17 : vector<1x128x128xbf16> to vector<128x128xbf16>
    %cst_11 = arith.constant dense<0.000000e+00> : vector<4x128xf32>
    %19 = tpu.matmul %16, %18, %cst_11 {dimension_numbers = #tpu.dot_dimension_numbers<[1], [0], [0], [1], [0, 0, 1, 1], [], []>} : vector<4x128xbf16>, vector<128x128xbf16>, vector<4x128xf32> -> vector<4x128xf32>
    %20 = arith.addf %15, %19 : vector<4x128xf32>
    %c2_i32_12 = arith.constant 2 : i32
    %21 = arith.muli %arg1, %c2_i32_12 : i32
    %c1_i32 = arith.constant 1 : i32
    %22 = arith.addi %21, %c1_i32 : i32
    %c0_13 = arith.constant 0 : index
    %23 = arith.index_cast %22 : i32 to index
    %c0_14 = arith.constant 0 : index
    %c0_15 = arith.constant 0 : index
    %24 = vector.load %arg2[%c0_13, %23, %c0_14, %c0_15] : memref<1x10x5x256xbf16, #tpu.memory_space<vmem>>, vector<1x1x5x256xbf16>
    %25 = vector.shape_cast %24 : vector<1x1x5x256xbf16> to vector<5x256xbf16>
    %26 = vector.extract_strided_slice %25 {offsets = [0, 0], sizes = [4, 128], strides = [1, 1]} : vector<5x256xbf16> to vector<4x128xbf16>
    %c3 = arith.constant 3 : index
    %c0_16 = arith.constant 0 : index
    %c0_17 = arith.constant 0 : index
    %27 = vector.load %arg3[%c3, %c0_16, %c0_17] : memref<9x128x128xbf16, #tpu.memory_space<vmem>>, vector<1x128x128xbf16>
    %28 = vector.shape_cast %27 : vector<1x128x128xbf16> to vector<128x128xbf16>
    %cst_18 = arith.constant dense<0.000000e+00> : vector<4x128xf32>
    %29 = tpu.matmul %26, %28, %cst_18 {dimension_numbers = #tpu.dot_dimension_numbers<[1], [0], [0], [1], [0, 0, 1, 1], [], []>} : vector<4x128xbf16>, vector<128x128xbf16>, vector<4x128xf32> -> vector<4x128xf32>
    %30 = arith.addf %20, %29 : vector<4x128xf32>
    %31 = vector.extract_strided_slice %25 {offsets = [0, 128], sizes = [4, 128], strides = [1, 1]} : vector<5x256xbf16> to vector<4x128xbf16>
    %c4 = arith.constant 4 : index
    %c0_19 = arith.constant 0 : index
    %c0_20 = arith.constant 0 : index
    %32 = vector.load %arg3[%c4, %c0_19, %c0_20] : memref<9x128x128xbf16, #tpu.memory_space<vmem>>, vector<1x128x128xbf16>
    %33 = vector.shape_cast %32 : vector<1x128x128xbf16> to vector<128x128xbf16>
    %cst_21 = arith.constant dense<0.000000e+00> : vector<4x128xf32>
    %34 = tpu.matmul %31, %33, %cst_21 {dimension_numbers = #tpu.dot_dimension_numbers<[1], [0], [0], [1], [0, 0, 1, 1], [], []>} : vector<4x128xbf16>, vector<128x128xbf16>, vector<4x128xf32> -> vector<4x128xf32>
    %35 = arith.addf %30, %34 : vector<4x128xf32>
    %36 = vector.extract_strided_slice %25 {offsets = [1, 0], sizes = [4, 128], strides = [1, 1]} : vector<5x256xbf16> to vector<4x128xbf16>
    %c5 = arith.constant 5 : index
    %c0_22 = arith.constant 0 : index
    %c0_23 = arith.constant 0 : index
    %37 = vector.load %arg3[%c5, %c0_22, %c0_23] : memref<9x128x128xbf16, #tpu.memory_space<vmem>>, vector<1x128x128xbf16>
    %38 = vector.shape_cast %37 : vector<1x128x128xbf16> to vector<128x128xbf16>
    %cst_24 = arith.constant dense<0.000000e+00> : vector<4x128xf32>
    %39 = tpu.matmul %36, %38, %cst_24 {dimension_numbers = #tpu.dot_dimension_numbers<[1], [0], [0], [1], [0, 0, 1, 1], [], []>} : vector<4x128xbf16>, vector<128x128xbf16>, vector<4x128xf32> -> vector<4x128xf32>
    %40 = arith.addf %35, %39 : vector<4x128xf32>
    %c2_i32_25 = arith.constant 2 : i32
    %41 = arith.muli %arg1, %c2_i32_25 : i32
    %c2_i32_26 = arith.constant 2 : i32
    %42 = arith.addi %41, %c2_i32_26 : i32
    %c0_27 = arith.constant 0 : index
    %43 = arith.index_cast %42 : i32 to index
    %c0_28 = arith.constant 0 : index
    %c0_29 = arith.constant 0 : index
    %44 = vector.load %arg2[%c0_27, %43, %c0_28, %c0_29] : memref<1x10x5x256xbf16, #tpu.memory_space<vmem>>, vector<1x1x5x256xbf16>
    %45 = vector.shape_cast %44 : vector<1x1x5x256xbf16> to vector<5x256xbf16>
    %46 = vector.extract_strided_slice %45 {offsets = [0, 0], sizes = [4, 128], strides = [1, 1]} : vector<5x256xbf16> to vector<4x128xbf16>
    %c6 = arith.constant 6 : index
    %c0_30 = arith.constant 0 : index
    %c0_31 = arith.constant 0 : index
    %47 = vector.load %arg3[%c6, %c0_30, %c0_31] : memref<9x128x128xbf16, #tpu.memory_space<vmem>>, vector<1x128x128xbf16>
    %48 = vector.shape_cast %47 : vector<1x128x128xbf16> to vector<128x128xbf16>
    %cst_32 = arith.constant dense<0.000000e+00> : vector<4x128xf32>
    %49 = tpu.matmul %46, %48, %cst_32 {dimension_numbers = #tpu.dot_dimension_numbers<[1], [0], [0], [1], [0, 0, 1, 1], [], []>} : vector<4x128xbf16>, vector<128x128xbf16>, vector<4x128xf32> -> vector<4x128xf32>
    %50 = arith.addf %40, %49 : vector<4x128xf32>
    %51 = vector.extract_strided_slice %45 {offsets = [0, 128], sizes = [4, 128], strides = [1, 1]} : vector<5x256xbf16> to vector<4x128xbf16>
    %c7 = arith.constant 7 : index
    %c0_33 = arith.constant 0 : index
    %c0_34 = arith.constant 0 : index
    %52 = vector.load %arg3[%c7, %c0_33, %c0_34] : memref<9x128x128xbf16, #tpu.memory_space<vmem>>, vector<1x128x128xbf16>
    %53 = vector.shape_cast %52 : vector<1x128x128xbf16> to vector<128x128xbf16>
    %cst_35 = arith.constant dense<0.000000e+00> : vector<4x128xf32>
    %54 = tpu.matmul %51, %53, %cst_35 {dimension_numbers = #tpu.dot_dimension_numbers<[1], [0], [0], [1], [0, 0, 1, 1], [], []>} : vector<4x128xbf16>, vector<128x128xbf16>, vector<4x128xf32> -> vector<4x128xf32>
    %55 = arith.addf %50, %54 : vector<4x128xf32>
    %56 = vector.extract_strided_slice %45 {offsets = [1, 0], sizes = [4, 128], strides = [1, 1]} : vector<5x256xbf16> to vector<4x128xbf16>
    %c8 = arith.constant 8 : index
    %c0_36 = arith.constant 0 : index
    %c0_37 = arith.constant 0 : index
    %57 = vector.load %arg3[%c8, %c0_36, %c0_37] : memref<9x128x128xbf16, #tpu.memory_space<vmem>>, vector<1x128x128xbf16>
    %58 = vector.shape_cast %57 : vector<1x128x128xbf16> to vector<128x128xbf16>
    %cst_38 = arith.constant dense<0.000000e+00> : vector<4x128xf32>
    %59 = tpu.matmul %56, %58, %cst_38 {dimension_numbers = #tpu.dot_dimension_numbers<[1], [0], [0], [1], [0, 0, 1, 1], [], []>} : vector<4x128xbf16>, vector<128x128xbf16>, vector<4x128xf32> -> vector<4x128xf32>
    %60 = arith.addf %55, %59 : vector<4x128xf32>
    %c0_39 = arith.constant 0 : index
    %c0_40 = arith.constant 0 : index
    %61 = vector.load %arg4[%c0_39, %c0_40] : memref<1x128xf32, #tpu.memory_space<vmem>>, vector<1x128xf32>
    %62 = vector.broadcast %61 : vector<1x128xf32> to vector<4x128xf32>
    %63 = arith.addf %60, %62 : vector<4x128xf32>
    %cst_41 = arith.constant 0.000000e+00 : f32
    %64 = vector.broadcast %cst_41 : f32 to vector<4x128xf32>
    %65 = arith.maximumf %63, %64 : vector<4x128xf32>
    %66 = arith.truncf %65 : vector<4x128xf32> to vector<4x128xbf16>
    %c0_42 = arith.constant 0 : index
    %c0_43 = arith.constant 0 : index
    %c0_44 = arith.constant 0 : index
    %c0_45 = arith.constant 0 : index
    %67 = vector.load %arg5[%c0_42, %c0_43, %c0_44, %c0_45] : memref<1x1x4x128xbf16, #tpu.memory_space<vmem>>, vector<1x1x4x128xbf16>
    %68 = vector.shape_cast %67 : vector<1x1x4x128xbf16> to vector<4x128xbf16>
    %69 = vector.shape_cast %66 : vector<4x128xbf16> to vector<1x1x4x128xbf16>
    tpu.vector_store %arg5[%c0_42, %c0_43, %c0_44, %c0_45], %69 {strides = array<i32>} : memref<1x1x4x128xbf16, #tpu.memory_space<vmem>>, vector<1x1x4x128xbf16>,
    return
  }
  func.func @transform_0(%arg0: i32, %arg1: i32) -> (i32, i32, i32, i32) {
    %c0_i32 = arith.constant 0 : i32
    %c0_i32_0 = arith.constant 0 : i32
    %c0_i32_1 = arith.constant 0 : i32
    %c0_i32_2 = arith.constant 0 : i32
    return %arg0, %c0_i32, %c0_i32_0, %c0_i32_1 : i32, i32, i32, i32
  }
  func.func @transform_1(%arg0: i32, %arg1: i32) -> (i32, i32, i32) {
    %c0_i32 = arith.constant 0 : i32
    %c0_i32_0 = arith.constant 0 : i32
    %c0_i32_1 = arith.constant 0 : i32
    %c0_i32_2 = arith.constant 0 : i32
    return %c0_i32, %c0_i32_0, %c0_i32_1 : i32, i32, i32
  }
  func.func @transform_2(%arg0: i32, %arg1: i32) -> (i32, i32) {
    %c0_i32 = arith.constant 0 : i32
    %c0_i32_0 = arith.constant 0 : i32
    %c0_i32_1 = arith.constant 0 : i32
    return %c0_i32, %c0_i32_0 : i32, i32
  }
  func.func @transform_3(%arg0: i32, %arg1: i32) -> (i32, i32, i32, i32) {
    %c0_i32 = arith.constant 0 : i32
    %c0_i32_0 = arith.constant 0 : i32
    %c0_i32_1 = arith.constant 0 : i32
    return %arg0, %arg1, %c0_i32, %c0_i32_0 : i32, i32, i32, i32
  }
}

module attributes {stable_mosaic.version = 11 : i64} {
  func.func @_gemm_kernel(%arg0: i32, %arg1: memref<128x128xbf16, #tpu.memory_space<vmem>>, %arg2: memref<128x128xbf16, #tpu.memory_space<vmem>>, %arg3: memref<1x128xf32, #tpu.memory_space<vmem>>, %arg4: memref<1x128xf32, #tpu.memory_space<vmem>>, %arg5: memref<128x128xbf16, #tpu.memory_space<vmem>>) attributes {dimension_semantics = [#tpu.dimension_semantics<parallel>], iteration_bounds = array<i64: 1>, scalar_prefetch = 0 : i64, scratch_operands = 0 : i64, tpu.core_type = #tpu.core_type<tc>, window_params = [{transform_indices = @transform_0, window_bounds = array<i64: 128, 128>}, {pipeline_mode = #tpu.pipeline_mode<synchronous>, transform_indices = @transform_1, window_bounds = array<i64: 128, 128>}, {pipeline_mode = #tpu.pipeline_mode<synchronous>, transform_indices = @transform_2, window_bounds = array<i64: 1, 128>}, {pipeline_mode = #tpu.pipeline_mode<synchronous>, transform_indices = @transform_3, window_bounds = array<i64: 1, 128>}, {transform_indices = @transform_4, window_bounds = array<i64: 128, 128>}]} {
    %c0 = arith.constant 0 : index
    %c0_0 = arith.constant 0 : index
    %0 = vector.load %arg1[%c0, %c0_0] : memref<128x128xbf16, #tpu.memory_space<vmem>>, vector<128x128xbf16>
    %c0_1 = arith.constant 0 : index
    %c0_2 = arith.constant 0 : index
    %1 = vector.load %arg2[%c0_1, %c0_2] : memref<128x128xbf16, #tpu.memory_space<vmem>>, vector<128x128xbf16>
    %cst = arith.constant dense<0.000000e+00> : vector<128x128xf32>
    %2 = tpu.matmul %0, %1, %cst {dimension_numbers = #tpu.dot_dimension_numbers<[1], [0], [0], [1], [0, 0, 1, 1], [], []>} : vector<128x128xbf16>, vector<128x128xbf16>, vector<128x128xf32> -> vector<128x128xf32>
    %c0_3 = arith.constant 0 : index
    %c0_4 = arith.constant 0 : index
    %3 = vector.load %arg3[%c0_3, %c0_4] : memref<1x128xf32, #tpu.memory_space<vmem>>, vector<1x128xf32>
    %4 = vector.broadcast %3 : vector<1x128xf32> to vector<128x128xf32>
    %5 = arith.addf %2, %4 : vector<128x128xf32>
    %c0_5 = arith.constant 0 : index
    %c0_6 = arith.constant 0 : index
    %6 = vector.load %arg4[%c0_5, %c0_6] : memref<1x128xf32, #tpu.memory_space<vmem>>, vector<1x128xf32>
    %cst_7 = arith.constant 0.000000e+00 : f32
    %7 = vector.broadcast %cst_7 : f32 to vector<1x128xf32>
    %8 = arith.cmpf one, %6, %7 : vector<1x128xf32>
    %cst_8 = arith.constant 0.000000e+00 : f32
    %9 = vector.broadcast %cst_8 : f32 to vector<128x128xf32>
    %10 = arith.maximumf %5, %9 : vector<128x128xf32>
    %11 = vector.shape_cast %8 : vector<1x128xi1> to vector<1x128xi1>
    %12 = vector.broadcast %11 : vector<1x128xi1> to vector<128x128xi1>
    %13 = arith.select %12, %10, %5 : vector<128x128xi1>, vector<128x128xf32>
    %14 = arith.truncf %13 : vector<128x128xf32> to vector<128x128xbf16>
    %c0_9 = arith.constant 0 : index
    %c0_10 = arith.constant 0 : index
    %15 = vector.load %arg5[%c0_9, %c0_10] : memref<128x128xbf16, #tpu.memory_space<vmem>>, vector<128x128xbf16>
    tpu.vector_store %arg5[%c0_9, %c0_10], %14 {strides = array<i32>} : memref<128x128xbf16, #tpu.memory_space<vmem>>, vector<128x128xbf16>,
    return
  }
  func.func @transform_0(%arg0: i32) -> (i32, i32) {
    %c0_i32 = arith.constant 0 : i32
    %c0_i32_0 = arith.constant 0 : i32
    return %arg0, %c0_i32 : i32, i32
  }
  func.func @transform_1(%arg0: i32) -> (i32, i32) {
    %c0_i32 = arith.constant 0 : i32
    %c0_i32_0 = arith.constant 0 : i32
    %c0_i32_1 = arith.constant 0 : i32
    return %c0_i32, %c0_i32_0 : i32, i32
  }
  func.func @transform_2(%arg0: i32) -> (i32, i32) {
    %c0_i32 = arith.constant 0 : i32
    %c0_i32_0 = arith.constant 0 : i32
    %c0_i32_1 = arith.constant 0 : i32
    return %c0_i32, %c0_i32_0 : i32, i32
  }
  func.func @transform_3(%arg0: i32) -> (i32, i32) {
    %c0_i32 = arith.constant 0 : i32
    %c0_i32_0 = arith.constant 0 : i32
    %c0_i32_1 = arith.constant 0 : i32
    return %c0_i32, %c0_i32_0 : i32, i32
  }
  func.func @transform_4(%arg0: i32) -> (i32, i32) {
    %c0_i32 = arith.constant 0 : i32
    %c0_i32_0 = arith.constant 0 : i32
    return %arg0, %c0_i32 : i32, i32
  }
}

module attributes {stable_mosaic.version = 11 : i64} {
  func.func @_conv3x3_kernel(%arg0: i32, %arg1: i32, %arg2: memref<1x10x10x128xbf16, #tpu.memory_space<vmem>>, %arg3: memref<9x128x128xbf16, #tpu.memory_space<vmem>>, %arg4: memref<1x128xf32, #tpu.memory_space<vmem>>, %arg5: memref<1x1x8x128xbf16, #tpu.memory_space<vmem>>) attributes {dimension_semantics = [#tpu.dimension_semantics<parallel>, #tpu.dimension_semantics<parallel>], iteration_bounds = array<i64: 2, 8>, scalar_prefetch = 0 : i64, scratch_operands = 0 : i64, tpu.core_type = #tpu.core_type<tc>, window_params = [{transform_indices = @transform_0, window_bounds = array<i64: 1, 10, 10, 128>}, {pipeline_mode = #tpu.pipeline_mode<synchronous>, transform_indices = @transform_1, window_bounds = array<i64: 9, 128, 128>}, {pipeline_mode = #tpu.pipeline_mode<synchronous>, transform_indices = @transform_2, window_bounds = array<i64: 1, 128>}, {transform_indices = @transform_3, window_bounds = array<i64: 1, 1, 8, 128>}]} {
    %cst = arith.constant 0.000000e+00 : f32
    %0 = vector.broadcast %cst : f32 to vector<8x128xf32>
    %c1_i32 = arith.constant 1 : i32
    %1 = arith.muli %arg1, %c1_i32 : i32
    %c0_i32 = arith.constant 0 : i32
    %2 = arith.addi %1, %c0_i32 : i32
    %c0 = arith.constant 0 : index
    %3 = arith.index_cast %2 : i32 to index
    %c0_0 = arith.constant 0 : index
    %c0_1 = arith.constant 0 : index
    %4 = vector.load %arg2[%c0, %3, %c0_0, %c0_1] : memref<1x10x10x128xbf16, #tpu.memory_space<vmem>>, vector<1x1x10x128xbf16>
    %5 = vector.shape_cast %4 : vector<1x1x10x128xbf16> to vector<10x128xbf16>
    %6 = vector.extract_strided_slice %5 {offsets = [0, 0], sizes = [8, 128], strides = [1, 1]} : vector<10x128xbf16> to vector<8x128xbf16>
    %c0_2 = arith.constant 0 : index
    %c0_3 = arith.constant 0 : index
    %c0_4 = arith.constant 0 : index
    %7 = vector.load %arg3[%c0_2, %c0_3, %c0_4] : memref<9x128x128xbf16, #tpu.memory_space<vmem>>, vector<1x128x128xbf16>
    %8 = vector.shape_cast %7 : vector<1x128x128xbf16> to vector<128x128xbf16>
    %cst_5 = arith.constant dense<0.000000e+00> : vector<8x128xf32>
    %9 = tpu.matmul %6, %8, %cst_5 {dimension_numbers = #tpu.dot_dimension_numbers<[1], [0], [0], [1], [0, 0, 1, 1], [], []>} : vector<8x128xbf16>, vector<128x128xbf16>, vector<8x128xf32> -> vector<8x128xf32>
    %10 = arith.addf %0, %9 : vector<8x128xf32>
    %11 = vector.extract_strided_slice %5 {offsets = [1, 0], sizes = [8, 128], strides = [1, 1]} : vector<10x128xbf16> to vector<8x128xbf16>
    %c1 = arith.constant 1 : index
    %c0_6 = arith.constant 0 : index
    %c0_7 = arith.constant 0 : index
    %12 = vector.load %arg3[%c1, %c0_6, %c0_7] : memref<9x128x128xbf16, #tpu.memory_space<vmem>>, vector<1x128x128xbf16>
    %13 = vector.shape_cast %12 : vector<1x128x128xbf16> to vector<128x128xbf16>
    %cst_8 = arith.constant dense<0.000000e+00> : vector<8x128xf32>
    %14 = tpu.matmul %11, %13, %cst_8 {dimension_numbers = #tpu.dot_dimension_numbers<[1], [0], [0], [1], [0, 0, 1, 1], [], []>} : vector<8x128xbf16>, vector<128x128xbf16>, vector<8x128xf32> -> vector<8x128xf32>
    %15 = arith.addf %10, %14 : vector<8x128xf32>
    %16 = vector.extract_strided_slice %5 {offsets = [2, 0], sizes = [8, 128], strides = [1, 1]} : vector<10x128xbf16> to vector<8x128xbf16>
    %c2 = arith.constant 2 : index
    %c0_9 = arith.constant 0 : index
    %c0_10 = arith.constant 0 : index
    %17 = vector.load %arg3[%c2, %c0_9, %c0_10] : memref<9x128x128xbf16, #tpu.memory_space<vmem>>, vector<1x128x128xbf16>
    %18 = vector.shape_cast %17 : vector<1x128x128xbf16> to vector<128x128xbf16>
    %cst_11 = arith.constant dense<0.000000e+00> : vector<8x128xf32>
    %19 = tpu.matmul %16, %18, %cst_11 {dimension_numbers = #tpu.dot_dimension_numbers<[1], [0], [0], [1], [0, 0, 1, 1], [], []>} : vector<8x128xbf16>, vector<128x128xbf16>, vector<8x128xf32> -> vector<8x128xf32>
    %20 = arith.addf %15, %19 : vector<8x128xf32>
    %c1_i32_12 = arith.constant 1 : i32
    %21 = arith.muli %arg1, %c1_i32_12 : i32
    %c1_i32_13 = arith.constant 1 : i32
    %22 = arith.addi %21, %c1_i32_13 : i32
    %c0_14 = arith.constant 0 : index
    %23 = arith.index_cast %22 : i32 to index
    %c0_15 = arith.constant 0 : index
    %c0_16 = arith.constant 0 : index
    %24 = vector.load %arg2[%c0_14, %23, %c0_15, %c0_16] : memref<1x10x10x128xbf16, #tpu.memory_space<vmem>>, vector<1x1x10x128xbf16>
    %25 = vector.shape_cast %24 : vector<1x1x10x128xbf16> to vector<10x128xbf16>
    %26 = vector.extract_strided_slice %25 {offsets = [0, 0], sizes = [8, 128], strides = [1, 1]} : vector<10x128xbf16> to vector<8x128xbf16>
    %c3 = arith.constant 3 : index
    %c0_17 = arith.constant 0 : index
    %c0_18 = arith.constant 0 : index
    %27 = vector.load %arg3[%c3, %c0_17, %c0_18] : memref<9x128x128xbf16, #tpu.memory_space<vmem>>, vector<1x128x128xbf16>
    %28 = vector.shape_cast %27 : vector<1x128x128xbf16> to vector<128x128xbf16>
    %cst_19 = arith.constant dense<0.000000e+00> : vector<8x128xf32>
    %29 = tpu.matmul %26, %28, %cst_19 {dimension_numbers = #tpu.dot_dimension_numbers<[1], [0], [0], [1], [0, 0, 1, 1], [], []>} : vector<8x128xbf16>, vector<128x128xbf16>, vector<8x128xf32> -> vector<8x128xf32>
    %30 = arith.addf %20, %29 : vector<8x128xf32>
    %31 = vector.extract_strided_slice %25 {offsets = [1, 0], sizes = [8, 128], strides = [1, 1]} : vector<10x128xbf16> to vector<8x128xbf16>
    %c4 = arith.constant 4 : index
    %c0_20 = arith.constant 0 : index
    %c0_21 = arith.constant 0 : index
    %32 = vector.load %arg3[%c4, %c0_20, %c0_21] : memref<9x128x128xbf16, #tpu.memory_space<vmem>>, vector<1x128x128xbf16>
    %33 = vector.shape_cast %32 : vector<1x128x128xbf16> to vector<128x128xbf16>
    %cst_22 = arith.constant dense<0.000000e+00> : vector<8x128xf32>
    %34 = tpu.matmul %31, %33, %cst_22 {dimension_numbers = #tpu.dot_dimension_numbers<[1], [0], [0], [1], [0, 0, 1, 1], [], []>} : vector<8x128xbf16>, vector<128x128xbf16>, vector<8x128xf32> -> vector<8x128xf32>
    %35 = arith.addf %30, %34 : vector<8x128xf32>
    %36 = vector.extract_strided_slice %25 {offsets = [2, 0], sizes = [8, 128], strides = [1, 1]} : vector<10x128xbf16> to vector<8x128xbf16>
    %c5 = arith.constant 5 : index
    %c0_23 = arith.constant 0 : index
    %c0_24 = arith.constant 0 : index
    %37 = vector.load %arg3[%c5, %c0_23, %c0_24] : memref<9x128x128xbf16, #tpu.memory_space<vmem>>, vector<1x128x128xbf16>
    %38 = vector.shape_cast %37 : vector<1x128x128xbf16> to vector<128x128xbf16>
    %cst_25 = arith.constant dense<0.000000e+00> : vector<8x128xf32>
    %39 = tpu.matmul %36, %38, %cst_25 {dimension_numbers = #tpu.dot_dimension_numbers<[1], [0], [0], [1], [0, 0, 1, 1], [], []>} : vector<8x128xbf16>, vector<128x128xbf16>, vector<8x128xf32> -> vector<8x128xf32>
    %40 = arith.addf %35, %39 : vector<8x128xf32>
    %c1_i32_26 = arith.constant 1 : i32
    %41 = arith.muli %arg1, %c1_i32_26 : i32
    %c2_i32 = arith.constant 2 : i32
    %42 = arith.addi %41, %c2_i32 : i32
    %c0_27 = arith.constant 0 : index
    %43 = arith.index_cast %42 : i32 to index
    %c0_28 = arith.constant 0 : index
    %c0_29 = arith.constant 0 : index
    %44 = vector.load %arg2[%c0_27, %43, %c0_28, %c0_29] : memref<1x10x10x128xbf16, #tpu.memory_space<vmem>>, vector<1x1x10x128xbf16>
    %45 = vector.shape_cast %44 : vector<1x1x10x128xbf16> to vector<10x128xbf16>
    %46 = vector.extract_strided_slice %45 {offsets = [0, 0], sizes = [8, 128], strides = [1, 1]} : vector<10x128xbf16> to vector<8x128xbf16>
    %c6 = arith.constant 6 : index
    %c0_30 = arith.constant 0 : index
    %c0_31 = arith.constant 0 : index
    %47 = vector.load %arg3[%c6, %c0_30, %c0_31] : memref<9x128x128xbf16, #tpu.memory_space<vmem>>, vector<1x128x128xbf16>
    %48 = vector.shape_cast %47 : vector<1x128x128xbf16> to vector<128x128xbf16>
    %cst_32 = arith.constant dense<0.000000e+00> : vector<8x128xf32>
    %49 = tpu.matmul %46, %48, %cst_32 {dimension_numbers = #tpu.dot_dimension_numbers<[1], [0], [0], [1], [0, 0, 1, 1], [], []>} : vector<8x128xbf16>, vector<128x128xbf16>, vector<8x128xf32> -> vector<8x128xf32>
    %50 = arith.addf %40, %49 : vector<8x128xf32>
    %51 = vector.extract_strided_slice %45 {offsets = [1, 0], sizes = [8, 128], strides = [1, 1]} : vector<10x128xbf16> to vector<8x128xbf16>
    %c7 = arith.constant 7 : index
    %c0_33 = arith.constant 0 : index
    %c0_34 = arith.constant 0 : index
    %52 = vector.load %arg3[%c7, %c0_33, %c0_34] : memref<9x128x128xbf16, #tpu.memory_space<vmem>>, vector<1x128x128xbf16>
    %53 = vector.shape_cast %52 : vector<1x128x128xbf16> to vector<128x128xbf16>
    %cst_35 = arith.constant dense<0.000000e+00> : vector<8x128xf32>
    %54 = tpu.matmul %51, %53, %cst_35 {dimension_numbers = #tpu.dot_dimension_numbers<[1], [0], [0], [1], [0, 0, 1, 1], [], []>} : vector<8x128xbf16>, vector<128x128xbf16>, vector<8x128xf32> -> vector<8x128xf32>
    %55 = arith.addf %50, %54 : vector<8x128xf32>
    %56 = vector.extract_strided_slice %45 {offsets = [2, 0], sizes = [8, 128], strides = [1, 1]} : vector<10x128xbf16> to vector<8x128xbf16>
    %c8 = arith.constant 8 : index
    %c0_36 = arith.constant 0 : index
    %c0_37 = arith.constant 0 : index
    %57 = vector.load %arg3[%c8, %c0_36, %c0_37] : memref<9x128x128xbf16, #tpu.memory_space<vmem>>, vector<1x128x128xbf16>
    %58 = vector.shape_cast %57 : vector<1x128x128xbf16> to vector<128x128xbf16>
    %cst_38 = arith.constant dense<0.000000e+00> : vector<8x128xf32>
    %59 = tpu.matmul %56, %58, %cst_38 {dimension_numbers = #tpu.dot_dimension_numbers<[1], [0], [0], [1], [0, 0, 1, 1], [], []>} : vector<8x128xbf16>, vector<128x128xbf16>, vector<8x128xf32> -> vector<8x128xf32>
    %60 = arith.addf %55, %59 : vector<8x128xf32>
    %c0_39 = arith.constant 0 : index
    %c0_40 = arith.constant 0 : index
    %61 = vector.load %arg4[%c0_39, %c0_40] : memref<1x128xf32, #tpu.memory_space<vmem>>, vector<1x128xf32>
    %62 = vector.broadcast %61 : vector<1x128xf32> to vector<8x128xf32>
    %63 = arith.addf %60, %62 : vector<8x128xf32>
    %cst_41 = arith.constant 0.000000e+00 : f32
    %64 = vector.broadcast %cst_41 : f32 to vector<8x128xf32>
    %65 = arith.maximumf %63, %64 : vector<8x128xf32>
    %66 = arith.truncf %65 : vector<8x128xf32> to vector<8x128xbf16>
    %c0_42 = arith.constant 0 : index
    %c0_43 = arith.constant 0 : index
    %c0_44 = arith.constant 0 : index
    %c0_45 = arith.constant 0 : index
    %67 = vector.load %arg5[%c0_42, %c0_43, %c0_44, %c0_45] : memref<1x1x8x128xbf16, #tpu.memory_space<vmem>>, vector<1x1x8x128xbf16>
    %68 = vector.shape_cast %67 : vector<1x1x8x128xbf16> to vector<8x128xbf16>
    %69 = vector.shape_cast %66 : vector<8x128xbf16> to vector<1x1x8x128xbf16>
    tpu.vector_store %arg5[%c0_42, %c0_43, %c0_44, %c0_45], %69 {strides = array<i32>} : memref<1x1x8x128xbf16, #tpu.memory_space<vmem>>, vector<1x1x8x128xbf16>,
    return
  }
  func.func @transform_0(%arg0: i32, %arg1: i32) -> (i32, i32, i32, i32) {
    %c0_i32 = arith.constant 0 : i32
    %c0_i32_0 = arith.constant 0 : i32
    %c0_i32_1 = arith.constant 0 : i32
    %c0_i32_2 = arith.constant 0 : i32
    return %arg0, %c0_i32, %c0_i32_0, %c0_i32_1 : i32, i32, i32, i32
  }
  func.func @transform_1(%arg0: i32, %arg1: i32) -> (i32, i32, i32) {
    %c0_i32 = arith.constant 0 : i32
    %c0_i32_0 = arith.constant 0 : i32
    %c0_i32_1 = arith.constant 0 : i32
    %c0_i32_2 = arith.constant 0 : i32
    return %c0_i32, %c0_i32_0, %c0_i32_1 : i32, i32, i32
  }
  func.func @transform_2(%arg0: i32, %arg1: i32) -> (i32, i32) {
    %c0_i32 = arith.constant 0 : i32
    %c0_i32_0 = arith.constant 0 : i32
    %c0_i32_1 = arith.constant 0 : i32
    return %c0_i32, %c0_i32_0 : i32, i32
  }
  func.func @transform_3(%arg0: i32, %arg1: i32) -> (i32, i32, i32, i32) {
    %c0_i32 = arith.constant 0 : i32
    %c0_i32_0 = arith.constant 0 : i32
    %c0_i32_1 = arith.constant 0 : i32
    return %arg0, %arg1, %c0_i32, %c0_i32_0 : i32, i32, i32, i32
  }
}

module attributes {stable_mosaic.version = 11 : i64} {
  func.func @_resize2x_kernel(%arg0: i32, %arg1: memref<1x4x512xbf16, #tpu.memory_space<vmem>>, %arg2: memref<8x4xf32, #tpu.memory_space<vmem>>, %arg3: memref<1x8x1024xbf16, #tpu.memory_space<vmem>>, %arg4: memref<1x8x1024xbf16, #tpu.memory_space<vmem>>) attributes {dimension_semantics = [#tpu.dimension_semantics<parallel>], iteration_bounds = array<i64: 2>, scalar_prefetch = 0 : i64, scratch_operands = 0 : i64, tpu.core_type = #tpu.core_type<tc>, window_params = [{transform_indices = @transform_0, window_bounds = array<i64: 1, 4, 512>}, {pipeline_mode = #tpu.pipeline_mode<synchronous>, transform_indices = @transform_1, window_bounds = array<i64: 8, 4>}, {transform_indices = @transform_2, window_bounds = array<i64: 1, 8, 1024>}, {transform_indices = @transform_3, window_bounds = array<i64: 1, 8, 1024>}]} {
    %c0 = arith.constant 0 : index
    %c0_0 = arith.constant 0 : index
    %c0_1 = arith.constant 0 : index
    %0 = vector.load %arg1[%c0, %c0_0, %c0_1] : memref<1x4x512xbf16, #tpu.memory_space<vmem>>, vector<1x4x512xbf16>
    %1 = vector.shape_cast %0 : vector<1x4x512xbf16> to vector<4x512xbf16>
    %2 = arith.extf %1 : vector<4x512xbf16> to vector<4x512xf32>
    %c0_2 = arith.constant 0 : index
    %c0_3 = arith.constant 0 : index
    %3 = vector.load %arg2[%c0_2, %c0_3] : memref<8x4xf32, #tpu.memory_space<vmem>>, vector<8x4xf32>
    %cst = arith.constant dense<0.000000e+00> : vector<8x512xf32>
    %4 = tpu.matmul %3, %2, %cst {dimension_numbers = #tpu.dot_dimension_numbers<[1], [0], [0], [1], [0, 0, 1, 1], [], []>} : vector<8x4xf32>, vector<4x512xf32>, vector<8x512xf32> -> vector<8x512xf32>
    %5 = vector.extract_strided_slice %4 {offsets = [0, 0], sizes = [8, 128], strides = [1, 1]} : vector<8x512xf32> to vector<8x128xf32>
    %6 = vector.extract_strided_slice %4 {offsets = [0, 128], sizes = [8, 128], strides = [1, 1]} : vector<8x512xf32> to vector<8x128xf32>
    %cst_4 = arith.constant 1.000000e+00 : f32
    %7 = vector.broadcast %cst_4 : f32 to vector<8x128xf32>
    %8 = arith.mulf %7, %5 : vector<8x128xf32>
    %cst_5 = arith.constant 0.000000e+00 : f32
    %9 = vector.broadcast %cst_5 : f32 to vector<8x128xf32>
    %10 = arith.mulf %9, %6 : vector<8x128xf32>
    %11 = arith.addf %8, %10 : vector<8x128xf32>
    %12 = vector.extract_strided_slice %4 {offsets = [0, 0], sizes = [8, 128], strides = [1, 1]} : vector<8x512xf32> to vector<8x128xf32>
    %13 = vector.extract_strided_slice %4 {offsets = [0, 128], sizes = [8, 128], strides = [1, 1]} : vector<8x512xf32> to vector<8x128xf32>
    %cst_6 = arith.constant 0.571428597 : f32
    %14 = vector.broadcast %cst_6 : f32 to vector<8x128xf32>
    %15 = arith.mulf %14, %12 : vector<8x128xf32>
    %cst_7 = arith.constant 0.428571433 : f32
    %16 = vector.broadcast %cst_7 : f32 to vector<8x128xf32>
    %17 = arith.mulf %16, %13 : vector<8x128xf32>
    %18 = arith.addf %15, %17 : vector<8x128xf32>
    %19 = vector.extract_strided_slice %4 {offsets = [0, 0], sizes = [8, 128], strides = [1, 1]} : vector<8x512xf32> to vector<8x128xf32>
    %20 = vector.extract_strided_slice %4 {offsets = [0, 128], sizes = [8, 128], strides = [1, 1]} : vector<8x512xf32> to vector<8x128xf32>
    %cst_8 = arith.constant 0.142857149 : f32
    %21 = vector.broadcast %cst_8 : f32 to vector<8x128xf32>
    %22 = arith.mulf %21, %19 : vector<8x128xf32>
    %cst_9 = arith.constant 0.857142865 : f32
    %23 = vector.broadcast %cst_9 : f32 to vector<8x128xf32>
    %24 = arith.mulf %23, %20 : vector<8x128xf32>
    %25 = arith.addf %22, %24 : vector<8x128xf32>
    %26 = vector.extract_strided_slice %4 {offsets = [0, 128], sizes = [8, 128], strides = [1, 1]} : vector<8x512xf32> to vector<8x128xf32>
    %27 = vector.extract_strided_slice %4 {offsets = [0, 256], sizes = [8, 128], strides = [1, 1]} : vector<8x512xf32> to vector<8x128xf32>
    %cst_10 = arith.constant 0.714285731 : f32
    %28 = vector.broadcast %cst_10 : f32 to vector<8x128xf32>
    %29 = arith.mulf %28, %26 : vector<8x128xf32>
    %cst_11 = arith.constant 0.285714298 : f32
    %30 = vector.broadcast %cst_11 : f32 to vector<8x128xf32>
    %31 = arith.mulf %30, %27 : vector<8x128xf32>
    %32 = arith.addf %29, %31 : vector<8x128xf32>
    %33 = vector.extract_strided_slice %4 {offsets = [0, 128], sizes = [8, 128], strides = [1, 1]} : vector<8x512xf32> to vector<8x128xf32>
    %34 = vector.extract_strided_slice %4 {offsets = [0, 256], sizes = [8, 128], strides = [1, 1]} : vector<8x512xf32> to vector<8x128xf32>
    %cst_12 = arith.constant 0.285714298 : f32
    %35 = vector.broadcast %cst_12 : f32 to vector<8x128xf32>
    %36 = arith.mulf %35, %33 : vector<8x128xf32>
    %cst_13 = arith.constant 0.714285731 : f32
    %37 = vector.broadcast %cst_13 : f32 to vector<8x128xf32>
    %38 = arith.mulf %37, %34 : vector<8x128xf32>
    %39 = arith.addf %36, %38 : vector<8x128xf32>
    %40 = vector.extract_strided_slice %4 {offsets = [0, 256], sizes = [8, 128], strides = [1, 1]} : vector<8x512xf32> to vector<8x128xf32>
    %41 = vector.extract_strided_slice %4 {offsets = [0, 384], sizes = [8, 128], strides = [1, 1]} : vector<8x512xf32> to vector<8x128xf32>
    %cst_14 = arith.constant 0.857142865 : f32
    %42 = vector.broadcast %cst_14 : f32 to vector<8x128xf32>
    %43 = arith.mulf %42, %40 : vector<8x128xf32>
    %cst_15 = arith.constant 0.142857149 : f32
    %44 = vector.broadcast %cst_15 : f32 to vector<8x128xf32>
    %45 = arith.mulf %44, %41 : vector<8x128xf32>
    %46 = arith.addf %43, %45 : vector<8x128xf32>
    %47 = vector.extract_strided_slice %4 {offsets = [0, 256], sizes = [8, 128], strides = [1, 1]} : vector<8x512xf32> to vector<8x128xf32>
    %48 = vector.extract_strided_slice %4 {offsets = [0, 384], sizes = [8, 128], strides = [1, 1]} : vector<8x512xf32> to vector<8x128xf32>
    %cst_16 = arith.constant 0.428571433 : f32
    %49 = vector.broadcast %cst_16 : f32 to vector<8x128xf32>
    %50 = arith.mulf %49, %47 : vector<8x128xf32>
    %cst_17 = arith.constant 0.571428597 : f32
    %51 = vector.broadcast %cst_17 : f32 to vector<8x128xf32>
    %52 = arith.mulf %51, %48 : vector<8x128xf32>
    %53 = arith.addf %50, %52 : vector<8x128xf32>
    %54 = vector.extract_strided_slice %4 {offsets = [0, 384], sizes = [8, 128], strides = [1, 1]} : vector<8x512xf32> to vector<8x128xf32>
    %55 = vector.extract_strided_slice %4 {offsets = [0, 384], sizes = [8, 128], strides = [1, 1]} : vector<8x512xf32> to vector<8x128xf32>
    %cst_18 = arith.constant 1.000000e+00 : f32
    %56 = vector.broadcast %cst_18 : f32 to vector<8x128xf32>
    %57 = arith.mulf %56, %54 : vector<8x128xf32>
    %cst_19 = arith.constant 0.000000e+00 : f32
    %58 = vector.broadcast %cst_19 : f32 to vector<8x128xf32>
    %59 = arith.mulf %58, %55 : vector<8x128xf32>
    %60 = arith.addf %57, %59 : vector<8x128xf32>
    %61 = tpu.concatenate %11, %18, %25, %32, %39, %46, %53, %60 in 1 : vector<8x128xf32>, vector<8x128xf32>, vector<8x128xf32>, vector<8x128xf32>, vector<8x128xf32>, vector<8x128xf32>, vector<8x128xf32>, vector<8x128xf32> -> vector<8x1024xf32>
    %c0_20 = arith.constant 0 : index
    %c0_21 = arith.constant 0 : index
    %c0_22 = arith.constant 0 : index
    %62 = vector.load %arg3[%c0_20, %c0_21, %c0_22] : memref<1x8x1024xbf16, #tpu.memory_space<vmem>>, vector<1x8x1024xbf16>
    %63 = vector.shape_cast %62 : vector<1x8x1024xbf16> to vector<8x1024xbf16>
    %64 = arith.extf %63 : vector<8x1024xbf16> to vector<8x1024xf32>
    %65 = arith.addf %61, %64 : vector<8x1024xf32>
    %66 = arith.truncf %65 : vector<8x1024xf32> to vector<8x1024xbf16>
    %c0_23 = arith.constant 0 : index
    %c0_24 = arith.constant 0 : index
    %c0_25 = arith.constant 0 : index
    %67 = vector.load %arg4[%c0_23, %c0_24, %c0_25] : memref<1x8x1024xbf16, #tpu.memory_space<vmem>>, vector<1x8x1024xbf16>
    %68 = vector.shape_cast %67 : vector<1x8x1024xbf16> to vector<8x1024xbf16>
    %69 = vector.shape_cast %66 : vector<8x1024xbf16> to vector<1x8x1024xbf16>
    tpu.vector_store %arg4[%c0_23, %c0_24, %c0_25], %69 {strides = array<i32>} : memref<1x8x1024xbf16, #tpu.memory_space<vmem>>, vector<1x8x1024xbf16>,
    return
  }
  func.func @transform_0(%arg0: i32) -> (i32, i32, i32) {
    %c0_i32 = arith.constant 0 : i32
    %c0_i32_0 = arith.constant 0 : i32
    %c0_i32_1 = arith.constant 0 : i32
    return %arg0, %c0_i32, %c0_i32_0 : i32, i32, i32
  }
  func.func @transform_1(%arg0: i32) -> (i32, i32) {
    %c0_i32 = arith.constant 0 : i32
    %c0_i32_0 = arith.constant 0 : i32
    %c0_i32_1 = arith.constant 0 : i32
    return %c0_i32, %c0_i32_0 : i32, i32
  }
  func.func @transform_2(%arg0: i32) -> (i32, i32, i32) {
    %c0_i32 = arith.constant 0 : i32
    %c0_i32_0 = arith.constant 0 : i32
    %c0_i32_1 = arith.constant 0 : i32
    return %arg0, %c0_i32, %c0_i32_0 : i32, i32, i32
  }
  func.func @transform_3(%arg0: i32) -> (i32, i32, i32) {
    %c0_i32 = arith.constant 0 : i32
    %c0_i32_0 = arith.constant 0 : i32
    %c0_i32_1 = arith.constant 0 : i32
    return %arg0, %c0_i32, %c0_i32_0 : i32, i32, i32
  }
}

module attributes {stable_mosaic.version = 11 : i64} {
  func.func @_resize2x_kernel(%arg0: i32, %arg1: memref<1x8x1024xbf16, #tpu.memory_space<vmem>>, %arg2: memref<16x8xf32, #tpu.memory_space<vmem>>, %arg3: memref<1x16x2048xf32, #tpu.memory_space<vmem>>) attributes {dimension_semantics = [#tpu.dimension_semantics<parallel>], iteration_bounds = array<i64: 2>, scalar_prefetch = 0 : i64, scratch_operands = 0 : i64, tpu.core_type = #tpu.core_type<tc>, window_params = [{transform_indices = @transform_0, window_bounds = array<i64: 1, 8, 1024>}, {pipeline_mode = #tpu.pipeline_mode<synchronous>, transform_indices = @transform_1, window_bounds = array<i64: 16, 8>}, {transform_indices = @transform_2, window_bounds = array<i64: 1, 16, 2048>}]} {
    %c0 = arith.constant 0 : index
    %c0_0 = arith.constant 0 : index
    %c0_1 = arith.constant 0 : index
    %0 = vector.load %arg1[%c0, %c0_0, %c0_1] : memref<1x8x1024xbf16, #tpu.memory_space<vmem>>, vector<1x8x1024xbf16>
    %1 = vector.shape_cast %0 : vector<1x8x1024xbf16> to vector<8x1024xbf16>
    %2 = arith.extf %1 : vector<8x1024xbf16> to vector<8x1024xf32>
    %c0_2 = arith.constant 0 : index
    %c0_3 = arith.constant 0 : index
    %3 = vector.load %arg2[%c0_2, %c0_3] : memref<16x8xf32, #tpu.memory_space<vmem>>, vector<16x8xf32>
    %cst = arith.constant dense<0.000000e+00> : vector<16x1024xf32>
    %4 = tpu.matmul %3, %2, %cst {dimension_numbers = #tpu.dot_dimension_numbers<[1], [0], [0], [1], [0, 0, 1, 1], [], []>} : vector<16x8xf32>, vector<8x1024xf32>, vector<16x1024xf32> -> vector<16x1024xf32>
    %5 = vector.extract_strided_slice %4 {offsets = [0, 0], sizes = [16, 128], strides = [1, 1]} : vector<16x1024xf32> to vector<16x128xf32>
    %6 = vector.extract_strided_slice %4 {offsets = [0, 128], sizes = [16, 128], strides = [1, 1]} : vector<16x1024xf32> to vector<16x128xf32>
    %cst_4 = arith.constant 1.000000e+00 : f32
    %7 = vector.broadcast %cst_4 : f32 to vector<16x128xf32>
    %8 = arith.mulf %7, %5 : vector<16x128xf32>
    %cst_5 = arith.constant 0.000000e+00 : f32
    %9 = vector.broadcast %cst_5 : f32 to vector<16x128xf32>
    %10 = arith.mulf %9, %6 : vector<16x128xf32>
    %11 = arith.addf %8, %10 : vector<16x128xf32>
    %12 = vector.extract_strided_slice %4 {offsets = [0, 0], sizes = [16, 128], strides = [1, 1]} : vector<16x1024xf32> to vector<16x128xf32>
    %13 = vector.extract_strided_slice %4 {offsets = [0, 128], sizes = [16, 128], strides = [1, 1]} : vector<16x1024xf32> to vector<16x128xf32>
    %cst_6 = arith.constant 0.533333361 : f32
    %14 = vector.broadcast %cst_6 : f32 to vector<16x128xf32>
    %15 = arith.mulf %14, %12 : vector<16x128xf32>
    %cst_7 = arith.constant 0.466666669 : f32
    %16 = vector.broadcast %cst_7 : f32 to vector<16x128xf32>
    %17 = arith.mulf %16, %13 : vector<16x128xf32>
    %18 = arith.addf %15, %17 : vector<16x128xf32>
    %19 = vector.extract_strided_slice %4 {offsets = [0, 0], sizes = [16, 128], strides = [1, 1]} : vector<16x1024xf32> to vector<16x128xf32>
    %20 = vector.extract_strided_slice %4 {offsets = [0, 128], sizes = [16, 128], strides = [1, 1]} : vector<16x1024xf32> to vector<16x128xf32>
    %cst_8 = arith.constant 0.0666666701 : f32
    %21 = vector.broadcast %cst_8 : f32 to vector<16x128xf32>
    %22 = arith.mulf %21, %19 : vector<16x128xf32>
    %cst_9 = arith.constant 0.933333337 : f32
    %23 = vector.broadcast %cst_9 : f32 to vector<16x128xf32>
    %24 = arith.mulf %23, %20 : vector<16x128xf32>
    %25 = arith.addf %22, %24 : vector<16x128xf32>
    %26 = vector.extract_strided_slice %4 {offsets = [0, 128], sizes = [16, 128], strides = [1, 1]} : vector<16x1024xf32> to vector<16x128xf32>
    %27 = vector.extract_strided_slice %4 {offsets = [0, 256], sizes = [16, 128], strides = [1, 1]} : vector<16x1024xf32> to vector<16x128xf32>
    %cst_10 = arith.constant 6.000000e-01 : f32
    %28 = vector.broadcast %cst_10 : f32 to vector<16x128xf32>
    %29 = arith.mulf %28, %26 : vector<16x128xf32>
    %cst_11 = arith.constant 4.000000e-01 : f32
    %30 = vector.broadcast %cst_11 : f32 to vector<16x128xf32>
    %31 = arith.mulf %30, %27 : vector<16x128xf32>
    %32 = arith.addf %29, %31 : vector<16x128xf32>
    %33 = vector.extract_strided_slice %4 {offsets = [0, 128], sizes = [16, 128], strides = [1, 1]} : vector<16x1024xf32> to vector<16x128xf32>
    %34 = vector.extract_strided_slice %4 {offsets = [0, 256], sizes = [16, 128], strides = [1, 1]} : vector<16x1024xf32> to vector<16x128xf32>
    %cst_12 = arith.constant 0.13333334 : f32
    %35 = vector.broadcast %cst_12 : f32 to vector<16x128xf32>
    %36 = arith.mulf %35, %33 : vector<16x128xf32>
    %cst_13 = arith.constant 0.866666674 : f32
    %37 = vector.broadcast %cst_13 : f32 to vector<16x128xf32>
    %38 = arith.mulf %37, %34 : vector<16x128xf32>
    %39 = arith.addf %36, %38 : vector<16x128xf32>
    %40 = vector.extract_strided_slice %4 {offsets = [0, 256], sizes = [16, 128], strides = [1, 1]} : vector<16x1024xf32> to vector<16x128xf32>
    %41 = vector.extract_strided_slice %4 {offsets = [0, 384], sizes = [16, 128], strides = [1, 1]} : vector<16x1024xf32> to vector<16x128xf32>
    %cst_14 = arith.constant 0.666666686 : f32
    %42 = vector.broadcast %cst_14 : f32 to vector<16x128xf32>
    %43 = arith.mulf %42, %40 : vector<16x128xf32>
    %cst_15 = arith.constant 0.333333343 : f32
    %44 = vector.broadcast %cst_15 : f32 to vector<16x128xf32>
    %45 = arith.mulf %44, %41 : vector<16x128xf32>
    %46 = arith.addf %43, %45 : vector<16x128xf32>
    %47 = vector.extract_strided_slice %4 {offsets = [0, 256], sizes = [16, 128], strides = [1, 1]} : vector<16x1024xf32> to vector<16x128xf32>
    %48 = vector.extract_strided_slice %4 {offsets = [0, 384], sizes = [16, 128], strides = [1, 1]} : vector<16x1024xf32> to vector<16x128xf32>
    %cst_16 = arith.constant 2.000000e-01 : f32
    %49 = vector.broadcast %cst_16 : f32 to vector<16x128xf32>
    %50 = arith.mulf %49, %47 : vector<16x128xf32>
    %cst_17 = arith.constant 8.000000e-01 : f32
    %51 = vector.broadcast %cst_17 : f32 to vector<16x128xf32>
    %52 = arith.mulf %51, %48 : vector<16x128xf32>
    %53 = arith.addf %50, %52 : vector<16x128xf32>
    %54 = vector.extract_strided_slice %4 {offsets = [0, 384], sizes = [16, 128], strides = [1, 1]} : vector<16x1024xf32> to vector<16x128xf32>
    %55 = vector.extract_strided_slice %4 {offsets = [0, 512], sizes = [16, 128], strides = [1, 1]} : vector<16x1024xf32> to vector<16x128xf32>
    %cst_18 = arith.constant 0.733333349 : f32
    %56 = vector.broadcast %cst_18 : f32 to vector<16x128xf32>
    %57 = arith.mulf %56, %54 : vector<16x128xf32>
    %cst_19 = arith.constant 0.266666681 : f32
    %58 = vector.broadcast %cst_19 : f32 to vector<16x128xf32>
    %59 = arith.mulf %58, %55 : vector<16x128xf32>
    %60 = arith.addf %57, %59 : vector<16x128xf32>
    %61 = vector.extract_strided_slice %4 {offsets = [0, 384], sizes = [16, 128], strides = [1, 1]} : vector<16x1024xf32> to vector<16x128xf32>
    %62 = vector.extract_strided_slice %4 {offsets = [0, 512], sizes = [16, 128], strides = [1, 1]} : vector<16x1024xf32> to vector<16x128xf32>
    %cst_20 = arith.constant 0.266666681 : f32
    %63 = vector.broadcast %cst_20 : f32 to vector<16x128xf32>
    %64 = arith.mulf %63, %61 : vector<16x128xf32>
    %cst_21 = arith.constant 0.733333349 : f32
    %65 = vector.broadcast %cst_21 : f32 to vector<16x128xf32>
    %66 = arith.mulf %65, %62 : vector<16x128xf32>
    %67 = arith.addf %64, %66 : vector<16x128xf32>
    %68 = vector.extract_strided_slice %4 {offsets = [0, 512], sizes = [16, 128], strides = [1, 1]} : vector<16x1024xf32> to vector<16x128xf32>
    %69 = vector.extract_strided_slice %4 {offsets = [0, 640], sizes = [16, 128], strides = [1, 1]} : vector<16x1024xf32> to vector<16x128xf32>
    %cst_22 = arith.constant 8.000000e-01 : f32
    %70 = vector.broadcast %cst_22 : f32 to vector<16x128xf32>
    %71 = arith.mulf %70, %68 : vector<16x128xf32>
    %cst_23 = arith.constant 2.000000e-01 : f32
    %72 = vector.broadcast %cst_23 : f32 to vector<16x128xf32>
    %73 = arith.mulf %72, %69 : vector<16x128xf32>
    %74 = arith.addf %71, %73 : vector<16x128xf32>
    %75 = vector.extract_strided_slice %4 {offsets = [0, 512], sizes = [16, 128], strides = [1, 1]} : vector<16x1024xf32> to vector<16x128xf32>
    %76 = vector.extract_strided_slice %4 {offsets = [0, 640], sizes = [16, 128], strides = [1, 1]} : vector<16x1024xf32> to vector<16x128xf32>
    %cst_24 = arith.constant 0.333333343 : f32
    %77 = vector.broadcast %cst_24 : f32 to vector<16x128xf32>
    %78 = arith.mulf %77, %75 : vector<16x128xf32>
    %cst_25 = arith.constant 0.666666686 : f32
    %79 = vector.broadcast %cst_25 : f32 to vector<16x128xf32>
    %80 = arith.mulf %79, %76 : vector<16x128xf32>
    %81 = arith.addf %78, %80 : vector<16x128xf32>
    %82 = vector.extract_strided_slice %4 {offsets = [0, 640], sizes = [16, 128], strides = [1, 1]} : vector<16x1024xf32> to vector<16x128xf32>
    %83 = vector.extract_strided_slice %4 {offsets = [0, 768], sizes = [16, 128], strides = [1, 1]} : vector<16x1024xf32> to vector<16x128xf32>
    %cst_26 = arith.constant 0.866666674 : f32
    %84 = vector.broadcast %cst_26 : f32 to vector<16x128xf32>
    %85 = arith.mulf %84, %82 : vector<16x128xf32>
    %cst_27 = arith.constant 0.13333334 : f32
    %86 = vector.broadcast %cst_27 : f32 to vector<16x128xf32>
    %87 = arith.mulf %86, %83 : vector<16x128xf32>
    %88 = arith.addf %85, %87 : vector<16x128xf32>
    %89 = vector.extract_strided_slice %4 {offsets = [0, 640], sizes = [16, 128], strides = [1, 1]} : vector<16x1024xf32> to vector<16x128xf32>
    %90 = vector.extract_strided_slice %4 {offsets = [0, 768], sizes = [16, 128], strides = [1, 1]} : vector<16x1024xf32> to vector<16x128xf32>
    %cst_28 = arith.constant 4.000000e-01 : f32
    %91 = vector.broadcast %cst_28 : f32 to vector<16x128xf32>
    %92 = arith.mulf %91, %89 : vector<16x128xf32>
    %cst_29 = arith.constant 6.000000e-01 : f32
    %93 = vector.broadcast %cst_29 : f32 to vector<16x128xf32>
    %94 = arith.mulf %93, %90 : vector<16x128xf32>
    %95 = arith.addf %92, %94 : vector<16x128xf32>
    %96 = vector.extract_strided_slice %4 {offsets = [0, 768], sizes = [16, 128], strides = [1, 1]} : vector<16x1024xf32> to vector<16x128xf32>
    %97 = vector.extract_strided_slice %4 {offsets = [0, 896], sizes = [16, 128], strides = [1, 1]} : vector<16x1024xf32> to vector<16x128xf32>
    %cst_30 = arith.constant 0.933333337 : f32
    %98 = vector.broadcast %cst_30 : f32 to vector<16x128xf32>
    %99 = arith.mulf %98, %96 : vector<16x128xf32>
    %cst_31 = arith.constant 0.0666666701 : f32
    %100 = vector.broadcast %cst_31 : f32 to vector<16x128xf32>
    %101 = arith.mulf %100, %97 : vector<16x128xf32>
    %102 = arith.addf %99, %101 : vector<16x128xf32>
    %103 = vector.extract_strided_slice %4 {offsets = [0, 768], sizes = [16, 128], strides = [1, 1]} : vector<16x1024xf32> to vector<16x128xf32>
    %104 = vector.extract_strided_slice %4 {offsets = [0, 896], sizes = [16, 128], strides = [1, 1]} : vector<16x1024xf32> to vector<16x128xf32>
    %cst_32 = arith.constant 0.466666669 : f32
    %105 = vector.broadcast %cst_32 : f32 to vector<16x128xf32>
    %106 = arith.mulf %105, %103 : vector<16x128xf32>
    %cst_33 = arith.constant 0.533333361 : f32
    %107 = vector.broadcast %cst_33 : f32 to vector<16x128xf32>
    %108 = arith.mulf %107, %104 : vector<16x128xf32>
    %109 = arith.addf %106, %108 : vector<16x128xf32>
    %110 = vector.extract_strided_slice %4 {offsets = [0, 896], sizes = [16, 128], strides = [1, 1]} : vector<16x1024xf32> to vector<16x128xf32>
    %111 = vector.extract_strided_slice %4 {offsets = [0, 896], sizes = [16, 128], strides = [1, 1]} : vector<16x1024xf32> to vector<16x128xf32>
    %cst_34 = arith.constant 1.000000e+00 : f32
    %112 = vector.broadcast %cst_34 : f32 to vector<16x128xf32>
    %113 = arith.mulf %112, %110 : vector<16x128xf32>
    %cst_35 = arith.constant 0.000000e+00 : f32
    %114 = vector.broadcast %cst_35 : f32 to vector<16x128xf32>
    %115 = arith.mulf %114, %111 : vector<16x128xf32>
    %116 = arith.addf %113, %115 : vector<16x128xf32>
    %117 = tpu.concatenate %11, %18, %25, %32, %39, %46, %53, %60, %67, %74, %81, %88, %95, %102, %109, %116 in 1 : vector<16x128xf32>, vector<16x128xf32>, vector<16x128xf32>, vector<16x128xf32>, vector<16x128xf32>, vector<16x128xf32>, vector<16x128xf32>, vector<16x128xf32>, vector<16x128xf32>, vector<16x128xf32>, vector<16x128xf32>, vector<16x128xf32>, vector<16x128xf32>, vector<16x128xf32>, vector<16x128xf32>, vector<16x128xf32> -> vector<16x2048xf32>
    %c0_36 = arith.constant 0 : index
    %c0_37 = arith.constant 0 : index
    %c0_38 = arith.constant 0 : index
    %118 = vector.load %arg3[%c0_36, %c0_37, %c0_38] : memref<1x16x2048xf32, #tpu.memory_space<vmem>>, vector<1x16x2048xf32>
    %119 = vector.shape_cast %118 : vector<1x16x2048xf32> to vector<16x2048xf32>
    %120 = vector.shape_cast %117 : vector<16x2048xf32> to vector<1x16x2048xf32>
    tpu.vector_store %arg3[%c0_36, %c0_37, %c0_38], %120 {strides = array<i32>} : memref<1x16x2048xf32, #tpu.memory_space<vmem>>, vector<1x16x2048xf32>,
    return
  }
  func.func @transform_0(%arg0: i32) -> (i32, i32, i32) {
    %c0_i32 = arith.constant 0 : i32
    %c0_i32_0 = arith.constant 0 : i32
    %c0_i32_1 = arith.constant 0 : i32
    return %arg0, %c0_i32, %c0_i32_0 : i32, i32, i32
  }
  func.func @transform_1(%arg0: i32) -> (i32, i32) {
    %c0_i32 = arith.constant 0 : i32
    %c0_i32_0 = arith.constant 0 : i32
    %c0_i32_1 = arith.constant 0 : i32
    return %c0_i32, %c0_i32_0 : i32, i32
  }
  func.func @transform_2(%arg0: i32) -> (i32, i32, i32) {
    %c0_i32 = arith.constant 0 : i32
    %c0_i32_0 = arith.constant 0 : i32
    %c0_i32_1 = arith.constant 0 : i32
    return %arg0, %c0_i32, %c0_i32_0 : i32, i32, i32
  }
}

</mosaic_0001>

<llo_original>
// kernel: branch_forward.12
$region0: #{branch_forward.12}
  #allocation0 [shape = 'u32[]', space=smem, size = 0x4, offset = 0x4, fixed_abs, tag = 'smem constant byte address 0x4 - core index']
  #allocation1 [shape = 'u32[144,128]{1,0:T(1,128)}', space=vmem, size = 0x12000, scoped, tag = 'internal scratch']
  %s0 = inlined_call_operand.vmem [shape: bf16[32,128], index: 0, kind: input, shape index: {}]
  %s1 = inlined_call_operand.vmem [shape: bf16[128,128], index: 1, kind: input, shape index: {}]
  %s2 = inlined_call_operand.vmem [shape: f32[1,128], index: 2, kind: input, shape index: {}]
  %s3 = inlined_call_operand.vmem [shape: f32[1,128], index: 3, kind: input, shape index: {}]
  %s4 = inlined_call_operand.vmem [shape: bf16[32,128], index: 4, kind: output, shape index: {}]
  %s5 = sld [smem:[#allocation0]]
  $region26: #{branch_forward.12} parent=0
    _
  %s7 = ssub.s32 1, %s5
  %s8 = scalar_select 0, %s7, %s5
  // Predicated region
  $region2: #{branch_forward.12} parent=0 // pred_check
    _
  $region3: #{branch_forward.12} parent=0 // pred_check_branch
    %10 = sbr.rel (0) target = $region5
  $region4: #{branch_forward.12} parent=0 // pred_region
    _
  $region5: #{branch_forward.12} parent=0 // pred_fallthru
    _
  // Predicated region
  $region6: #{branch_forward.12} parent=0 // pred_check
    _
  $region7: #{branch_forward.12} parent=0 // pred_check_branch
    %12 = sbr.rel (0) target = $region9
  $region8: #{branch_forward.12} parent=0 // pred_region
    _
  $region9: #{branch_forward.12} parent=0 // pred_fallthru
    _
  // Predicated region
  $region10: #{branch_forward.12} parent=0 // pred_check
    _
  $region11: #{branch_forward.12} parent=0 // pred_check_branch
    %14 = sbr.rel (0) target = $region13
  $region12: #{branch_forward.12} parent=0 // pred_region
    _
  $region13: #{branch_forward.12} parent=0 // pred_fallthru
    _
  // Predicated region
  $region14: #{branch_forward.12} parent=0 // pred_check
    _
  $region15: #{branch_forward.12} parent=0 // pred_check_branch
    %16 = sbr.rel (0) target = $region17
  $region16: #{branch_forward.12} parent=0 // pred_region
    _
  $region17: #{branch_forward.12} parent=0 // pred_fallthru
    _
  %v18 = vld [vmem:[%s0] sm:$0xf]
  %v19 = vld [vmem:[%s0 + $0x4] sm:$0xf]
  %v20 = vld [vmem:[%s0 + $0x8] sm:$0xf]
  %v21 = vld [vmem:[%s0 + $0xc] sm:$0xf]
  %v22 = vld [vmem:[%s1] sm:$0xf]
  %v23 = vld [vmem:[%s1 + $0x4] sm:$0xf]
  %v24 = vld [vmem:[%s1 + $0x8] sm:$0xf]
  %v25 = vld [vmem:[%s1 + $0xc] sm:$0xf]
  %v26 = vld [vmem:[%s1 + $0x10] sm:$0xf]
  %v27 = vld [vmem:[%s1 + $0x14] sm:$0xf]
  %v28 = vld [vmem:[%s1 + $0x18] sm:$0xf]
  %v29 = vld [vmem:[%s1 + $0x1c] sm:$0xf]
  %v30 = vld [vmem:[%s1 + $0x20] sm:$0xf]
  %v31 = vld [vmem:[%s1 + $0x24] sm:$0xf]
  %v32 = vld [vmem:[%s1 + $0x28] sm:$0xf]
  %v33 = vld [vmem:[%s1 + $0x2c] sm:$0xf]
  %v34 = vld [vmem:[%s1 + $0x30] sm:$0xf]
  %v35 = vld [vmem:[%s1 + $0x34] sm:$0xf]
  %v36 = vld [vmem:[%s1 + $0x38] sm:$0xf]
  %v37 = vld [vmem:[%s1 + $0x3c] sm:$0xf]
  %v38 = vld [vmem:[%s2] sm:$0x1]
  %v40 = vlaneseq
  %v41 = vshrl.u32 %v40, 7
  %v42 = vsub.s32 0, %v41
  %v43 = vrot.slane %v38, %v42
  %v49 = vunpack.c.l.b16 %v18
  %v50 = vunpack.c.l.b16 %v19
  %v51 = vunpack.c.l.b16 %v20
  %v52 = vunpack.c.l.b16 %v21
  %v53 = vpack.c.b16 %v50, %v49
  %v54 = vpack.c.b16 %v52, %v51
  %v73 = vunpack.c.l.b16 %v22
  %v74 = vunpack.c.l.b16 %v23
  %v75 = vunpack.c.l.b16 %v24
  %v76 = vunpack.c.l.b16 %v25
  %v77 = vunpack.c.l.b16 %v26
  %v78 = vunpack.c.l.b16 %v27
  %v79 = vunpack.c.l.b16 %v28
  %v80 = vunpack.c.l.b16 %v29
  %v81 = vunpack.c.l.b16 %v30
  %v82 = vunpack.c.l.b16 %v31
  %v83 = vunpack.c.l.b16 %v32
  %v84 = vunpack.c.l.b16 %v33
  %v85 = vunpack.c.l.b16 %v34
  %v86 = vunpack.c.l.b16 %v35
  %v87 = vunpack.c.l.b16 %v36
  %v88 = vunpack.c.l.b16 %v37
  %v89 = vpack.c.b16 %v74, %v73
  %v90 = vpack.c.b16 %v76, %v75
  %v91 = vpack.c.b16 %v78, %v77
  %v92 = vpack.c.b16 %v80, %v79
  %v93 = vpack.c.b16 %v82, %v81
  %v94 = vpack.c.b16 %v84, %v83
  %v95 = vpack.c.b16 %v86, %v85
  %v96 = vpack.c.b16 %v88, %v87
  %105 = vmatprep.subr.bf16.mxu0 0
  %106 = vmatpush1.bf16.msra.mxu0 %v96
  %107 = vmatprep.subr.bf16.mxu0 0
  %108 = vmatpush1.bf16.msra.mxu0 %v95
  %109 = vmatprep.subr.bf16.mxu0 0
  %110 = vmatpush1.bf16.msra.mxu0 %v94
  %111 = vmatprep.subr.bf16.mxu0 0
  %112 = vmatpush1.bf16.msra.mxu0 %v93
  %113 = vmatprep.subr.bf16.mxu0 0
  %114 = vmatpush1.bf16.msra.mxu0 %v92
  %115 = vmatprep.subr.bf16.mxu0 0
  %116 = vmatpush1.bf16.msra.mxu0 %v91
  %117 = vmatprep.subr.bf16.mxu0 0
  %118 = vmatpush1.bf16.msra.mxu0 %v90
  %119 = vmatprep.subr.bf16.mxu0 0
  %120 = vmatpush1.bf16.msra.mxu0 %v89
  %121 = vmatprep.subr.bf16.mxu0 0
  %122 = vmatpush2.bf16.msra.mxu0 0
  %123 = vmatprep.subr.bf16.mxu0 0
  %124 = vmatpush2.bf16.msra.mxu0 0
  %125 = vmatprep.subr.bf16.mxu0 0
  %126 = vmatpush2.bf16.msra.mxu0 0
  %127 = vmatprep.subr.bf16.mxu0 0
  %128 = vmatpush2.bf16.msra.mxu0 0
  %129 = vmatprep.subr.bf16.mxu0 0
  %130 = vmatpush2.bf16.msra.mxu0 0
  %131 = vmatprep.subr.bf16.mxu0 0
  %132 = vmatpush2.bf16.msra.mxu0 0
  %133 = vmatprep.subr.bf16.mxu0 0
  %134 = vmatpush2.bf16.msra.mxu0 0
  %135 = vmatprep.subr.bf16.mxu0 0
  %136 = vmatpush2.bf16.msra.mxu0 0
  %137 = vmatprep.mubr.bf16.mxu0 0
  %138 = vmatmul.mubr.bf16.gmra.mxu0 %v53
  %v139 = vpop.f32.mrf.mxu0
  %v140 = vadd.f32 %v43, %v139
  %v141 = vpop.f32.mrf.mxu0
  %v142 = vpop.f32.mrf.mxu0
  %v143 = vadd.f32 %v43, %v142
  %v144 = vpop.f32.mrf.mxu0
  %145 = vmatprep.mubr.bf16.mxu0 0
  %146 = vmatmul.mubr.bf16.gmra.mxu0 %v54
  %v147 = vpop.f32.mrf.mxu0
  %v148 = vadd.f32 %v43, %v147
  %v149 = vpop.f32.mrf.mxu0
  %v150 = vpop.f32.mrf.mxu0
  %v151 = vadd.f32 %v43, %v150
  %v152 = vpop.f32.mrf.mxu0
  %153 = vdwg.mxu0
  %v154 = vld [vmem:[%s3] sm:$0x1]
  %vm155 = vcmp.ne.f32.partialorder %v154, 0.0
  %v156 = vmax.f32 %v140, 0.0
  %v157 = vmax.f32 %v143, 0.0
  %v158 = vmax.f32 %v148, 0.0
  %v159 = vmax.f32 %v151, 0.0
  %v160 = vsel %vm155, 1, 0
  %v161 = vlaneseq
  %v162 = vshrl.u32 %v161, 7
  %v163 = vsub.s32 0, %v162
  %v164 = vrot.slane %v160, %v163
  %vm165 = vcmp.eq.s32.totalorder %v164, 1
  %v166 = vsel %vm165, %v156, %v140
  %v167 = vsel %vm165, %v157, %v143
  %v168 = vsel %vm165, %v158, %v148
  %v169 = vsel %vm165, %v159, %v151
  %v170 = vpack.c.bf16 %v167, %v166
  %v171 = vpack.c.bf16 %v169, %v168
  %v174 = vunpack.c.l.b16 %v170
  %v175 = vunpack.c.h.b16 %v170
  %v176 = vunpack.c.l.b16 %v171
  %v177 = vunpack.c.h.b16 %v171
  %v178 = vpack.c.b16 %v174, %v174
  %v179 = vpack.c.b16 %v175, %v175
  %v180 = vpack.c.b16 %v176, %v176
  %v181 = vpack.c.b16 %v177, %v177
  %186 = vst [vmem:[%s4] sm:$0xf] %v178
  %187 = vst [vmem:[%s4 + $0x4] sm:$0xf] %v179
  %188 = vst [vmem:[%s4 + $0x8] sm:$0xf] %v180
  %189 = vst [vmem:[%s4 + $0xc] sm:$0xf] %v181
  // Predicated region
  $region18: #{branch_forward.12} parent=0 // pred_check
    _
  $region19: #{branch_forward.12} parent=0 // pred_check_branch
    %191 = sbr.rel (0) target = $region21
  $region20: #{branch_forward.12} parent=0 // pred_region
    _
  $region21: #{branch_forward.12} parent=0 // pred_fallthru
    _
  // Predicated region
  $region22: #{branch_forward.12} parent=0 // pred_check
    _
  $region23: #{branch_forward.12} parent=0 // pred_check_branch
    %193 = sbr.rel (0) target = $region25
  $region24: #{branch_forward.12} parent=0 // pred_region
    _
  $region25: #{branch_forward.12} parent=0 // pred_fallthru
    _

// kernel: branch_forward.13
$region0: #{branch_forward.13}
  #allocation0 [shape = 'u32[]', space=smem, size = 0x4, offset = 0x4, fixed_abs, tag = 'smem constant byte address 0x4 - core index']
  #allocation1 [shape = 'u32[144,128]{1,0:T(1,128)}', space=vmem, size = 0x12000, scoped, tag = 'internal scratch']
  %s0 = inlined_call_operand.vmem [shape: bf16[128,128], index: 0, kind: input, shape index: {}]
  %s1 = inlined_call_operand.vmem [shape: bf16[128,128], index: 1, kind: input, shape index: {}]
  %s2 = inlined_call_operand.vmem [shape: f32[1,128], index: 2, kind: input, shape index: {}]
  %s3 = inlined_call_operand.vmem [shape: f32[1,128], index: 3, kind: input, shape index: {}]
  %s4 = inlined_call_operand.vmem [shape: bf16[128,128], index: 4, kind: output, shape index: {}]
  %s5 = sld [smem:[#allocation0]]
  $region26: #{branch_forward.13} parent=0
    _
  %s7 = ssub.s32 1, %s5
  %s8 = scalar_select 0, %s7, %s5
  // Predicated region
  $region2: #{branch_forward.13} parent=0 // pred_check
    _
  $region3: #{branch_forward.13} parent=0 // pred_check_branch
    %10 = sbr.rel (0) target = $region5
  $region4: #{branch_forward.13} parent=0 // pred_region
    _
  $region5: #{branch_forward.13} parent=0 // pred_fallthru
    _
  // Predicated region
  $region6: #{branch_forward.13} parent=0 // pred_check
    _
  $region7: #{branch_forward.13} parent=0 // pred_check_branch
    %12 = sbr.rel (0) target = $region9
  $region8: #{branch_forward.13} parent=0 // pred_region
    _
  $region9: #{branch_forward.13} parent=0 // pred_fallthru
    _
  // Predicated region
  $region10: #{branch_forward.13} parent=0 // pred_check
    _
  $region11: #{branch_forward.13} parent=0 // pred_check_branch
    %14 = sbr.rel (0) target = $region13
  $region12: #{branch_forward.13} parent=0 // pred_region
    _
  $region13: #{branch_forward.13} parent=0 // pred_fallthru
    _
  // Predicated region
  $region14: #{branch_forward.13} parent=0 // pred_check
    _
  $region15: #{branch_forward.13} parent=0 // pred_check_branch
    %16 = sbr.rel (0) target = $region17
  $region16: #{branch_forward.13} parent=0 // pred_region
    _
  $region17: #{branch_forward.13} parent=0 // pred_fallthru
    _
  %v18 = vld [vmem:[%s0] sm:$0xf]
  %v19 = vld [vmem:[%s0 + $0x4] sm:$0xf]
  %v20 = vld [vmem:[%s0 + $0x8] sm:$0xf]
  %v21 = vld [vmem:[%s0 + $0xc] sm:$0xf]
  %v22 = vld [vmem:[%s0 + $0x10] sm:$0xf]
  %v23 = vld [vmem:[%s0 + $0x14] sm:$0xf]
  %v24 = vld [vmem:[%s0 + $0x18] sm:$0xf]
  %v25 = vld [vmem:[%s0 + $0x1c] sm:$0xf]
  %v26 = vld [vmem:[%s0 + $0x20] sm:$0xf]
  %v27 = vld [vmem:[%s0 + $0x24] sm:$0xf]
  %v28 = vld [vmem:[%s0 + $0x28] sm:$0xf]
  %v29 = vld [vmem:[%s0 + $0x2c] sm:$0xf]
  %v30 = vld [vmem:[%s0 + $0x30] sm:$0xf]
  %v31 = vld [vmem:[%s0 + $0x34] sm:$0xf]
  %v32 = vld [vmem:[%s0 + $0x38] sm:$0xf]
  %v33 = vld [vmem:[%s0 + $0x3c] sm:$0xf]
  %v34 = vld [vmem:[%s1] sm:$0xf]
  %v35 = vld [vmem:[%s1 + $0x4] sm:$0xf]
  %v36 = vld [vmem:[%s1 + $0x8] sm:$0xf]
  %v37 = vld [vmem:[%s1 + $0xc] sm:$0xf]
  %v38 = vld [vmem:[%s1 + $0x10] sm:$0xf]
  %v39 = vld [vmem:[%s1 + $0x14] sm:$0xf]
  %v40 = vld [vmem:[%s1 + $0x18] sm:$0xf]
  %v41 = vld [vmem:[%s1 + $0x1c] sm:$0xf]
  %v42 = vld [vmem:[%s1 + $0x20] sm:$0xf]
  %v43 = vld [vmem:[%s1 + $0x24] sm:$0xf]
  %v44 = vld [vmem:[%s1 + $0x28] sm:$0xf]
  %v45 = vld [vmem:[%s1 + $0x2c] sm:$0xf]
  %v46 = vld [vmem:[%s1 + $0x30] sm:$0xf]
  %v47 = vld [vmem:[%s1 + $0x34] sm:$0xf]
  %v48 = vld [vmem:[%s1 + $0x38] sm:$0xf]
  %v49 = vld [vmem:[%s1 + $0x3c] sm:$0xf]
  %v50 = vld [vmem:[%s2] sm:$0x1]
  %v52 = vlaneseq
  %v53 = vshrl.u32 %v52, 7
  %v54 = vsub.s32 0, %v53
  %v55 = vrot.slane %v50, %v54
  %v73 = vunpack.c.l.b16 %v18
  %v74 = vunpack.c.l.b16 %v19
  %v75 = vunpack.c.l.b16 %v20
  %v76 = vunpack.c.l.b16 %v21
  %v77 = vunpack.c.l.b16 %v22
  %v78 = vunpack.c.l.b16 %v23
  %v79 = vunpack.c.l.b16 %v24
  %v80 = vunpack.c.l.b16 %v25
  %v81 = vunpack.c.l.b16 %v26
  %v82 = vunpack.c.l.b16 %v27
  %v83 = vunpack.c.l.b16 %v28
  %v84 = vunpack.c.l.b16 %v29
  %v85 = vunpack.c.l.b16 %v30
  %v86 = vunpack.c.l.b16 %v31
  %v87 = vunpack.c.l.b16 %v32
  %v88 = vunpack.c.l.b16 %v33
  %v89 = vpack.c.b16 %v74, %v73
  %v90 = vpack.c.b16 %v76, %v75
  %v91 = vpack.c.b16 %v78, %v77
  %v92 = vpack.c.b16 %v80, %v79
  %v93 = vpack.c.b16 %v82, %v81
  %v94 = vpack.c.b16 %v84, %v83
  %v95 = vpack.c.b16 %v86, %v85
  %v96 = vpack.c.b16 %v88, %v87
  %v121 = vunpack.c.l.b16 %v34
  %v122 = vunpack.c.l.b16 %v35
  %v123 = vunpack.c.l.b16 %v36
  %v124 = vunpack.c.l.b16 %v37
  %v125 = vunpack.c.l.b16 %v38
  %v126 = vunpack.c.l.b16 %v39
  %v127 = vunpack.c.l.b16 %v40
  %v128 = vunpack.c.l.b16 %v41
  %v129 = vunpack.c.l.b16 %v42
  %v130 = vunpack.c.l.b16 %v43
  %v131 = vunpack.c.l.b16 %v44
  %v132 = vunpack.c.l.b16 %v45
  %v133 = vunpack.c.l.b16 %v46
  %v134 = vunpack.c.l.b16 %v47
  %v135 = vunpack.c.l.b16 %v48
  %v136 = vunpack.c.l.b16 %v49
  %v137 = vpack.c.b16 %v122, %v121
  %v138 = vpack.c.b16 %v124, %v123
  %v139 = vpack.c.b16 %v126, %v125
  %v140 = vpack.c.b16 %v128, %v127
  %v141 = vpack.c.b16 %v130, %v129
  %v142 = vpack.c.b16 %v132, %v131
  %v143 = vpack.c.b16 %v134, %v133
  %v144 = vpack.c.b16 %v136, %v135
  %153 = vmatprep.subr.bf16.mxu0 0
  %154 = vmatpush1.bf16.msra.mxu0 %v144
  %155 = vmatprep.subr.bf16.mxu0 0
  %156 = vmatpush1.bf16.msra.mxu0 %v143
  %157 = vmatprep.subr.bf16.mxu0 0
  %158 = vmatpush1.bf16.msra.mxu0 %v142
  %159 = vmatprep.subr.bf16.mxu0 0
  %160 = vmatpush1.bf16.msra.mxu0 %v141
  %161 = vmatprep.subr.bf16.mxu0 0
  %162 = vmatpush1.bf16.msra.mxu0 %v140
  %163 = vmatprep.subr.bf16.mxu0 0
  %164 = vmatpush1.bf16.msra.mxu0 %v139
  %165 = vmatprep.subr.bf16.mxu0 0
  %166 = vmatpush1.bf16.msra.mxu0 %v138
  %167 = vmatprep.subr.bf16.mxu0 0
  %168 = vmatpush1.bf16.msra.mxu0 %v137
  %169 = vmatprep.subr.bf16.mxu0 0
  %170 = vmatpush2.bf16.msra.mxu0 0
  %171 = vmatprep.subr.bf16.mxu0 0
  %172 = vmatpush2.bf16.msra.mxu0 0
  %173 = vmatprep.subr.bf16.mxu0 0
  %174 = vmatpush2.bf16.msra.mxu0 0
  %175 = vmatprep.subr.bf16.mxu0 0
  %176 = vmatpush2.bf16.msra.mxu0 0
  %177 = vmatprep.subr.bf16.mxu0 0
  %178 = vmatpush2.bf16.msra.mxu0 0
  %179 = vmatprep.subr.bf16.mxu0 0
  %180 = vmatpush2.bf16.msra.mxu0 0
  %181 = vmatprep.subr.bf16.mxu0 0
  %182 = vmatpush2.bf16.msra.mxu0 0
  %183 = vmatprep.subr.bf16.mxu0 0
  %184 = vmatpush2.bf16.msra.mxu0 0
  %185 = vmatprep.mubr.bf16.mxu0 0
  %186 = vmatmul.mubr.bf16.gmra.mxu0 %v89
  %v187 = vpop.f32.mrf.mxu0
  %v188 = vadd.f32 %v55, %v187
  %v189 = vpop.f32.mrf.mxu0
  %v190 = vpop.f32.mrf.mxu0
  %v191 = vadd.f32 %v55, %v190
  %v192 = vpop.f32.mrf.mxu0
  %193 = vmatprep.mubr.bf16.mxu0 0
  %194 = vmatmul.mubr.bf16.gmra.mxu0 %v90
  %v195 = vpop.f32.mrf.mxu0
  %v196 = vadd.f32 %v55, %v195
  %v197 = vpop.f32.mrf.mxu0
  %v198 = vpop.f32.mrf.mxu0
  %v199 = vadd.f32 %v55, %v198
  %v200 = vpop.f32.mrf.mxu0
  %201 = vmatprep.mubr.bf16.mxu0 0
  %202 = vmatmul.mubr.bf16.gmra.mxu0 %v91
  %v203 = vpop.f32.mrf.mxu0
  %v204 = vadd.f32 %v55, %v203
  %v205 = vpop.f32.mrf.mxu0
  %v206 = vpop.f32.mrf.mxu0
  %v207 = vadd.f32 %v55, %v206
  %v208 = vpop.f32.mrf.mxu0
  %209 = vmatprep.mubr.bf16.mxu0 0
  %210 = vmatmul.mubr.bf16.gmra.mxu0 %v92
  %v211 = vpop.f32.mrf.mxu0
  %v212 = vadd.f32 %v55, %v211
  %v213 = vpop.f32.mrf.mxu0
  %v214 = vpop.f32.mrf.mxu0
  %v215 = vadd.f32 %v55, %v214
  %v216 = vpop.f32.mrf.mxu0
  %217 = vmatprep.mubr.bf16.mxu0 0
  %218 = vmatmul.mubr.bf16.gmra.mxu0 %v93
  %v219 = vpop.f32.mrf.mxu0
  %v220 = vadd.f32 %v55, %v219
  %v221 = vpop.f32.mrf.mxu0
  %v222 = vpop.f32.mrf.mxu0
  %v223 = vadd.f32 %v55, %v222
  %v224 = vpop.f32.mrf.mxu0
  %225 = vmatprep.mubr.bf16.mxu0 0
  %226 = vmatmul.mubr.bf16.gmra.mxu0 %v94
  %v227 = vpop.f32.mrf.mxu0
  %v228 = vadd.f32 %v55, %v227
  %v229 = vpop.f32.mrf.mxu0
  %v230 = vpop.f32.mrf.mxu0
  %v231 = vadd.f32 %v55, %v230
  %v232 = vpop.f32.mrf.mxu0
  %233 = vmatprep.mubr.bf16.mxu0 0
  %234 = vmatmul.mubr.bf16.gmra.mxu0 %v95
  %v235 = vpop.f32.mrf.mxu0
  %v236 = vadd.f32 %v55, %v235
  %v237 = vpop.f32.mrf.mxu0
  %v238 = vpop.f32.mrf.mxu0
  %v239 = vadd.f32 %v55, %v238
  %v240 = vpop.f32.mrf.mxu0
  %241 = vmatprep.mubr.bf16.mxu0 0
  %242 = vmatmul.mubr.bf16.gmra.mxu0 %v96
  %v243 = vpop.f32.mrf.mxu0
  %v244 = vadd.f32 %v55, %v243
  %v245 = vpop.f32.mrf.mxu0
  %v246 = vpop.f32.mrf.mxu0
  %v247 = vadd.f32 %v55, %v246
  %v248 = vpop.f32.mrf.mxu0
  %249 = vdwg.mxu0
  %v250 = vld [vmem:[%s3] sm:$0x1]
  %vm251 = vcmp.ne.f32.partialorder %v250, 0.0
  %v252 = vmax.f32 %v188, 0.0
  %v253 = vmax.f32 %v191, 0.0
  %v254 = vmax.f32 %v196, 0.0
  %v255 = vmax.f32 %v199, 0.0
  %v256 = vmax.f32 %v204, 0.0
  %v257 = vmax.f32 %v207, 0.0
  %v258 = vmax.f32 %v212, 0.0
  %v259 = vmax.f32 %v215, 0.0
  %v260 = vmax.f32 %v220, 0.0
  %v261 = vmax.f32 %v223, 0.0
  %v262 = vmax.f32 %v228, 0.0
  %v263 = vmax.f32 %v231, 0.0
  %v264 = vmax.f32 %v236, 0.0
  %v265 = vmax.f32 %v239, 0.0
  %v266 = vmax.f32 %v244, 0.0
  %v267 = vmax.f32 %v247, 0.0
  %v268 = vsel %vm251, 1, 0
  %v269 = vlaneseq
  %v270 = vshrl.u32 %v269, 7
  %v271 = vsub.s32 0, %v270
  %v272 = vrot.slane %v268, %v271
  %vm273 = vcmp.eq.s32.totalorder %v272, 1
  %v274 = vsel %vm273, %v252, %v188
  %v275 = vsel %vm273, %v253, %v191
  %v276 = vsel %vm273, %v254, %v196
  %v277 = vsel %vm273, %v255, %v199
  %v278 = vsel %vm273, %v256, %v204
  %v279 = vsel %vm273, %v257, %v207
  %v280 = vsel %vm273, %v258, %v212
  %v281 = vsel %vm273, %v259, %v215
  %v282 = vsel %vm273, %v260, %v220
  %v283 = vsel %vm273, %v261, %v223
  %v284 = vsel %vm273, %v262, %v228
  %v285 = vsel %vm273, %v263, %v231
  %v286 = vsel %vm273, %v264, %v236
  %v287 = vsel %vm273, %v265, %v239
  %v288 = vsel %vm273, %v266, %v244
  %v289 = vsel %vm273, %v267, %v247
  %v290 = vpack.c.bf16 %v275, %v274
  %v291 = vpack.c.bf16 %v277, %v276
  %v292 = vpack.c.bf16 %v279, %v278
  %v293 = vpack.c.bf16 %v281, %v280
  %v294 = vpack.c.bf16 %v283, %v282
  %v295 = vpack.c.bf16 %v285, %v284
  %v296 = vpack.c.bf16 %v287, %v286
  %v297 = vpack.c.bf16 %v289, %v288
  %v306 = vunpack.c.l.b16 %v290
  %v307 = vunpack.c.h.b16 %v290
  %v308 = vunpack.c.l.b16 %v291
  %v309 = vunpack.c.h.b16 %v291
  %v310 = vunpack.c.l.b16 %v292
  %v311 = vunpack.c.h.b16 %v292
  %v312 = vunpack.c.l.b16 %v293
  %v313 = vunpack.c.h.b16 %v293
  %v314 = vunpack.c.l.b16 %v294
  %v315 = vunpack.c.h.b16 %v294
  %v316 = vunpack.c.l.b16 %v295
  %v317 = vunpack.c.h.b16 %v295
  %v318 = vunpack.c.l.b16 %v296
  %v319 = vunpack.c.h.b16 %v296
  %v320 = vunpack.c.l.b16 %v297
  %v321 = vunpack.c.h.b16 %v297
  %v322 = vpack.c.b16 %v306, %v306
  %v323 = vpack.c.b16 %v307, %v307
  %v324 = vpack.c.b16 %v308, %v308
  %v325 = vpack.c.b16 %v309, %v309
  %v326 = vpack.c.b16 %v310, %v310
  %v327 = vpack.c.b16 %v311, %v311
  %v328 = vpack.c.b16 %v312, %v312
  %v329 = vpack.c.b16 %v313, %v313
  %v330 = vpack.c.b16 %v314, %v314
  %v331 = vpack.c.b16 %v315, %v315
  %v332 = vpack.c.b16 %v316, %v316
  %v333 = vpack.c.b16 %v317, %v317
  %v334 = vpack.c.b16 %v318, %v318
  %v335 = vpack.c.b16 %v319, %v319
  %v336 = vpack.c.b16 %v320, %v320
  %v337 = vpack.c.b16 %v321, %v321
  %354 = vst [vmem:[%s4] sm:$0xf] %v322
  %355 = vst [vmem:[%s4 + $0x4] sm:$0xf] %v323
  %356 = vst [vmem:[%s4 + $0x8] sm:$0xf] %v324
  %357 = vst [vmem:[%s4 + $0xc] sm:$0xf] %v325
  %358 = vst [vmem:[%s4 + $0x10] sm:$0xf] %v326
  %359 = vst [vmem:[%s4 + $0x14] sm:$0xf] %v327
  %360 = vst [vmem:[%s4 + $0x18] sm:$0xf] %v328
  %361 = vst [vmem:[%s4 + $0x1c] sm:$0xf] %v329
  %362 = vst [vmem:[%s4 + $0x20] sm:$0xf] %v330
  %363 = vst [vmem:[%s4 + $0x24] sm:$0xf] %v331
  %364 = vst [vmem:[%s4 + $0x28] sm:$0xf] %v332
  %365 = vst [vmem:[%s4 + $0x2c] sm:$0xf] %v333
  %366 = vst [vmem:[%s4 + $0x30] sm:$0xf] %v334
  %367 = vst [vmem:[%s4 + $0x34] sm:$0xf] %v335
  %368 = vst [vmem:[%s4 + $0x38] sm:$0xf] %v336
  %369 = vst [vmem:[%s4 + $0x3c] sm:$0xf] %v337
  // Predicated region
  $region18: #{branch_forward.13} parent=0 // pred_check
    _
  $region19: #{branch_forward.13} parent=0 // pred_check_branch
    %371 = sbr.rel (0) target = $region21
  $region20: #{branch_forward.13} parent=0 // pred_region
    _
  $region21: #{branch_forward.13} parent=0 // pred_fallthru
    _
  // Predicated region
  $region22: #{branch_forward.13} parent=0 // pred_check
    _
  $region23: #{branch_forward.13} parent=0 // pred_check_branch
    %373 = sbr.rel (0) target = $region25
  $region24: #{branch_forward.13} parent=0 // pred_region
    _
  $region25: #{branch_forward.13} parent=0 // pred_fallthru
    _

// kernel: branch_forward.10
$region0: #{branch_forward.10}
  #allocation0 [shape = 'u32[]', space=smem, size = 0x4, offset = 0x4, fixed_abs, tag = 'smem constant byte address 0x4 - core index']
  #allocation1 [shape = 'u32[144,128]{1,0:T(1,128)}', space=vmem, size = 0x12000, scoped, tag = 'internal scratch']
  %s0 = inlined_call_operand.vmem [shape: bf16[2,18,9,256], index: 0, kind: input, shape index: {}]
  %s1 = inlined_call_operand.vmem [shape: bf16[9,128,128], index: 1, kind: input, shape index: {}]
  %s2 = inlined_call_operand.vmem [shape: f32[1,128], index: 2, kind: input, shape index: {}]
  %s3 = inlined_call_operand.vmem [shape: bf16[2,8,8,128], index: 3, kind: output, shape index: {}]
  %s4 = sld [smem:[#allocation0]]
  $region45: #{branch_forward.10} parent=0
    _
  %s6 = ssub.s32 1, %s4
  %s7 = scalar_select 0, %s6, %s4
  loop: start=0, step=1, limit=18
  $region2: #{branch_forward.10} parent=0 // loop_pre_header
    _
  $region3: #{branch_forward.10} parent=0 // loop_header
    %s9 = sphi 0, %s13
    %p10 = scmp.ge.s32.totalorder %s9, 18
    %s16 = sphi 0, %s28
    %s17 = sphi 0, %s24
    %s18 = sphi 0, %s16
    %s19 = sphi 0, %s17
    %s20 = sphi 0, %s18
    %s21 = sphi 0, %s19
    %s31 = sphi 0, %s33
    %s34 = sphi 0, %s31
    %s35 = sphi 0, %s34
    %s51 = sphi 0, %s35
    %s55 = sphi 0, %s55
    %s57 = sphi 0, %s55
    %s58 = sphi 0, %s57
    %s72 = sphi 0, %s58
    %s76 = sphi 0, %s76
    %s78 = sphi 0, %s76
    %s79 = sphi 0, %s78
    %s93 = sphi 0, %s79
    %s101 = sphi 0, %s103
    %s104 = sphi 0, %s101
    %s105 = sphi 0, %s104
    %s121 = sphi 0, %s105
  $region4: #{branch_forward.10} parent=0 // loop_header_branch
    %12 = sbr.rel (%p10) target = $region8
  $region5: #{branch_forward.10} parent=0 // loop_body
    %s14 = ssub.s32 %s9, 1
    %s15 = ssub.s32 %s9, 2
    %s22 = sadd.s32 1, %s17
    %p23 = scmp.ge.s32.totalorder %s22, 8
    %s24 = scalar_select %p23, 0, %s22
    %s25 = sadd.s32 1, %s16
    %s26 = scalar_select %p23, %s25, %s16
    %p27 = scmp.ge.s32.totalorder %s26, 2
    %s28 = scalar_select %p27, 0, %s26
    %s29 = ssub.s32 %s16, %s28
    %p30 = scmp.eq.s32.totalorder %s29, 0
    %s32 = sadd.s32 %s31, 1
    %s33 = scalar_select %p30, %s31, %s32
    %p36 = pneg %p30
    %p37 = scmp.eq.s32.totalorder %s9, 15
    %p38 = por %p36, %p37
    %p39 = scmp.ne.s32.totalorder %s31, %s34
    %p40 = scmp.eq.s32.totalorder %s9, 0
    %p41 = por %p39, %p40
    %p42 = scmp.ne.s32.totalorder %s31, %s34
    %p43 = scmp.eq.s32.totalorder %s14, 15
    %p44 = por %p42, %p43
    %p45 = scmp.ne.s32.totalorder %s34, %s35
    %p46 = scmp.eq.s32.totalorder %s14, 0
    %p47 = por %p45, %p46
    %p48 = scmp.ne.s32.totalorder %s34, %s35
    %p49 = scmp.eq.s32.totalorder %s15, 15
    %p50 = por %p48, %p49
    %p52 = scmp.ne.s32.totalorder %s35, %s51
    %p53 = scmp.eq.s32.totalorder %s15, 0
    %p54 = por %p52, %p53
    %s56 = sadd.s32 %s55, 1
    %p59 = scmp.eq.s32.totalorder %s9, 15
    %p60 = scmp.ne.s32.totalorder %s55, %s57
    %p61 = scmp.eq.s32.totalorder %s9, 0
    %p62 = por %p60, %p61
    %p63 = scmp.ne.s32.totalorder %s55, %s57
    %p64 = scmp.eq.s32.totalorder %s14, 15
    %p65 = por %p63, %p64
    %p66 = scmp.ne.s32.totalorder %s57, %s58
    %p67 = scmp.eq.s32.totalorder %s14, 0
    %p68 = por %p66, %p67
    %p69 = scmp.ne.s32.totalorder %s57, %s58
    %p70 = scmp.eq.s32.totalorder %s15, 15
    %p71 = por %p69, %p70
    %p73 = scmp.ne.s32.totalorder %s58, %s72
    %p74 = scmp.eq.s32.totalorder %s15, 0
    %p75 = por %p73, %p74
    %s77 = sadd.s32 %s76, 1
    %p80 = scmp.eq.s32.totalorder %s9, 15
    %p81 = scmp.ne.s32.totalorder %s76, %s78
    %p82 = scmp.eq.s32.totalorder %s9, 0
    %p83 = por %p81, %p82
    %p84 = scmp.ne.s32.totalorder %s76, %s78
    %p85 = scmp.eq.s32.totalorder %s14, 15
    %p86 = por %p84, %p85
    %p87 = scmp.ne.s32.totalorder %s78, %s79
    %p88 = scmp.eq.s32.totalorder %s14, 0
    %p89 = por %p87, %p88
    %p90 = scmp.ne.s32.totalorder %s78, %s79
    %p91 = scmp.eq.s32.totalorder %s15, 15
    %p92 = por %p90, %p91
    %p94 = scmp.ne.s32.totalorder %s79, %s93
    %p95 = scmp.eq.s32.totalorder %s15, 0
    %p96 = por %p94, %p95
    %s97 = ssub.s32 %s16, %s28
    %s98 = ssub.s32 %s17, %s24
    %s99 = sor.u32 %s97, %s98
    %p100 = scmp.eq.s32.totalorder %s99, 0
    %s102 = sadd.s32 %s101, 1
    %s103 = scalar_select %p100, %s101, %s102
    %p106 = pneg %p100
    %p107 = scmp.eq.s32.totalorder %s9, 15
    %p108 = por %p106, %p107
    %p109 = scmp.ne.s32.totalorder %s101, %s104
    %p110 = scmp.eq.s32.totalorder %s9, 0
    %p111 = por %p109, %p110
    %p112 = scmp.ne.s32.totalorder %s101, %s104
    %p113 = scmp.eq.s32.totalorder %s14, 15
    %p114 = por %p112, %p113
    %p115 = scmp.ne.s32.totalorder %s104, %s105
    %p116 = scmp.eq.s32.totalorder %s14, 0
    %p117 = por %p115, %p116
    %p118 = scmp.ne.s32.totalorder %s104, %s105
    %p119 = scmp.eq.s32.totalorder %s15, 15
    %p120 = por %p118, %p119
    %p122 = scmp.ne.s32.totalorder %s105, %s121
    %p123 = scmp.eq.s32.totalorder %s15, 0
    %p124 = por %p122, %p123
    %p125 = scmp.le.s32.totalorder 1, %s9
    %p126 = scmp.lt.s32.totalorder %s9, 17
    %p127 = pnand %p125, %p126
    %p128 = pneg %p127
    // Predicated region
    $region9: #{branch_forward.10} parent=5 // pred_check
      _
    $region10: #{branch_forward.10} parent=5 // pred_check_branch
      %130 = sbr.rel (%p127) target = $region12
    $region11: #{branch_forward.10} parent=5 // pred_region
      %s131 = ssub.s32 %s9, 1
      // Predicated region
      $region13: #{branch_forward.10} parent=11 // pred_check
        %p132 = pneg %p68
      $region14: #{branch_forward.10} parent=11 // pred_check_branch
        %134 = sbr.rel (%p132) target = $region16
      $region15: #{branch_forward.10} parent=11 // pred_region
        _
      $region16: #{branch_forward.10} parent=11 // pred_fallthru
        _
      // Predicated region
      $region17: #{branch_forward.10} parent=11 // pred_check
        %p135 = pneg %p89
      $region18: #{branch_forward.10} parent=11 // pred_check_branch
        %137 = sbr.rel (%p135) target = $region20
      $region19: #{branch_forward.10} parent=11 // pred_region
        _
      $region20: #{branch_forward.10} parent=11 // pred_fallthru
        _
    $region12: #{branch_forward.10} parent=5 // pred_fallthru
      _
    %p138 = scmp.lt.s32.totalorder %s9, 16
    // Predicated region
    $region21: #{branch_forward.10} parent=5 // pred_check
      %p139 = pneg %p138
    $region22: #{branch_forward.10} parent=5 // pred_check_branch
      %141 = sbr.rel (%p139) target = $region24
    $region23: #{branch_forward.10} parent=5 // pred_region
      // Predicated region
      $region25: #{branch_forward.10} parent=23 // pred_check
        %p142 = pneg %p41
      $region26: #{branch_forward.10} parent=23 // pred_check_branch
        %144 = sbr.rel (%p142) target = $region28
      $region27: #{branch_forward.10} parent=23 // pred_region
        %p145 = scmp.lt.s32.totalorder %s16, 1
        %s146 = scalar_select %p145, %s16, 1
        %s147 = smul.addr %s146, 72
        %s148 = smul.addr %s147, 4
        %s149 = scalar_lea.vmem %s0, %s148
      $region28: #{branch_forward.10} parent=23 // pred_fallthru
        _
    $region24: #{branch_forward.10} parent=5 // pred_fallthru
      _
    %p150 = scmp.le.s32.totalorder 1, %s9
    %p151 = scmp.lt.s32.totalorder %s9, 17
    %p152 = pnand %p150, %p151
    %p153 = pneg %p152
    // Predicated region
    $region29: #{branch_forward.10} parent=5 // pred_check
      _
    $region30: #{branch_forward.10} parent=5 // pred_check_branch
      %155 = sbr.rel (%p152) target = $region32
    $region31: #{branch_forward.10} parent=5 // pred_region
      %s156 = ssub.s32 %s9, 1
      %p157 = scmp.lt.s32.totalorder %s18, 1
      %s158 = scalar_select %p157, %s18, 1
      %s159 = smul.addr %s158, 72
      %s160 = smul.addr %s159, 4
      %s161 = scalar_lea.vmem %s0, %s160
      %p162 = pneg %p47
      %p163 = pneg %p44
      %p164 = pneg %p68
      %p165 = pneg %p65
      %p166 = pneg %p89
      %p167 = pneg %p86
      %p168 = pneg %p117
      %p169 = pneg %p114
      %p170 = scmp.lt.s32.totalorder %s18, 1
      %s171 = scalar_select %p170, %s18, 1
      %p172 = scmp.lt.s32.totalorder %s19, 7
      %s173 = scalar_select %p172, %s19, 7
      %s174 = smul.addr %s171, 8
      %s175 = sadd.s32 %s173, %s174
      %s176 = smul.addr %s175, 4
      %s177 = scalar_lea.vmem %s3, %s176
      %p178 = scmp.lt.s32.totalorder %s18, 1
      %s179 = scalar_select %p178, %s18, 1
      %s180 = smul.addr %s179, 72
      %s181 = smul.addr %s180, 4
      %s182 = scalar_lea.vmem %s0, %s181
      %p183 = scmp.lt.s32.totalorder %s18, 1
      %s184 = scalar_select %p183, %s18, 1
      %p185 = scmp.lt.s32.totalorder %s19, 7
      %s186 = scalar_select %p185, %s19, 7
      %s187 = smul.addr %s184, 8
      %s188 = sadd.s32 %s186, %s187
      %s189 = smul.addr %s188, 4
      %s190 = scalar_lea.vmem %s3, %s189
      %s192 = smul.u32 %s19, 2
      %s193 = smul.u32 %s192, 4
      %s194 = smul.addr %s193, 4
      %s195 = scalar_lea.vmem %s182, %s194
      %v196 = vld [vmem:[%s195] sm:$0xff]
      %v197 = vld [vmem:[%s195 + $0x8] sm:$0x11]
      %v198 = vld [vmem:[%s1] sm:$0xf]
      %v199 = vld [vmem:[%s1 + $0x4] sm:$0xf]
      %v200 = vld [vmem:[%s1 + $0x8] sm:$0xf]
      %v201 = vld [vmem:[%s1 + $0xc] sm:$0xf]
      %v202 = vld [vmem:[%s1 + $0x10] sm:$0xf]
      %v203 = vld [vmem:[%s1 + $0x14] sm:$0xf]
      %v204 = vld [vmem:[%s1 + $0x18] sm:$0xf]
      %v205 = vld [vmem:[%s1 + $0x1c] sm:$0xf]
      %v206 = vld [vmem:[%s1 + $0x20] sm:$0xf]
      %v207 = vld [vmem:[%s1 + $0x24] sm:$0xf]
      %v208 = vld [vmem:[%s1 + $0x28] sm:$0xf]
      %v209 = vld [vmem:[%s1 + $0x2c] sm:$0xf]
      %v210 = vld [vmem:[%s1 + $0x30] sm:$0xf]
      %v211 = vld [vmem:[%s1 + $0x34] sm:$0xf]
      %v212 = vld [vmem:[%s1 + $0x38] sm:$0xf]
      %v213 = vld [vmem:[%s1 + $0x3c] sm:$0xf]
      %s214 = scalar_lea.vmem %s1, 64
      %v215 = vld [vmem:[%s214] sm:$0xf]
      %v216 = vld [vmem:[%s214 + $0x4] sm:$0xf]
      %v217 = vld [vmem:[%s214 + $0x8] sm:$0xf]
      %v218 = vld [vmem:[%s214 + $0xc] sm:$0xf]
      %v219 = vld [vmem:[%s214 + $0x10] sm:$0xf]
      %v220 = vld [vmem:[%s214 + $0x14] sm:$0xf]
      %v221 = vld [vmem:[%s214 + $0x18] sm:$0xf]
      %v222 = vld [vmem:[%s214 + $0x1c] sm:$0xf]
      %v223 = vld [vmem:[%s214 + $0x20] sm:$0xf]
      %v224 = vld [vmem:[%s214 + $0x24] sm:$0xf]
      %v225 = vld [vmem:[%s214 + $0x28] sm:$0xf]
      %v226 = vld [vmem:[%s214 + $0x2c] sm:$0xf]
      %v227 = vld [vmem:[%s214 + $0x30] sm:$0xf]
      %v228 = vld [vmem:[%s214 + $0x34] sm:$0xf]
      %v229 = vld [vmem:[%s214 + $0x38] sm:$0xf]
      %v230 = vld [vmem:[%s214 + $0x3c] sm:$0xf]
      %v232 = vunpack.c.h.b16 %v196
      %v233 = vpack.c.b16 %v232, %v232
      %v251 = vunpack.c.l.b16 %v215
      %v252 = vunpack.c.l.b16 %v216
      %v253 = vunpack.c.l.b16 %v217
      %v254 = vunpack.c.l.b16 %v218
      %v255 = vunpack.c.l.b16 %v219
      %v256 = vunpack.c.l.b16 %v220
      %v257 = vunpack.c.l.b16 %v221
      %v258 = vunpack.c.l.b16 %v222
      %v259 = vunpack.c.l.b16 %v223
      %v260 = vunpack.c.l.b16 %v224
      %v261 = vunpack.c.l.b16 %v225
      %v262 = vunpack.c.l.b16 %v226
      %v263 = vunpack.c.l.b16 %v227
      %v264 = vunpack.c.l.b16 %v228
      %v265 = vunpack.c.l.b16 %v229
      %v266 = vunpack.c.l.b16 %v230
      %v267 = vpack.c.b16 %v252, %v251
      %v268 = vpack.c.b16 %v254, %v253
      %v269 = vpack.c.b16 %v256, %v255
      %v270 = vpack.c.b16 %v258, %v257
      %v271 = vpack.c.b16 %v260, %v259
      %v272 = vpack.c.b16 %v262, %v261
      %v273 = vpack.c.b16 %v264, %v263
      %v274 = vpack.c.b16 %v266, %v265
      %283 = vmatprep.subr.bf16.mxu0 0
      %284 = vmatpush1.bf16.msra.mxu0 %v274
      %285 = vmatprep.subr.bf16.mxu0 0
      %286 = vmatpush1.bf16.msra.mxu0 %v273
      %287 = vmatprep.subr.bf16.mxu0 0
      %288 = vmatpush1.bf16.msra.mxu0 %v272
      %289 = vmatprep.subr.bf16.mxu0 0
      %290 = vmatpush1.bf16.msra.mxu0 %v271
      %291 = vmatprep.subr.bf16.mxu0 0
      %292 = vmatpush1.bf16.msra.mxu0 %v270
      %293 = vmatprep.subr.bf16.mxu0 0
      %294 = vmatpush1.bf16.msra.mxu0 %v269
      %295 = vmatprep.subr.bf16.mxu0 0
      %296 = vmatpush1.bf16.msra.mxu0 %v268
      %297 = vmatprep.subr.bf16.mxu0 0
      %298 = vmatpush1.bf16.msra.mxu0 %v267
      %299 = vmatprep.subr.bf16.mxu0 0
      %300 = vmatpush2.bf16.msra.mxu0 0
      %301 = vmatprep.subr.bf16.mxu0 0
      %302 = vmatpush2.bf16.msra.mxu0 0
      %303 = vmatprep.subr.bf16.mxu0 0
      %304 = vmatpush2.bf16.msra.mxu0 0
      %305 = vmatprep.subr.bf16.mxu0 0
      %306 = vmatpush2.bf16.msra.mxu0 0
      %307 = vmatprep.subr.bf16.mxu0 0
      %308 = vmatpush2.bf16.msra.mxu0 0
      %309 = vmatprep.subr.bf16.mxu0 0
      %310 = vmatpush2.bf16.msra.mxu0 0
      %311 = vmatprep.subr.bf16.mxu0 0
      %312 = vmatpush2.bf16.msra.mxu0 0
      %313 = vmatprep.subr.bf16.mxu0 0
      %314 = vmatpush2.bf16.msra.mxu0 0
      %315 = vmatprep.mubr.bf16.mxu0 0
      %316 = vmatmul.mubr.bf16.gmra.mxu0 %v233
      %v317 = vpop.f32.mrf.mxu0
      %v318 = vadd.f32 0.0, %v317
      %v319 = vpop.f32.mrf.mxu0
      %v320 = vpop.f32.mrf.mxu0
      %v321 = vpop.f32.mrf.mxu0
      %322 = vdwg.mxu0
      %v339 = vunpack.c.l.b16 %v198
      %v340 = vunpack.c.l.b16 %v199
      %v341 = vunpack.c.l.b16 %v200
      %v342 = vunpack.c.l.b16 %v201
      %v343 = vunpack.c.l.b16 %v202
      %v344 = vunpack.c.l.b16 %v203
      %v345 = vunpack.c.l.b16 %v204
      %v346 = vunpack.c.l.b16 %v205
      %v347 = vunpack.c.l.b16 %v206
      %v348 = vunpack.c.l.b16 %v207
      %v349 = vunpack.c.l.b16 %v208
      %v350 = vunpack.c.l.b16 %v209
      %v351 = vunpack.c.l.b16 %v210
      %v352 = vunpack.c.l.b16 %v211
      %v353 = vunpack.c.l.b16 %v212
      %v354 = vunpack.c.l.b16 %v213
      %v355 = vpack.c.b16 %v340, %v339
      %v356 = vpack.c.b16 %v342, %v341
      %v357 = vpack.c.b16 %v344, %v343
      %v358 = vpack.c.b16 %v346, %v345
      %v359 = vpack.c.b16 %v348, %v347
      %v360 = vpack.c.b16 %v350, %v349
      %v361 = vpack.c.b16 %v352, %v351
      %v362 = vpack.c.b16 %v354, %v353
      %371 = vmatprep.subr.bf16.mxu0 0
      %372 = vmatpush1.bf16.msra.mxu0 %v362
      %373 = vmatprep.subr.bf16.mxu0 0
      %374 = vmatpush1.bf16.msra.mxu0 %v361
      %375 = vmatprep.subr.bf16.mxu0 0
      %376 = vmatpush1.bf16.msra.mxu0 %v360
      %377 = vmatprep.subr.bf16.mxu0 0
      %378 = vmatpush1.bf16.msra.mxu0 %v359
      %379 = vmatprep.subr.bf16.mxu0 0
      %380 = vmatpush1.bf16.msra.mxu0 %v358
      %381 = vmatprep.subr.bf16.mxu0 0
      %382 = vmatpush1.bf16.msra.mxu0 %v357
      %383 = vmatprep.subr.bf16.mxu0 0
      %384 = vmatpush1.bf16.msra.mxu0 %v356
      %385 = vmatprep.subr.bf16.mxu0 0
      %386 = vmatpush1.bf16.msra.mxu0 %v355
      %387 = vmatprep.subr.bf16.mxu0 0
      %388 = vmatpush2.bf16.msra.mxu0 0
      %389 = vmatprep.subr.bf16.mxu0 0
      %390 = vmatpush2.bf16.msra.mxu0 0
      %391 = vmatprep.subr.bf16.mxu0 0
      %392 = vmatpush2.bf16.msra.mxu0 0
      %393 = vmatprep.subr.bf16.mxu0 0
      %394 = vmatpush2.bf16.msra.mxu0 0
      %395 = vmatprep.subr.bf16.mxu0 0
      %396 = vmatpush2.bf16.msra.mxu0 0
      %397 = vmatprep.subr.bf16.mxu0 0
      %398 = vmatpush2.bf16.msra.mxu0 0
      %399 = vmatprep.subr.bf16.mxu0 0
      %400 = vmatpush2.bf16.msra.mxu0 0
      %401 = vmatprep.subr.bf16.mxu0 0
      %402 = vmatpush2.bf16.msra.mxu0 0
      %403 = vmatprep.mubr.bf16.mxu0 0
      %404 = vmatmul.mubr.bf16.gmra.mxu0 %v196
      %v405 = vpop.f32.mrf.mxu0
      %v406 = vadd.f32 %v318, %v405
      %v407 = vpop.f32.mrf.mxu0
      %v408 = vpop.f32.mrf.mxu0
      %v409 = vpop.f32.mrf.mxu0
      %410 = vdwg.mxu0
      %s411 = scalar_lea.vmem %s1, 128
      %v412 = vld [vmem:[%s411] sm:$0xf]
      %v413 = vld [vmem:[%s411 + $0x4] sm:$0xf]
      %v414 = vld [vmem:[%s411 + $0x8] sm:$0xf]
      %v415 = vld [vmem:[%s411 + $0xc] sm:$0xf]
      %v416 = vld [vmem:[%s411 + $0x10] sm:$0xf]
      %v417 = vld [vmem:[%s411 + $0x14] sm:$0xf]
      %v418 = vld [vmem:[%s411 + $0x18] sm:$0xf]
      %v419 = vld [vmem:[%s411 + $0x1c] sm:$0xf]
      %v420 = vld [vmem:[%s411 + $0x20] sm:$0xf]
      %v421 = vld [vmem:[%s411 + $0x24] sm:$0xf]
      %v422 = vld [vmem:[%s411 + $0x28] sm:$0xf]
      %v423 = vld [vmem:[%s411 + $0x2c] sm:$0xf]
      %v424 = vld [vmem:[%s411 + $0x30] sm:$0xf]
      %v425 = vld [vmem:[%s411 + $0x34] sm:$0xf]
      %v426 = vld [vmem:[%s411 + $0x38] sm:$0xf]
      %v427 = vld [vmem:[%s411 + $0x3c] sm:$0xf]
      %v429 = vunpack.c.l.b16 %v196
      %v430 = vunpack.c.l.b16 %v197
      %v431 = vpack.c.b16 %v430, %v429
      %v433 = vshrl.u32 %v431, 16
      %v435 = vshll.u32 %v431, 16
      %v437 = vrot.slane %v435, 1
      %v438 = vor.u32 %v433, %v437
      %v456 = vunpack.c.l.b16 %v412
      %v457 = vunpack.c.l.b16 %v413
      %v458 = vunpack.c.l.b16 %v414
      %v459 = vunpack.c.l.b16 %v415
      %v460 = vunpack.c.l.b16 %v416
      %v461 = vunpack.c.l.b16 %v417
      %v462 = vunpack.c.l.b16 %v418
      %v463 = vunpack.c.l.b16 %v419
      %v464 = vunpack.c.l.b16 %v420
      %v465 = vunpack.c.l.b16 %v421
      %v466 = vunpack.c.l.b16 %v422
      %v467 = vunpack.c.l.b16 %v423
      %v468 = vunpack.c.l.b16 %v424
      %v469 = vunpack.c.l.b16 %v425
      %v470 = vunpack.c.l.b16 %v426
      %v471 = vunpack.c.l.b16 %v427
      %v472 = vpack.c.b16 %v457, %v456
      %v473 = vpack.c.b16 %v459, %v458
      %v474 = vpack.c.b16 %v461, %v460
      %v475 = vpack.c.b16 %v463, %v462
      %v476 = vpack.c.b16 %v465, %v464
      %v477 = vpack.c.b16 %v467, %v466
      %v478 = vpack.c.b16 %v469, %v468
      %v479 = vpack.c.b16 %v471, %v470
      %488 = vmatprep.subr.bf16.mxu0 0
      %489 = vmatpush1.bf16.msra.mxu0 %v479
      %490 = vmatprep.subr.bf16.mxu0 0
      %491 = vmatpush1.bf16.msra.mxu0 %v478
      %492 = vmatprep.subr.bf16.mxu0 0
      %493 = vmatpush1.bf16.msra.mxu0 %v477
      %494 = vmatprep.subr.bf16.mxu0 0
      %495 = vmatpush1.bf16.msra.mxu0 %v476
      %496 = vmatprep.subr.bf16.mxu0 0
      %497 = vmatpush1.bf16.msra.mxu0 %v475
      %498 = vmatprep.subr.bf16.mxu0 0
      %499 = vmatpush1.bf16.msra.mxu0 %v474
      %500 = vmatprep.subr.bf16.mxu0 0
      %501 = vmatpush1.bf16.msra.mxu0 %v473
      %502 = vmatprep.subr.bf16.mxu0 0
      %503 = vmatpush1.bf16.msra.mxu0 %v472
      %504 = vmatprep.subr.bf16.mxu0 0
      %505 = vmatpush2.bf16.msra.mxu0 0
      %506 = vmatprep.subr.bf16.mxu0 0
      %507 = vmatpush2.bf16.msra.mxu0 0
      %508 = vmatprep.subr.bf16.mxu0 0
      %509 = vmatpush2.bf16.msra.mxu0 0
      %510 = vmatprep.subr.bf16.mxu0 0
      %511 = vmatpush2.bf16.msra.mxu0 0
      %512 = vmatprep.subr.bf16.mxu0 0
      %513 = vmatpush2.bf16.msra.mxu0 0
      %514 = vmatprep.subr.bf16.mxu0 0
      %515 = vmatpush2.bf16.msra.mxu0 0
      %516 = vmatprep.subr.bf16.mxu0 0
      %517 = vmatpush2.bf16.msra.mxu0 0
      %518 = vmatprep.subr.bf16.mxu0 0
      %519 = vmatpush2.bf16.msra.mxu0 0
      %520 = vmatprep.mubr.bf16.mxu0 0
      %521 = vmatmul.mubr.bf16.gmra.mxu0 %v438
      %v522 = vpop.f32.mrf.mxu0
      %v523 = vadd.f32 0.0, %v522
      %v524 = vpop.f32.mrf.mxu0
      %v525 = vpop.f32.mrf.mxu0
      %v526 = vpop.f32.mrf.mxu0
      %527 = vdwg.mxu0
      %v528 = vadd.f32 %v406, %v523
      %s529 = sadd.s32 %s192, 1
      %s530 = smul.u32 %s529, 4
      %s531 = smul.addr %s530, 4
      %s532 = scalar_lea.vmem %s182, %s531
      %v533 = vld [vmem:[%s532] sm:$0xff]
      %v534 = vld [vmem:[%s532 + $0x8] sm:$0x11]
      %s535 = scalar_lea.vmem %s1, 192
      %v536 = vld [vmem:[%s535] sm:$0xf]
      %v537 = vld [vmem:[%s535 + $0x4] sm:$0xf]
      %v538 = vld [vmem:[%s535 + $0x8] sm:$0xf]
      %v539 = vld [vmem:[%s535 + $0xc] sm:$0xf]
      %v540 = vld [vmem:[%s535 + $0x10] sm:$0xf]
      %v541 = vld [vmem:[%s535 + $0x14] sm:$0xf]
      %v542 = vld [vmem:[%s535 + $0x18] sm:$0xf]
      %v543 = vld [vmem:[%s535 + $0x1c] sm:$0xf]
      %v544 = vld [vmem:[%s535 + $0x20] sm:$0xf]
      %v545 = vld [vmem:[%s535 + $0x24] sm:$0xf]
      %v546 = vld [vmem:[%s535 + $0x28] sm:$0xf]
      %v547 = vld [vmem:[%s535 + $0x2c] sm:$0xf]
      %v548 = vld [vmem:[%s535 + $0x30] sm:$0xf]
      %v549 = vld [vmem:[%s535 + $0x34] sm:$0xf]
      %v550 = vld [vmem:[%s535 + $0x38] sm:$0xf]
      %v551 = vld [vmem:[%s535 + $0x3c] sm:$0xf]
      %v568 = vunpack.c.l.b16 %v536
      %v569 = vunpack.c.l.b16 %v537
      %v570 = vunpack.c.l.b16 %v538
      %v571 = vunpack.c.l.b16 %v539
      %v572 = vunpack.c.l.b16 %v540
      %v573 = vunpack.c.l.b16 %v541
      %v574 = vunpack.c.l.b16 %v542
      %v575 = vunpack.c.l.b16 %v543
      %v576 = vunpack.c.l.b16 %v544
      %v577 = vunpack.c.l.b16 %v545
      %v578 = vunpack.c.l.b16 %v546
      %v579 = vunpack.c.l.b16 %v547
      %v580 = vunpack.c.l.b16 %v548
      %v581 = vunpack.c.l.b16 %v549
      %v582 = vunpack.c.l.b16 %v550
      %v583 = vunpack.c.l.b16 %v551
      %v584 = vpack.c.b16 %v569, %v568
      %v585 = vpack.c.b16 %v571, %v570
      %v586 = vpack.c.b16 %v573, %v572
      %v587 = vpack.c.b16 %v575, %v574
      %v588 = vpack.c.b16 %v577, %v576
      %v589 = vpack.c.b16 %v579, %v578
      %v590 = vpack.c.b16 %v581, %v580
      %v591 = vpack.c.b16 %v583, %v582
      %600 = vmatprep.subr.bf16.mxu0 0
      %601 = vmatpush1.bf16.msra.mxu0 %v591
      %602 = vmatprep.subr.bf16.mxu0 0
      %603 = vmatpush1.bf16.msra.mxu0 %v590
      %604 = vmatprep.subr.bf16.mxu0 0
      %605 = vmatpush1.bf16.msra.mxu0 %v589
      %606 = vmatprep.subr.bf16.mxu0 0
      %607 = vmatpush1.bf16.msra.mxu0 %v588
      %608 = vmatprep.subr.bf16.mxu0 0
      %609 = vmatpush1.bf16.msra.mxu0 %v587
      %610 = vmatprep.subr.bf16.mxu0 0
      %611 = vmatpush1.bf16.msra.mxu0 %v586
      %612 = vmatprep.subr.bf16.mxu0 0
      %613 = vmatpush1.bf16.msra.mxu0 %v585
      %614 = vmatprep.subr.bf16.mxu0 0
      %615 = vmatpush1.bf16.msra.mxu0 %v584
      %616 = vmatprep.subr.bf16.mxu0 0
      %617 = vmatpush2.bf16.msra.mxu0 0
      %618 = vmatprep.subr.bf16.mxu0 0
      %619 = vmatpush2.bf16.msra.mxu0 0
      %620 = vmatprep.subr.bf16.mxu0 0
      %621 = vmatpush2.bf16.msra.mxu0 0
      %622 = vmatprep.subr.bf16.mxu0 0
      %623 = vmatpush2.bf16.msra.mxu0 0
      %624 = vmatprep.subr.bf16.mxu0 0
      %625 = vmatpush2.bf16.msra.mxu0 0
      %626 = vmatprep.subr.bf16.mxu0 0
      %627 = vmatpush2.bf16.msra.mxu0 0
      %628 = vmatprep.subr.bf16.mxu0 0
      %629 = vmatpush2.bf16.msra.mxu0 0
      %630 = vmatprep.subr.bf16.mxu0 0
      %631 = vmatpush2.bf16.msra.mxu0 0
      %632 = vmatprep.mubr.bf16.mxu0 0
      %633 = vmatmul.mubr.bf16.gmra.mxu0 %v533
      %v634 = vpop.f32.mrf.mxu0
      %v635 = vadd.f32 0.0, %v634
      %v636 = vpop.f32.mrf.mxu0
      %v637 = vpop.f32.mrf.mxu0
      %v638 = vpop.f32.mrf.mxu0
      %639 = vdwg.mxu0
      %v640 = vadd.f32 %v528, %v635
      %s641 = scalar_lea.vmem %s1, 256
      %v642 = vld [vmem:[%s641] sm:$0xf]
      %v643 = vld [vmem:[%s641 + $0x4] sm:$0xf]
      %v644 = vld [vmem:[%s641 + $0x8] sm:$0xf]
      %v645 = vld [vmem:[%s641 + $0xc] sm:$0xf]
      %v646 = vld [vmem:[%s641 + $0x10] sm:$0xf]
      %v647 = vld [vmem:[%s641 + $0x14] sm:$0xf]
      %v648 = vld [vmem:[%s641 + $0x18] sm:$0xf]
      %v649 = vld [vmem:[%s641 + $0x1c] sm:$0xf]
      %v650 = vld [vmem:[%s641 + $0x20] sm:$0xf]
      %v651 = vld [vmem:[%s641 + $0x24] sm:$0xf]
      %v652 = vld [vmem:[%s641 + $0x28] sm:$0xf]
      %v653 = vld [vmem:[%s641 + $0x2c] sm:$0xf]
      %v654 = vld [vmem:[%s641 + $0x30] sm:$0xf]
      %v655 = vld [vmem:[%s641 + $0x34] sm:$0xf]
      %v656 = vld [vmem:[%s641 + $0x38] sm:$0xf]
      %v657 = vld [vmem:[%s641 + $0x3c] sm:$0xf]
      %v659 = vunpack.c.h.b16 %v533
      %v660 = vpack.c.b16 %v659, %v659
      %v678 = vunpack.c.l.b16 %v642
      %v679 = vunpack.c.l.b16 %v643
      %v680 = vunpack.c.l.b16 %v644
      %v681 = vunpack.c.l.b16 %v645
      %v682 = vunpack.c.l.b16 %v646
      %v683 = vunpack.c.l.b16 %v647
      %v684 = vunpack.c.l.b16 %v648
      %v685 = vunpack.c.l.b16 %v649
      %v686 = vunpack.c.l.b16 %v650
      %v687 = vunpack.c.l.b16 %v651
      %v688 = vunpack.c.l.b16 %v652
      %v689 = vunpack.c.l.b16 %v653
      %v690 = vunpack.c.l.b16 %v654
      %v691 = vunpack.c.l.b16 %v655
      %v692 = vunpack.c.l.b16 %v656
      %v693 = vunpack.c.l.b16 %v657
      %v694 = vpack.c.b16 %v679, %v678
      %v695 = vpack.c.b16 %v681, %v680
      %v696 = vpack.c.b16 %v683, %v682
      %v697 = vpack.c.b16 %v685, %v684
      %v698 = vpack.c.b16 %v687, %v686
      %v699 = vpack.c.b16 %v689, %v688
      %v700 = vpack.c.b16 %v691, %v690
      %v701 = vpack.c.b16 %v693, %v692
      %710 = vmatprep.subr.bf16.mxu0 0
      %711 = vmatpush1.bf16.msra.mxu0 %v701
      %712 = vmatprep.subr.bf16.mxu0 0
      %713 = vmatpush1.bf16.msra.mxu0 %v700
      %714 = vmatprep.subr.bf16.mxu0 0
      %715 = vmatpush1.bf16.msra.mxu0 %v699
      %716 = vmatprep.subr.bf16.mxu0 0
      %717 = vmatpush1.bf16.msra.mxu0 %v698
      %718 = vmatprep.subr.bf16.mxu0 0
      %719 = vmatpush1.bf16.msra.mxu0 %v697
      %720 = vmatprep.subr.bf16.mxu0 0
      %721 = vmatpush1.bf16.msra.mxu0 %v696
      %722 = vmatprep.subr.bf16.mxu0 0
      %723 = vmatpush1.bf16.msra.mxu0 %v695
      %724 = vmatprep.subr.bf16.mxu0 0
      %725 = vmatpush1.bf16.msra.mxu0 %v694
      %726 = vmatprep.subr.bf16.mxu0 0
      %727 = vmatpush2.bf16.msra.mxu0 0
      %728 = vmatprep.subr.bf16.mxu0 0
      %729 = vmatpush2.bf16.msra.mxu0 0
      %730 = vmatprep.subr.bf16.mxu0 0
      %731 = vmatpush2.bf16.msra.mxu0 0
      %732 = vmatprep.subr.bf16.mxu0 0
      %733 = vmatpush2.bf16.msra.mxu0 0
      %734 = vmatprep.subr.bf16.mxu0 0
      %735 = vmatpush2.bf16.msra.mxu0 0
      %736 = vmatprep.subr.bf16.mxu0 0
      %737 = vmatpush2.bf16.msra.mxu0 0
      %738 = vmatprep.subr.bf16.mxu0 0
      %739 = vmatpush2.bf16.msra.mxu0 0
      %740 = vmatprep.subr.bf16.mxu0 0
      %741 = vmatpush2.bf16.msra.mxu0 0
      %742 = vmatprep.mubr.bf16.mxu0 0
      %743 = vmatmul.mubr.bf16.gmra.mxu0 %v660
      %v744 = vpop.f32.mrf.mxu0
      %v745 = vadd.f32 0.0, %v744
      %v746 = vpop.f32.mrf.mxu0
      %v747 = vpop.f32.mrf.mxu0
      %v748 = vpop.f32.mrf.mxu0
      %749 = vdwg.mxu0
      %v750 = vadd.f32 %v640, %v745
      %s751 = scalar_lea.vmem %s1, 320
      %v752 = vld [vmem:[%s751] sm:$0xf]
      %v753 = vld [vmem:[%s751 + $0x4] sm:$0xf]
      %v754 = vld [vmem:[%s751 + $0x8] sm:$0xf]
      %v755 = vld [vmem:[%s751 + $0xc] sm:$0xf]
      %v756 = vld [vmem:[%s751 + $0x10] sm:$0xf]
      %v757 = vld [vmem:[%s751 + $0x14] sm:$0xf]
      %v758 = vld [vmem:[%s751 + $0x18] sm:$0xf]
      %v759 = vld [vmem:[%s751 + $0x1c] sm:$0xf]
      %v760 = vld [vmem:[%s751 + $0x20] sm:$0xf]
      %v761 = vld [vmem:[%s751 + $0x24] sm:$0xf]
      %v762 = vld [vmem:[%s751 + $0x28] sm:$0xf]
      %v763 = vld [vmem:[%s751 + $0x2c] sm:$0xf]
      %v764 = vld [vmem:[%s751 + $0x30] sm:$0xf]
      %v765 = vld [vmem:[%s751 + $0x34] sm:$0xf]
      %v766 = vld [vmem:[%s751 + $0x38] sm:$0xf]
      %v767 = vld [vmem:[%s751 + $0x3c] sm:$0xf]
      %v769 = vunpack.c.l.b16 %v533
      %v770 = vunpack.c.l.b16 %v534
      %v771 = vpack.c.b16 %v770, %v769
      %v773 = vshrl.u32 %v771, 16
      %v775 = vshll.u32 %v771, 16
      %v777 = vrot.slane %v775, 1
      %v778 = vor.u32 %v773, %v777
      %v796 = vunpack.c.l.b16 %v752
      %v797 = vunpack.c.l.b16 %v753
      %v798 = vunpack.c.l.b16 %v754
      %v799 = vunpack.c.l.b16 %v755
      %v800 = vunpack.c.l.b16 %v756
      %v801 = vunpack.c.l.b16 %v757
      %v802 = vunpack.c.l.b16 %v758
      %v803 = vunpack.c.l.b16 %v759
      %v804 = vunpack.c.l.b16 %v760
      %v805 = vunpack.c.l.b16 %v761
      %v806 = vunpack.c.l.b16 %v762
      %v807 = vunpack.c.l.b16 %v763
      %v808 = vunpack.c.l.b16 %v764
      %v809 = vunpack.c.l.b16 %v765
      %v810 = vunpack.c.l.b16 %v766
      %v811 = vunpack.c.l.b16 %v767
      %v812 = vpack.c.b16 %v797, %v796
      %v813 = vpack.c.b16 %v799, %v798
      %v814 = vpack.c.b16 %v801, %v800
      %v815 = vpack.c.b16 %v803, %v802
      %v816 = vpack.c.b16 %v805, %v804
      %v817 = vpack.c.b16 %v807, %v806
      %v818 = vpack.c.b16 %v809, %v808
      %v819 = vpack.c.b16 %v811, %v810
      %828 = vmatprep.subr.bf16.mxu0 0
      %829 = vmatpush1.bf16.msra.mxu0 %v819
      %830 = vmatprep.subr.bf16.mxu0 0
      %831 = vmatpush1.bf16.msra.mxu0 %v818
      %832 = vmatprep.subr.bf16.mxu0 0
      %833 = vmatpush1.bf16.msra.mxu0 %v817
      %834 = vmatprep.subr.bf16.mxu0 0
      %835 = vmatpush1.bf16.msra.mxu0 %v816
      %836 = vmatprep.subr.bf16.mxu0 0
      %837 = vmatpush1.bf16.msra.mxu0 %v815
      %838 = vmatprep.subr.bf16.mxu0 0
      %839 = vmatpush1.bf16.msra.mxu0 %v814
      %840 = vmatprep.subr.bf16.mxu0 0
      %841 = vmatpush1.bf16.msra.mxu0 %v813
      %842 = vmatprep.subr.bf16.mxu0 0
      %843 = vmatpush1.bf16.msra.mxu0 %v812
      %844 = vmatprep.subr.bf16.mxu0 0
      %845 = vmatpush2.bf16.msra.mxu0 0
      %846 = vmatprep.subr.bf16.mxu0 0
      %847 = vmatpush2.bf16.msra.mxu0 0
      %848 = vmatprep.subr.bf16.mxu0 0
      %849 = vmatpush2.bf16.msra.mxu0 0
      %850 = vmatprep.subr.bf16.mxu0 0
      %851 = vmatpush2.bf16.msra.mxu0 0
      %852 = vmatprep.subr.bf16.mxu0 0
      %853 = vmatpush2.bf16.msra.mxu0 0
      %854 = vmatprep.subr.bf16.mxu0 0
      %855 = vmatpush2.bf16.msra.mxu0 0
      %856 = vmatprep.subr.bf16.mxu0 0
      %857 = vmatpush2.bf16.msra.mxu0 0
      %858 = vmatprep.subr.bf16.mxu0 0
      %859 = vmatpush2.bf16.msra.mxu0 0
      %860 = vmatprep.mubr.bf16.mxu0 0
      %861 = vmatmul.mubr.bf16.gmra.mxu0 %v778
      %v862 = vpop.f32.mrf.mxu0
      %v863 = vadd.f32 0.0, %v862
      %v864 = vpop.f32.mrf.mxu0
      %v865 = vpop.f32.mrf.mxu0
      %v866 = vpop.f32.mrf.mxu0
      %867 = vdwg.mxu0
      %v868 = vadd.f32 %v750, %v863
      %s869 = sadd.s32 %s192, 2
      %s870 = smul.u32 %s869, 4
      %s871 = smul.addr %s870, 4
      %s872 = scalar_lea.vmem %s182, %s871
      %v873 = vld [vmem:[%s872] sm:$0xff]
      %v874 = vld [vmem:[%s872 + $0x8] sm:$0x11]
      %s875 = scalar_lea.vmem %s1, 384
      %v876 = vld [vmem:[%s875] sm:$0xf]
      %v877 = vld [vmem:[%s875 + $0x4] sm:$0xf]
      %v878 = vld [vmem:[%s875 + $0x8] sm:$0xf]
      %v879 = vld [vmem:[%s875 + $0xc] sm:$0xf]
      %v880 = vld [vmem:[%s875 + $0x10] sm:$0xf]
      %v881 = vld [vmem:[%s875 + $0x14] sm:$0xf]
      %v882 = vld [vmem:[%s875 + $0x18] sm:$0xf]
      %v883 = vld [vmem:[%s875 + $0x1c] sm:$0xf]
      %v884 = vld [vmem:[%s875 + $0x20] sm:$0xf]
      %v885 = vld [vmem:[%s875 + $0x24] sm:$0xf]
      %v886 = vld [vmem:[%s875 + $0x28] sm:$0xf]
      %v887 = vld [vmem:[%s875 + $0x2c] sm:$0xf]
      %v888 = vld [vmem:[%s875 + $0x30] sm:$0xf]
      %v889 = vld [vmem:[%s875 + $0x34] sm:$0xf]
      %v890 = vld [vmem:[%s875 + $0x38] sm:$0xf]
      %v891 = vld [vmem:[%s875 + $0x3c] sm:$0xf]
      %v908 = vunpack.c.l.b16 %v876
      %v909 = vunpack.c.l.b16 %v877
      %v910 = vunpack.c.l.b16 %v878
      %v911 = vunpack.c.l.b16 %v879
      %v912 = vunpack.c.l.b16 %v880
      %v913 = vunpack.c.l.b16 %v881
      %v914 = vunpack.c.l.b16 %v882
      %v915 = vunpack.c.l.b16 %v883
      %v916 = vunpack.c.l.b16 %v884
      %v917 = vunpack.c.l.b16 %v885
      %v918 = vunpack.c.l.b16 %v886
      %v919 = vunpack.c.l.b16 %v887
      %v920 = vunpack.c.l.b16 %v888
      %v921 = vunpack.c.l.b16 %v889
      %v922 = vunpack.c.l.b16 %v890
      %v923 = vunpack.c.l.b16 %v891
      %v924 = vpack.c.b16 %v909, %v908
      %v925 = vpack.c.b16 %v911, %v910
      %v926 = vpack.c.b16 %v913, %v912
      %v927 = vpack.c.b16 %v915, %v914
      %v928 = vpack.c.b16 %v917, %v916
      %v929 = vpack.c.b16 %v919, %v918
      %v930 = vpack.c.b16 %v921, %v920
      %v931 = vpack.c.b16 %v923, %v922
      %940 = vmatprep.subr.bf16.mxu0 0
      %941 = vmatpush1.bf16.msra.mxu0 %v931
      %942 = vmatprep.subr.bf16.mxu0 0
      %943 = vmatpush1.bf16.msra.mxu0 %v930
      %944 = vmatprep.subr.bf16.mxu0 0
      %945 = vmatpush1.bf16.msra.mxu0 %v929
      %946 = vmatprep.subr.bf16.mxu0 0
      %947 = vmatpush1.bf16.msra.mxu0 %v928
      %948 = vmatprep.subr.bf16.mxu0 0
      %949 = vmatpush1.bf16.msra.mxu0 %v927
      %950 = vmatprep.subr.bf16.mxu0 0
      %951 = vmatpush1.bf16.msra.mxu0 %v926
      %952 = vmatprep.subr.bf16.mxu0 0
      %953 = vmatpush1.bf16.msra.mxu0 %v925
      %954 = vmatprep.subr.bf16.mxu0 0
      %955 = vmatpush1.bf16.msra.mxu0 %v924
      %956 = vmatprep.subr.bf16.mxu0 0
      %957 = vmatpush2.bf16.msra.mxu0 0
      %958 = vmatprep.subr.bf16.mxu0 0
      %959 = vmatpush2.bf16.msra.mxu0 0
      %960 = vmatprep.subr.bf16.mxu0 0
      %961 = vmatpush2.bf16.msra.mxu0 0
      %962 = vmatprep.subr.bf16.mxu0 0
      %963 = vmatpush2.bf16.msra.mxu0 0
      %964 = vmatprep.subr.bf16.mxu0 0
      %965 = vmatpush2.bf16.msra.mxu0 0
      %966 = vmatprep.subr.bf16.mxu0 0
      %967 = vmatpush2.bf16.msra.mxu0 0
      %968 = vmatprep.subr.bf16.mxu0 0
      %969 = vmatpush2.bf16.msra.mxu0 0
      %970 = vmatprep.subr.bf16.mxu0 0
      %971 = vmatpush2.bf16.msra.mxu0 0
      %972 = vmatprep.mubr.bf16.mxu0 0
      %973 = vmatmul.mubr.bf16.gmra.mxu0 %v873
      %v974 = vpop.f32.mrf.mxu0
      %v975 = vadd.f32 0.0, %v974
      %v976 = vpop.f32.mrf.mxu0
      %v977 = vpop.f32.mrf.mxu0
      %v978 = vpop.f32.mrf.mxu0
      %979 = vdwg.mxu0
      %v980 = vadd.f32 %v868, %v975
      %s981 = scalar_lea.vmem %s1, 448
      %v982 = vld [vmem:[%s981] sm:$0xf]
      %v983 = vld [vmem:[%s981 + $0x4] sm:$0xf]
      %v984 = vld [vmem:[%s981 + $0x8] sm:$0xf]
      %v985 = vld [vmem:[%s981 + $0xc] sm:$0xf]
      %v986 = vld [vmem:[%s981 + $0x10] sm:$0xf]
      %v987 = vld [vmem:[%s981 + $0x14] sm:$0xf]
      %v988 = vld [vmem:[%s981 + $0x18] sm:$0xf]
      %v989 = vld [vmem:[%s981 + $0x1c] sm:$0xf]
      %v990 = vld [vmem:[%s981 + $0x20] sm:$0xf]
      %v991 = vld [vmem:[%s981 + $0x24] sm:$0xf]
      %v992 = vld [vmem:[%s981 + $0x28] sm:$0xf]
      %v993 = vld [vmem:[%s981 + $0x2c] sm:$0xf]
      %v994 = vld [vmem:[%s981 + $0x30] sm:$0xf]
      %v995 = vld [vmem:[%s981 + $0x34] sm:$0xf]
      %v996 = vld [vmem:[%s981 + $0x38] sm:$0xf]
      %v997 = vld [vmem:[%s981 + $0x3c] sm:$0xf]
      %v999 = vunpack.c.h.b16 %v873
      %v1000 = vpack.c.b16 %v999, %v999
      %v1018 = vunpack.c.l.b16 %v982
      %v1019 = vunpack.c.l.b16 %v983
      %v1020 = vunpack.c.l.b16 %v984
      %v1021 = vunpack.c.l.b16 %v985
      %v1022 = vunpack.c.l.b16 %v986
      %v1023 = vunpack.c.l.b16 %v987
      %v1024 = vunpack.c.l.b16 %v988
      %v1025 = vunpack.c.l.b16 %v989
      %v1026 = vunpack.c.l.b16 %v990
      %v1027 = vunpack.c.l.b16 %v991
      %v1028 = vunpack.c.l.b16 %v992
      %v1029 = vunpack.c.l.b16 %v993
      %v1030 = vunpack.c.l.b16 %v994
      %v1031 = vunpack.c.l.b16 %v995
      %v1032 = vunpack.c.l.b16 %v996
      %v1033 = vunpack.c.l.b16 %v997
      %v1034 = vpack.c.b16 %v1019, %v1018
      %v1035 = vpack.c.b16 %v1021, %v1020
      %v1036 = vpack.c.b16 %v1023, %v1022
      %v1037 = vpack.c.b16 %v1025, %v1024
      %v1038 = vpack.c.b16 %v1027, %v1026
      %v1039 = vpack.c.b16 %v1029, %v1028
      %v1040 = vpack.c.b16 %v1031, %v1030
      %v1041 = vpack.c.b16 %v1033, %v1032
      %1050 = vmatprep.subr.bf16.mxu0 0
      %1051 = vmatpush1.bf16.msra.mxu0 %v1041
      %1052 = vmatprep.subr.bf16.mxu0 0
      %1053 = vmatpush1.bf16.msra.mxu0 %v1040
      %1054 = vmatprep.subr.bf16.mxu0 0
      %1055 = vmatpush1.bf16.msra.mxu0 %v1039
      %1056 = vmatprep.subr.bf16.mxu0 0
      %1057 = vmatpush1.bf16.msra.mxu0 %v1038
      %1058 = vmatprep.subr.bf16.mxu0 0
      %1059 = vmatpush1.bf16.msra.mxu0 %v1037
      %1060 = vmatprep.subr.bf16.mxu0 0
      %1061 = vmatpush1.bf16.msra.mxu0 %v1036
      %1062 = vmatprep.subr.bf16.mxu0 0
      %1063 = vmatpush1.bf16.msra.mxu0 %v1035
      %1064 = vmatprep.subr.bf16.mxu0 0
      %1065 = vmatpush1.bf16.msra.mxu0 %v1034
      %1066 = vmatprep.subr.bf16.mxu0 0
      %1067 = vmatpush2.bf16.msra.mxu0 0
      %1068 = vmatprep.subr.bf16.mxu0 0
      %1069 = vmatpush2.bf16.msra.mxu0 0
      %1070 = vmatprep.subr.bf16.mxu0 0
      %1071 = vmatpush2.bf16.msra.mxu0 0
      %1072 = vmatprep.subr.bf16.mxu0 0
      %1073 = vmatpush2.bf16.msra.mxu0 0
      %1074 = vmatprep.subr.bf16.mxu0 0
      %1075 = vmatpush2.bf16.msra.mxu0 0
      %1076 = vmatprep.subr.bf16.mxu0 0
      %1077 = vmatpush2.bf16.msra.mxu0 0
      %1078 = vmatprep.subr.bf16.mxu0 0
      %1079 = vmatpush2.bf16.msra.mxu0 0
      %1080 = vmatprep.subr.bf16.mxu0 0
      %1081 = vmatpush2.bf16.msra.mxu0 0
      %1082 = vmatprep.mubr.bf16.mxu0 0
      %1083 = vmatmul.mubr.bf16.gmra.mxu0 %v1000
      %v1084 = vpop.f32.mrf.mxu0
      %v1085 = vadd.f32 0.0, %v1084
      %v1086 = vpop.f32.mrf.mxu0
      %v1087 = vpop.f32.mrf.mxu0
      %v1088 = vpop.f32.mrf.mxu0
      %1089 = vdwg.mxu0
      %v1090 = vadd.f32 %v980, %v1085
      %s1091 = scalar_lea.vmem %s1, 512
      %v1092 = vld [vmem:[%s1091] sm:$0xf]
      %v1093 = vld [vmem:[%s1091 + $0x4] sm:$0xf]
      %v1094 = vld [vmem:[%s1091 + $0x8] sm:$0xf]
      %v1095 = vld [vmem:[%s1091 + $0xc] sm:$0xf]
      %v1096 = vld [vmem:[%s1091 + $0x10] sm:$0xf]
      %v1097 = vld [vmem:[%s1091 + $0x14] sm:$0xf]
      %v1098 = vld [vmem:[%s1091 + $0x18] sm:$0xf]
      %v1099 = vld [vmem:[%s1091 + $0x1c] sm:$0xf]
      %v1100 = vld [vmem:[%s1091 + $0x20] sm:$0xf]
      %v1101 = vld [vmem:[%s1091 + $0x24] sm:$0xf]
      %v1102 = vld [vmem:[%s1091 + $0x28] sm:$0xf]
      %v1103 = vld [vmem:[%s1091 + $0x2c] sm:$0xf]
      %v1104 = vld [vmem:[%s1091 + $0x30] sm:$0xf]
      %v1105 = vld [vmem:[%s1091 + $0x34] sm:$0xf]
      %v1106 = vld [vmem:[%s1091 + $0x38] sm:$0xf]
      %v1107 = vld [vmem:[%s1091 + $0x3c] sm:$0xf]
      %v1109 = vunpack.c.l.b16 %v873
      %v1110 = vunpack.c.l.b16 %v874
      %v1111 = vpack.c.b16 %v1110, %v1109
      %v1113 = vshrl.u32 %v1111, 16
      %v1115 = vshll.u32 %v1111, 16
      %v1117 = vrot.slane %v1115, 1
      %v1118 = vor.u32 %v1113, %v1117
      %v1136 = vunpack.c.l.b16 %v1092
      %v1137 = vunpack.c.l.b16 %v1093
      %v1138 = vunpack.c.l.b16 %v1094
      %v1139 = vunpack.c.l.b16 %v1095
      %v1140 = vunpack.c.l.b16 %v1096
      %v1141 = vunpack.c.l.b16 %v1097
      %v1142 = vunpack.c.l.b16 %v1098
      %v1143 = vunpack.c.l.b16 %v1099
      %v1144 = vunpack.c.l.b16 %v1100
      %v1145 = vunpack.c.l.b16 %v1101
      %v1146 = vunpack.c.l.b16 %v1102
      %v1147 = vunpack.c.l.b16 %v1103
      %v1148 = vunpack.c.l.b16 %v1104
      %v1149 = vunpack.c.l.b16 %v1105
      %v1150 = vunpack.c.l.b16 %v1106
      %v1151 = vunpack.c.l.b16 %v1107
      %v1152 = vpack.c.b16 %v1137, %v1136
      %v1153 = vpack.c.b16 %v1139, %v1138
      %v1154 = vpack.c.b16 %v1141, %v1140
      %v1155 = vpack.c.b16 %v1143, %v1142
      %v1156 = vpack.c.b16 %v1145, %v1144
      %v1157 = vpack.c.b16 %v1147, %v1146
      %v1158 = vpack.c.b16 %v1149, %v1148
      %v1159 = vpack.c.b16 %v1151, %v1150
      %1168 = vmatprep.subr.bf16.mxu0 0
      %1169 = vmatpush1.bf16.msra.mxu0 %v1159
      %1170 = vmatprep.subr.bf16.mxu0 0
      %1171 = vmatpush1.bf16.msra.mxu0 %v1158
      %1172 = vmatprep.subr.bf16.mxu0 0
      %1173 = vmatpush1.bf16.msra.mxu0 %v1157
      %1174 = vmatprep.subr.bf16.mxu0 0
      %1175 = vmatpush1.bf16.msra.mxu0 %v1156
      %1176 = vmatprep.subr.bf16.mxu0 0
      %1177 = vmatpush1.bf16.msra.mxu0 %v1155
      %1178 = vmatprep.subr.bf16.mxu0 0
      %1179 = vmatpush1.bf16.msra.mxu0 %v1154
      %1180 = vmatprep.subr.bf16.mxu0 0
      %1181 = vmatpush1.bf16.msra.mxu0 %v1153
      %1182 = vmatprep.subr.bf16.mxu0 0
      %1183 = vmatpush1.bf16.msra.mxu0 %v1152
      %1184 = vmatprep.subr.bf16.mxu0 0
      %1185 = vmatpush2.bf16.msra.mxu0 0
      %1186 = vmatprep.subr.bf16.mxu0 0
      %1187 = vmatpush2.bf16.msra.mxu0 0
      %1188 = vmatprep.subr.bf16.mxu0 0
      %1189 = vmatpush2.bf16.msra.mxu0 0
      %1190 = vmatprep.subr.bf16.mxu0 0
      %1191 = vmatpush2.bf16.msra.mxu0 0
      %1192 = vmatprep.subr.bf16.mxu0 0
      %1193 = vmatpush2.bf16.msra.mxu0 0
      %1194 = vmatprep.subr.bf16.mxu0 0
      %1195 = vmatpush2.bf16.msra.mxu0 0
      %1196 = vmatprep.subr.bf16.mxu0 0
      %1197 = vmatpush2.bf16.msra.mxu0 0
      %1198 = vmatprep.subr.bf16.mxu0 0
      %1199 = vmatpush2.bf16.msra.mxu0 0
      %1200 = vmatprep.mubr.bf16.mxu0 0
      %1201 = vmatmul.mubr.bf16.gmra.mxu0 %v1118
      %v1202 = vpop.f32.mrf.mxu0
      %v1203 = vadd.f32 0.0, %v1202
      %v1204 = vpop.f32.mrf.mxu0
      %v1205 = vpop.f32.mrf.mxu0
      %v1206 = vpop.f32.mrf.mxu0
      %1207 = vdwg.mxu0
      %v1208 = vadd.f32 %v1090, %v1203
      %v1209 = vld [vmem:[%s2] sm:$0x1]
      %v1211 = vlaneseq
      %v1212 = vshrl.u32 %v1211, 7
      %v1213 = vsub.s32 0, %v1212
      %v1214 = vrot.slane %v1209, %v1213
      %v1216 = vadd.f32 %v1208, %v1214
      %v1217 = vmax.f32 %v1216, 0.0
      %v1218 = vpack.c.bf16 %v1217, %v1217
      %1219 = vst [vmem:[%s190] sm:$0xf] %v1218
      %p1220 = scmp.lt.s32.totalorder %s18, 1
      %s1221 = scalar_select %p1220, %s18, 1
      %p1222 = scmp.lt.s32.totalorder %s19, 7
      %s1223 = scalar_select %p1222, %s19, 7
      %s1224 = smul.addr %s1221, 8
      %s1225 = sadd.s32 %s1223, %s1224
      %s1226 = smul.addr %s1225, 4
      %s1227 = scalar_lea.vmem %s3, %s1226
      // Predicated region
      $region33: #{branch_forward.10} parent=31 // pred_check
        %p1228 = pneg %p114
      $region34: #{branch_forward.10} parent=31 // pred_check_branch
        %1230 = sbr.rel (%p1228) target = $region36
      $region35: #{branch_forward.10} parent=31 // pred_region
        _
      $region36: #{branch_forward.10} parent=31 // pred_fallthru
        _
    $region32: #{branch_forward.10} parent=5 // pred_fallthru
      _
    %p1231 = scmp.le.s32.totalorder 2, %s9
    // Predicated region
    $region37: #{branch_forward.10} parent=5 // pred_check
      %p1232 = pneg %p1231
    $region38: #{branch_forward.10} parent=5 // pred_check_branch
      %1234 = sbr.rel (%p1232) target = $region40
    $region39: #{branch_forward.10} parent=5 // pred_region
      %s1235 = ssub.s32 %s9, 2
      // Predicated region
      $region41: #{branch_forward.10} parent=39 // pred_check
        %p1236 = pneg %p120
      $region42: #{branch_forward.10} parent=39 // pred_check_branch
        %1238 = sbr.rel (%p1236) target = $region44
      $region43: #{branch_forward.10} parent=39 // pred_region
        %p1239 = scmp.lt.s32.totalorder %s20, 1
        %s1240 = scalar_select %p1239, %s20, 1
        %p1241 = scmp.lt.s32.totalorder %s21, 7
        %s1242 = scalar_select %p1241, %s21, 7
        %s1243 = smul.addr %s1240, 8
        %s1244 = sadd.s32 %s1242, %s1243
        %s1245 = smul.addr %s1244, 4
        %s1246 = scalar_lea.vmem %s3, %s1245
      $region44: #{branch_forward.10} parent=39 // pred_fallthru
        _
    $region40: #{branch_forward.10} parent=5 // pred_fallthru
      _
  $region6: #{branch_forward.10} parent=0 // loop_footer
    %s13 = sadd.s32 1, %s9
  $region7: #{branch_forward.10} parent=0 // loop_footer_branch
    %8 = sbr.rel target = $region3
  $region8: #{branch_forward.10} parent=0 // loop_exit
    _

// kernel: branch_forward.11
$region0: #{branch_forward.11}
  #allocation0 [shape = 'u32[]', space=smem, size = 0x4, offset = 0x4, fixed_abs, tag = 'smem constant byte address 0x4 - core index']
  #allocation1 [shape = 'u32[144,128]{1,0:T(1,128)}', space=vmem, size = 0x12000, scoped, tag = 'internal scratch']
  %s0 = inlined_call_operand.vmem [shape: bf16[2,10,5,256], index: 0, kind: input, shape index: {}]
  %s1 = inlined_call_operand.vmem [shape: bf16[9,128,128], index: 1, kind: input, shape index: {}]
  %s2 = inlined_call_operand.vmem [shape: f32[1,128], index: 2, kind: input, shape index: {}]
  %s3 = inlined_call_operand.vmem [shape: bf16[2,4,4,128], index: 3, kind: output, shape index: {}]
  %s4 = sld [smem:[#allocation0]]
  $region45: #{branch_forward.11} parent=0
    _
  %s6 = ssub.s32 1, %s4
  %s7 = scalar_select 0, %s6, %s4
  loop: start=0, step=1, limit=10
  $region2: #{branch_forward.11} parent=0 // loop_pre_header
    _
  $region3: #{branch_forward.11} parent=0 // loop_header
    %s9 = sphi 0, %s13
    %p10 = scmp.ge.s32.totalorder %s9, 10
    %s16 = sphi 0, %s28
    %s17 = sphi 0, %s24
    %s18 = sphi 0, %s16
    %s19 = sphi 0, %s17
    %s20 = sphi 0, %s18
    %s21 = sphi 0, %s19
    %s31 = sphi 0, %s33
    %s34 = sphi 0, %s31
    %s35 = sphi 0, %s34
    %s51 = sphi 0, %s35
    %s55 = sphi 0, %s55
    %s57 = sphi 0, %s55
    %s58 = sphi 0, %s57
    %s72 = sphi 0, %s58
    %s76 = sphi 0, %s76
    %s78 = sphi 0, %s76
    %s79 = sphi 0, %s78
    %s93 = sphi 0, %s79
    %s101 = sphi 0, %s103
    %s104 = sphi 0, %s101
    %s105 = sphi 0, %s104
    %s121 = sphi 0, %s105
  $region4: #{branch_forward.11} parent=0 // loop_header_branch
    %12 = sbr.rel (%p10) target = $region8
  $region5: #{branch_forward.11} parent=0 // loop_body
    %s14 = ssub.s32 %s9, 1
    %s15 = ssub.s32 %s9, 2
    %s22 = sadd.s32 1, %s17
    %p23 = scmp.ge.s32.totalorder %s22, 4
    %s24 = scalar_select %p23, 0, %s22
    %s25 = sadd.s32 1, %s16
    %s26 = scalar_select %p23, %s25, %s16
    %p27 = scmp.ge.s32.totalorder %s26, 2
    %s28 = scalar_select %p27, 0, %s26
    %s29 = ssub.s32 %s16, %s28
    %p30 = scmp.eq.s32.totalorder %s29, 0
    %s32 = sadd.s32 %s31, 1
    %s33 = scalar_select %p30, %s31, %s32
    %p36 = pneg %p30
    %p37 = scmp.eq.s32.totalorder %s9, 7
    %p38 = por %p36, %p37
    %p39 = scmp.ne.s32.totalorder %s31, %s34
    %p40 = scmp.eq.s32.totalorder %s9, 0
    %p41 = por %p39, %p40
    %p42 = scmp.ne.s32.totalorder %s31, %s34
    %p43 = scmp.eq.s32.totalorder %s14, 7
    %p44 = por %p42, %p43
    %p45 = scmp.ne.s32.totalorder %s34, %s35
    %p46 = scmp.eq.s32.totalorder %s14, 0
    %p47 = por %p45, %p46
    %p48 = scmp.ne.s32.totalorder %s34, %s35
    %p49 = scmp.eq.s32.totalorder %s15, 7
    %p50 = por %p48, %p49
    %p52 = scmp.ne.s32.totalorder %s35, %s51
    %p53 = scmp.eq.s32.totalorder %s15, 0
    %p54 = por %p52, %p53
    %s56 = sadd.s32 %s55, 1
    %p59 = scmp.eq.s32.totalorder %s9, 7
    %p60 = scmp.ne.s32.totalorder %s55, %s57
    %p61 = scmp.eq.s32.totalorder %s9, 0
    %p62 = por %p60, %p61
    %p63 = scmp.ne.s32.totalorder %s55, %s57
    %p64 = scmp.eq.s32.totalorder %s14, 7
    %p65 = por %p63, %p64
    %p66 = scmp.ne.s32.totalorder %s57, %s58
    %p67 = scmp.eq.s32.totalorder %s14, 0
    %p68 = por %p66, %p67
    %p69 = scmp.ne.s32.totalorder %s57, %s58
    %p70 = scmp.eq.s32.totalorder %s15, 7
    %p71 = por %p69, %p70
    %p73 = scmp.ne.s32.totalorder %s58, %s72
    %p74 = scmp.eq.s32.totalorder %s15, 0
    %p75 = por %p73, %p74
    %s77 = sadd.s32 %s76, 1
    %p80 = scmp.eq.s32.totalorder %s9, 7
    %p81 = scmp.ne.s32.totalorder %s76, %s78
    %p82 = scmp.eq.s32.totalorder %s9, 0
    %p83 = por %p81, %p82
    %p84 = scmp.ne.s32.totalorder %s76, %s78
    %p85 = scmp.eq.s32.totalorder %s14, 7
    %p86 = por %p84, %p85
    %p87 = scmp.ne.s32.totalorder %s78, %s79
    %p88 = scmp.eq.s32.totalorder %s14, 0
    %p89 = por %p87, %p88
    %p90 = scmp.ne.s32.totalorder %s78, %s79
    %p91 = scmp.eq.s32.totalorder %s15, 7
    %p92 = por %p90, %p91
    %p94 = scmp.ne.s32.totalorder %s79, %s93
    %p95 = scmp.eq.s32.totalorder %s15, 0
    %p96 = por %p94, %p95
    %s97 = ssub.s32 %s16, %s28
    %s98 = ssub.s32 %s17, %s24
    %s99 = sor.u32 %s97, %s98
    %p100 = scmp.eq.s32.totalorder %s99, 0
    %s102 = sadd.s32 %s101, 1
    %s103 = scalar_select %p100, %s101, %s102
    %p106 = pneg %p100
    %p107 = scmp.eq.s32.totalorder %s9, 7
    %p108 = por %p106, %p107
    %p109 = scmp.ne.s32.totalorder %s101, %s104
    %p110 = scmp.eq.s32.totalorder %s9, 0
    %p111 = por %p109, %p110
    %p112 = scmp.ne.s32.totalorder %s101, %s104
    %p113 = scmp.eq.s32.totalorder %s14, 7
    %p114 = por %p112, %p113
    %p115 = scmp.ne.s32.totalorder %s104, %s105
    %p116 = scmp.eq.s32.totalorder %s14, 0
    %p117 = por %p115, %p116
    %p118 = scmp.ne.s32.totalorder %s104, %s105
    %p119 = scmp.eq.s32.totalorder %s15, 7
    %p120 = por %p118, %p119
    %p122 = scmp.ne.s32.totalorder %s105, %s121
    %p123 = scmp.eq.s32.totalorder %s15, 0
    %p124 = por %p122, %p123
    %p125 = scmp.le.s32.totalorder 1, %s9
    %p126 = scmp.lt.s32.totalorder %s9, 9
    %p127 = pnand %p125, %p126
    %p128 = pneg %p127
    // Predicated region
    $region9: #{branch_forward.11} parent=5 // pred_check
      _
    $region10: #{branch_forward.11} parent=5 // pred_check_branch
      %130 = sbr.rel (%p127) target = $region12
    $region11: #{branch_forward.11} parent=5 // pred_region
      %s131 = ssub.s32 %s9, 1
      // Predicated region
      $region13: #{branch_forward.11} parent=11 // pred_check
        %p132 = pneg %p68
      $region14: #{branch_forward.11} parent=11 // pred_check_branch
        %134 = sbr.rel (%p132) target = $region16
      $region15: #{branch_forward.11} parent=11 // pred_region
        _
      $region16: #{branch_forward.11} parent=11 // pred_fallthru
        _
      // Predicated region
      $region17: #{branch_forward.11} parent=11 // pred_check
        %p135 = pneg %p89
      $region18: #{branch_forward.11} parent=11 // pred_check_branch
        %137 = sbr.rel (%p135) target = $region20
      $region19: #{branch_forward.11} parent=11 // pred_region
        _
      $region20: #{branch_forward.11} parent=11 // pred_fallthru
        _
    $region12: #{branch_forward.11} parent=5 // pred_fallthru
      _
    %p138 = scmp.lt.s32.totalorder %s9, 8
    // Predicated region
    $region21: #{branch_forward.11} parent=5 // pred_check
      %p139 = pneg %p138
    $region22: #{branch_forward.11} parent=5 // pred_check_branch
      %141 = sbr.rel (%p139) target = $region24
    $region23: #{branch_forward.11} parent=5 // pred_region
      // Predicated region
      $region25: #{branch_forward.11} parent=23 // pred_check
        %p142 = pneg %p41
      $region26: #{branch_forward.11} parent=23 // pred_check_branch
        %144 = sbr.rel (%p142) target = $region28
      $region27: #{branch_forward.11} parent=23 // pred_region
        %p145 = scmp.lt.s32.totalorder %s16, 1
        %s146 = scalar_select %p145, %s16, 1
        %s147 = smul.addr %s146, 20
        %s148 = smul.addr %s147, 4
        %s149 = scalar_lea.vmem %s0, %s148
      $region28: #{branch_forward.11} parent=23 // pred_fallthru
        _
    $region24: #{branch_forward.11} parent=5 // pred_fallthru
      _
    %p150 = scmp.le.s32.totalorder 1, %s9
    %p151 = scmp.lt.s32.totalorder %s9, 9
    %p152 = pnand %p150, %p151
    %p153 = pneg %p152
    // Predicated region
    $region29: #{branch_forward.11} parent=5 // pred_check
      _
    $region30: #{branch_forward.11} parent=5 // pred_check_branch
      %155 = sbr.rel (%p152) target = $region32
    $region31: #{branch_forward.11} parent=5 // pred_region
      %s156 = ssub.s32 %s9, 1
      %p157 = scmp.lt.s32.totalorder %s18, 1
      %s158 = scalar_select %p157, %s18, 1
      %s159 = smul.addr %s158, 20
      %s160 = smul.addr %s159, 4
      %s161 = scalar_lea.vmem %s0, %s160
      %p162 = pneg %p47
      %p163 = pneg %p44
      %p164 = pneg %p68
      %p165 = pneg %p65
      %p166 = pneg %p89
      %p167 = pneg %p86
      %p168 = pneg %p117
      %p169 = pneg %p114
      %p170 = scmp.lt.s32.totalorder %s18, 1
      %s171 = scalar_select %p170, %s18, 1
      %p172 = scmp.lt.s32.totalorder %s19, 3
      %s173 = scalar_select %p172, %s19, 3
      %s174 = smul.addr %s171, 4
      %s175 = sadd.s32 %s173, %s174
      %s176 = smul.addr %s175, 2
      %s177 = scalar_lea.vmem %s3, %s176
      %p178 = scmp.lt.s32.totalorder %s18, 1
      %s179 = scalar_select %p178, %s18, 1
      %s180 = smul.addr %s179, 20
      %s181 = smul.addr %s180, 4
      %s182 = scalar_lea.vmem %s0, %s181
      %p183 = scmp.lt.s32.totalorder %s18, 1
      %s184 = scalar_select %p183, %s18, 1
      %p185 = scmp.lt.s32.totalorder %s19, 3
      %s186 = scalar_select %p185, %s19, 3
      %s187 = smul.addr %s184, 4
      %s188 = sadd.s32 %s186, %s187
      %s189 = smul.addr %s188, 2
      %s190 = scalar_lea.vmem %s3, %s189
      %s192 = smul.u32 %s19, 2
      %s193 = smul.u32 %s192, 2
      %s194 = smul.addr %s193, 4
      %s195 = scalar_lea.vmem %s182, %s194
      %v196 = vld [vmem:[%s195] sm:$0x77]
      %v197 = vld [vmem:[%s1] sm:$0xf]
      %v198 = vld [vmem:[%s1 + $0x4] sm:$0xf]
      %v199 = vld [vmem:[%s1 + $0x8] sm:$0xf]
      %v200 = vld [vmem:[%s1 + $0xc] sm:$0xf]
      %v201 = vld [vmem:[%s1 + $0x10] sm:$0xf]
      %v202 = vld [vmem:[%s1 + $0x14] sm:$0xf]
      %v203 = vld [vmem:[%s1 + $0x18] sm:$0xf]
      %v204 = vld [vmem:[%s1 + $0x1c] sm:$0xf]
      %v205 = vld [vmem:[%s1 + $0x20] sm:$0xf]
      %v206 = vld [vmem:[%s1 + $0x24] sm:$0xf]
      %v207 = vld [vmem:[%s1 + $0x28] sm:$0xf]
      %v208 = vld [vmem:[%s1 + $0x2c] sm:$0xf]
      %v209 = vld [vmem:[%s1 + $0x30] sm:$0xf]
      %v210 = vld [vmem:[%s1 + $0x34] sm:$0xf]
      %v211 = vld [vmem:[%s1 + $0x38] sm:$0xf]
      %v212 = vld [vmem:[%s1 + $0x3c] sm:$0xf]
      %s213 = scalar_lea.vmem %s1, 64
      %v214 = vld [vmem:[%s213] sm:$0xf]
      %v215 = vld [vmem:[%s213 + $0x4] sm:$0xf]
      %v216 = vld [vmem:[%s213 + $0x8] sm:$0xf]
      %v217 = vld [vmem:[%s213 + $0xc] sm:$0xf]
      %v218 = vld [vmem:[%s213 + $0x10] sm:$0xf]
      %v219 = vld [vmem:[%s213 + $0x14] sm:$0xf]
      %v220 = vld [vmem:[%s213 + $0x18] sm:$0xf]
      %v221 = vld [vmem:[%s213 + $0x1c] sm:$0xf]
      %v222 = vld [vmem:[%s213 + $0x20] sm:$0xf]
      %v223 = vld [vmem:[%s213 + $0x24] sm:$0xf]
      %v224 = vld [vmem:[%s213 + $0x28] sm:$0xf]
      %v225 = vld [vmem:[%s213 + $0x2c] sm:$0xf]
      %v226 = vld [vmem:[%s213 + $0x30] sm:$0xf]
      %v227 = vld [vmem:[%s213 + $0x34] sm:$0xf]
      %v228 = vld [vmem:[%s213 + $0x38] sm:$0xf]
      %v229 = vld [vmem:[%s213 + $0x3c] sm:$0xf]
      %v231 = vunpack.c.h.b16 %v196
      %v232 = vpack.c.b16 %v231, %v231
      %v250 = vunpack.c.l.b16 %v214
      %v251 = vunpack.c.l.b16 %v215
      %v252 = vunpack.c.l.b16 %v216
      %v253 = vunpack.c.l.b16 %v217
      %v254 = vunpack.c.l.b16 %v218
      %v255 = vunpack.c.l.b16 %v219
      %v256 = vunpack.c.l.b16 %v220
      %v257 = vunpack.c.l.b16 %v221
      %v258 = vunpack.c.l.b16 %v222
      %v259 = vunpack.c.l.b16 %v223
      %v260 = vunpack.c.l.b16 %v224
      %v261 = vunpack.c.l.b16 %v225
      %v262 = vunpack.c.l.b16 %v226
      %v263 = vunpack.c.l.b16 %v227
      %v264 = vunpack.c.l.b16 %v228
      %v265 = vunpack.c.l.b16 %v229
      %v266 = vpack.c.b16 %v251, %v250
      %v267 = vpack.c.b16 %v253, %v252
      %v268 = vpack.c.b16 %v255, %v254
      %v269 = vpack.c.b16 %v257, %v256
      %v270 = vpack.c.b16 %v259, %v258
      %v271 = vpack.c.b16 %v261, %v260
      %v272 = vpack.c.b16 %v263, %v262
      %v273 = vpack.c.b16 %v265, %v264
      %282 = vmatprep.subr.bf16.mxu0 0
      %283 = vmatpush1.bf16.msra.mxu0 %v273
      %284 = vmatprep.subr.bf16.mxu0 0
      %285 = vmatpush1.bf16.msra.mxu0 %v272
      %286 = vmatprep.subr.bf16.mxu0 0
      %287 = vmatpush1.bf16.msra.mxu0 %v271
      %288 = vmatprep.subr.bf16.mxu0 0
      %289 = vmatpush1.bf16.msra.mxu0 %v270
      %290 = vmatprep.subr.bf16.mxu0 0
      %291 = vmatpush1.bf16.msra.mxu0 %v269
      %292 = vmatprep.subr.bf16.mxu0 0
      %293 = vmatpush1.bf16.msra.mxu0 %v268
      %294 = vmatprep.subr.bf16.mxu0 0
      %295 = vmatpush1.bf16.msra.mxu0 %v267
      %296 = vmatprep.subr.bf16.mxu0 0
      %297 = vmatpush1.bf16.msra.mxu0 %v266
      %298 = vmatprep.subr.bf16.mxu0 0
      %299 = vmatpush2.bf16.msra.mxu0 0
      %300 = vmatprep.subr.bf16.mxu0 0
      %301 = vmatpush2.bf16.msra.mxu0 0
      %302 = vmatprep.subr.bf16.mxu0 0
      %303 = vmatpush2.bf16.msra.mxu0 0
      %304 = vmatprep.subr.bf16.mxu0 0
      %305 = vmatpush2.bf16.msra.mxu0 0
      %306 = vmatprep.subr.bf16.mxu0 0
      %307 = vmatpush2.bf16.msra.mxu0 0
      %308 = vmatprep.subr.bf16.mxu0 0
      %309 = vmatpush2.bf16.msra.mxu0 0
      %310 = vmatprep.subr.bf16.mxu0 0
      %311 = vmatpush2.bf16.msra.mxu0 0
      %312 = vmatprep.subr.bf16.mxu0 0
      %313 = vmatpush2.bf16.msra.mxu0 0
      %314 = vmatprep.mubr.bf16.mxu0 0
      %315 = vmatmul.mubr.bf16.gmra.mxu0 %v232
      %v316 = vpop.f32.mrf.mxu0
      %v317 = vadd.f32 0.0, %v316
      %v318 = vpop.f32.mrf.mxu0
      %v319 = vpop.f32.mrf.mxu0
      %v320 = vpop.f32.mrf.mxu0
      %321 = vdwg.mxu0
      %v338 = vunpack.c.l.b16 %v197
      %v339 = vunpack.c.l.b16 %v198
      %v340 = vunpack.c.l.b16 %v199
      %v341 = vunpack.c.l.b16 %v200
      %v342 = vunpack.c.l.b16 %v201
      %v343 = vunpack.c.l.b16 %v202
      %v344 = vunpack.c.l.b16 %v203
      %v345 = vunpack.c.l.b16 %v204
      %v346 = vunpack.c.l.b16 %v205
      %v347 = vunpack.c.l.b16 %v206
      %v348 = vunpack.c.l.b16 %v207
      %v349 = vunpack.c.l.b16 %v208
      %v350 = vunpack.c.l.b16 %v209
      %v351 = vunpack.c.l.b16 %v210
      %v352 = vunpack.c.l.b16 %v211
      %v353 = vunpack.c.l.b16 %v212
      %v354 = vpack.c.b16 %v339, %v338
      %v355 = vpack.c.b16 %v341, %v340
      %v356 = vpack.c.b16 %v343, %v342
      %v357 = vpack.c.b16 %v345, %v344
      %v358 = vpack.c.b16 %v347, %v346
      %v359 = vpack.c.b16 %v349, %v348
      %v360 = vpack.c.b16 %v351, %v350
      %v361 = vpack.c.b16 %v353, %v352
      %370 = vmatprep.subr.bf16.mxu0 0
      %371 = vmatpush1.bf16.msra.mxu0 %v361
      %372 = vmatprep.subr.bf16.mxu0 0
      %373 = vmatpush1.bf16.msra.mxu0 %v360
      %374 = vmatprep.subr.bf16.mxu0 0
      %375 = vmatpush1.bf16.msra.mxu0 %v359
      %376 = vmatprep.subr.bf16.mxu0 0
      %377 = vmatpush1.bf16.msra.mxu0 %v358
      %378 = vmatprep.subr.bf16.mxu0 0
      %379 = vmatpush1.bf16.msra.mxu0 %v357
      %380 = vmatprep.subr.bf16.mxu0 0
      %381 = vmatpush1.bf16.msra.mxu0 %v356
      %382 = vmatprep.subr.bf16.mxu0 0
      %383 = vmatpush1.bf16.msra.mxu0 %v355
      %384 = vmatprep.subr.bf16.mxu0 0
      %385 = vmatpush1.bf16.msra.mxu0 %v354
      %386 = vmatprep.subr.bf16.mxu0 0
      %387 = vmatpush2.bf16.msra.mxu0 0
      %388 = vmatprep.subr.bf16.mxu0 0
      %389 = vmatpush2.bf16.msra.mxu0 0
      %390 = vmatprep.subr.bf16.mxu0 0
      %391 = vmatpush2.bf16.msra.mxu0 0
      %392 = vmatprep.subr.bf16.mxu0 0
      %393 = vmatpush2.bf16.msra.mxu0 0
      %394 = vmatprep.subr.bf16.mxu0 0
      %395 = vmatpush2.bf16.msra.mxu0 0
      %396 = vmatprep.subr.bf16.mxu0 0
      %397 = vmatpush2.bf16.msra.mxu0 0
      %398 = vmatprep.subr.bf16.mxu0 0
      %399 = vmatpush2.bf16.msra.mxu0 0
      %400 = vmatprep.subr.bf16.mxu0 0
      %401 = vmatpush2.bf16.msra.mxu0 0
      %402 = vmatprep.mubr.bf16.mxu0 0
      %403 = vmatmul.mubr.bf16.gmra.mxu0 %v196
      %v404 = vpop.f32.mrf.mxu0
      %v405 = vadd.f32 %v317, %v404
      %v406 = vpop.f32.mrf.mxu0
      %v407 = vpop.f32.mrf.mxu0
      %v408 = vpop.f32.mrf.mxu0
      %409 = vdwg.mxu0
      %s410 = scalar_lea.vmem %s1, 128
      %v411 = vld [vmem:[%s410] sm:$0xf]
      %v412 = vld [vmem:[%s410 + $0x4] sm:$0xf]
      %v413 = vld [vmem:[%s410 + $0x8] sm:$0xf]
      %v414 = vld [vmem:[%s410 + $0xc] sm:$0xf]
      %v415 = vld [vmem:[%s410 + $0x10] sm:$0xf]
      %v416 = vld [vmem:[%s410 + $0x14] sm:$0xf]
      %v417 = vld [vmem:[%s410 + $0x18] sm:$0xf]
      %v418 = vld [vmem:[%s410 + $0x1c] sm:$0xf]
      %v419 = vld [vmem:[%s410 + $0x20] sm:$0xf]
      %v420 = vld [vmem:[%s410 + $0x24] sm:$0xf]
      %v421 = vld [vmem:[%s410 + $0x28] sm:$0xf]
      %v422 = vld [vmem:[%s410 + $0x2c] sm:$0xf]
      %v423 = vld [vmem:[%s410 + $0x30] sm:$0xf]
      %v424 = vld [vmem:[%s410 + $0x34] sm:$0xf]
      %v425 = vld [vmem:[%s410 + $0x38] sm:$0xf]
      %v426 = vld [vmem:[%s410 + $0x3c] sm:$0xf]
      %v427 = vunpack.c.l.b16 %v196
      %v428 = vpack.c.b16 %v427, %v427
      %v430 = vshrl.u32 %v428, 16
      %v432 = vshll.u32 %v428, 16
      %v434 = vrot.slane %v432, 1
      %v435 = vor.u32 %v430, %v434
      %v453 = vunpack.c.l.b16 %v411
      %v454 = vunpack.c.l.b16 %v412
      %v455 = vunpack.c.l.b16 %v413
      %v456 = vunpack.c.l.b16 %v414
      %v457 = vunpack.c.l.b16 %v415
      %v458 = vunpack.c.l.b16 %v416
      %v459 = vunpack.c.l.b16 %v417
      %v460 = vunpack.c.l.b16 %v418
      %v461 = vunpack.c.l.b16 %v419
      %v462 = vunpack.c.l.b16 %v420
      %v463 = vunpack.c.l.b16 %v421
      %v464 = vunpack.c.l.b16 %v422
      %v465 = vunpack.c.l.b16 %v423
      %v466 = vunpack.c.l.b16 %v424
      %v467 = vunpack.c.l.b16 %v425
      %v468 = vunpack.c.l.b16 %v426
      %v469 = vpack.c.b16 %v454, %v453
      %v470 = vpack.c.b16 %v456, %v455
      %v471 = vpack.c.b16 %v458, %v457
      %v472 = vpack.c.b16 %v460, %v459
      %v473 = vpack.c.b16 %v462, %v461
      %v474 = vpack.c.b16 %v464, %v463
      %v475 = vpack.c.b16 %v466, %v465
      %v476 = vpack.c.b16 %v468, %v467
      %485 = vmatprep.subr.bf16.mxu0 0
      %486 = vmatpush1.bf16.msra.mxu0 %v476
      %487 = vmatprep.subr.bf16.mxu0 0
      %488 = vmatpush1.bf16.msra.mxu0 %v475
      %489 = vmatprep.subr.bf16.mxu0 0
      %490 = vmatpush1.bf16.msra.mxu0 %v474
      %491 = vmatprep.subr.bf16.mxu0 0
      %492 = vmatpush1.bf16.msra.mxu0 %v473
      %493 = vmatprep.subr.bf16.mxu0 0
      %494 = vmatpush1.bf16.msra.mxu0 %v472
      %495 = vmatprep.subr.bf16.mxu0 0
      %496 = vmatpush1.bf16.msra.mxu0 %v471
      %497 = vmatprep.subr.bf16.mxu0 0
      %498 = vmatpush1.bf16.msra.mxu0 %v470
      %499 = vmatprep.subr.bf16.mxu0 0
      %500 = vmatpush1.bf16.msra.mxu0 %v469
      %501 = vmatprep.subr.bf16.mxu0 0
      %502 = vmatpush2.bf16.msra.mxu0 0
      %503 = vmatprep.subr.bf16.mxu0 0
      %504 = vmatpush2.bf16.msra.mxu0 0
      %505 = vmatprep.subr.bf16.mxu0 0
      %506 = vmatpush2.bf16.msra.mxu0 0
      %507 = vmatprep.subr.bf16.mxu0 0
      %508 = vmatpush2.bf16.msra.mxu0 0
      %509 = vmatprep.subr.bf16.mxu0 0
      %510 = vmatpush2.bf16.msra.mxu0 0
      %511 = vmatprep.subr.bf16.mxu0 0
      %512 = vmatpush2.bf16.msra.mxu0 0
      %513 = vmatprep.subr.bf16.mxu0 0
      %514 = vmatpush2.bf16.msra.mxu0 0
      %515 = vmatprep.subr.bf16.mxu0 0
      %516 = vmatpush2.bf16.msra.mxu0 0
      %517 = vmatprep.mubr.bf16.mxu0 0
      %518 = vmatmul.mubr.bf16.gmra.mxu0 %v435
      %v519 = vpop.f32.mrf.mxu0
      %v520 = vadd.f32 0.0, %v519
      %v521 = vpop.f32.mrf.mxu0
      %v522 = vpop.f32.mrf.mxu0
      %v523 = vpop.f32.mrf.mxu0
      %524 = vdwg.mxu0
      %v525 = vadd.f32 %v405, %v520
      %s526 = sadd.s32 %s192, 1
      %s527 = smul.u32 %s526, 2
      %s528 = smul.addr %s527, 4
      %s529 = scalar_lea.vmem %s182, %s528
      %v530 = vld [vmem:[%s529] sm:$0x77]
      %s531 = scalar_lea.vmem %s1, 192
      %v532 = vld [vmem:[%s531] sm:$0xf]
      %v533 = vld [vmem:[%s531 + $0x4] sm:$0xf]
      %v534 = vld [vmem:[%s531 + $0x8] sm:$0xf]
      %v535 = vld [vmem:[%s531 + $0xc] sm:$0xf]
      %v536 = vld [vmem:[%s531 + $0x10] sm:$0xf]
      %v537 = vld [vmem:[%s531 + $0x14] sm:$0xf]
      %v538 = vld [vmem:[%s531 + $0x18] sm:$0xf]
      %v539 = vld [vmem:[%s531 + $0x1c] sm:$0xf]
      %v540 = vld [vmem:[%s531 + $0x20] sm:$0xf]
      %v541 = vld [vmem:[%s531 + $0x24] sm:$0xf]
      %v542 = vld [vmem:[%s531 + $0x28] sm:$0xf]
      %v543 = vld [vmem:[%s531 + $0x2c] sm:$0xf]
      %v544 = vld [vmem:[%s531 + $0x30] sm:$0xf]
      %v545 = vld [vmem:[%s531 + $0x34] sm:$0xf]
      %v546 = vld [vmem:[%s531 + $0x38] sm:$0xf]
      %v547 = vld [vmem:[%s531 + $0x3c] sm:$0xf]
      %v564 = vunpack.c.l.b16 %v532
      %v565 = vunpack.c.l.b16 %v533
      %v566 = vunpack.c.l.b16 %v534
      %v567 = vunpack.c.l.b16 %v535
      %v568 = vunpack.c.l.b16 %v536
      %v569 = vunpack.c.l.b16 %v537
      %v570 = vunpack.c.l.b16 %v538
      %v571 = vunpack.c.l.b16 %v539
      %v572 = vunpack.c.l.b16 %v540
      %v573 = vunpack.c.l.b16 %v541
      %v574 = vunpack.c.l.b16 %v542
      %v575 = vunpack.c.l.b16 %v543
      %v576 = vunpack.c.l.b16 %v544
      %v577 = vunpack.c.l.b16 %v545
      %v578 = vunpack.c.l.b16 %v546
      %v579 = vunpack.c.l.b16 %v547
      %v580 = vpack.c.b16 %v565, %v564
      %v581 = vpack.c.b16 %v567, %v566
      %v582 = vpack.c.b16 %v569, %v568
      %v583 = vpack.c.b16 %v571, %v570
      %v584 = vpack.c.b16 %v573, %v572
      %v585 = vpack.c.b16 %v575, %v574
      %v586 = vpack.c.b16 %v577, %v576
      %v587 = vpack.c.b16 %v579, %v578
      %596 = vmatprep.subr.bf16.mxu0 0
      %597 = vmatpush1.bf16.msra.mxu0 %v587
      %598 = vmatprep.subr.bf16.mxu0 0
      %599 = vmatpush1.bf16.msra.mxu0 %v586
      %600 = vmatprep.subr.bf16.mxu0 0
      %601 = vmatpush1.bf16.msra.mxu0 %v585
      %602 = vmatprep.subr.bf16.mxu0 0
      %603 = vmatpush1.bf16.msra.mxu0 %v584
      %604 = vmatprep.subr.bf16.mxu0 0
      %605 = vmatpush1.bf16.msra.mxu0 %v583
      %606 = vmatprep.subr.bf16.mxu0 0
      %607 = vmatpush1.bf16.msra.mxu0 %v582
      %608 = vmatprep.subr.bf16.mxu0 0
      %609 = vmatpush1.bf16.msra.mxu0 %v581
      %610 = vmatprep.subr.bf16.mxu0 0
      %611 = vmatpush1.bf16.msra.mxu0 %v580
      %612 = vmatprep.subr.bf16.mxu0 0
      %613 = vmatpush2.bf16.msra.mxu0 0
      %614 = vmatprep.subr.bf16.mxu0 0
      %615 = vmatpush2.bf16.msra.mxu0 0
      %616 = vmatprep.subr.bf16.mxu0 0
      %617 = vmatpush2.bf16.msra.mxu0 0
      %618 = vmatprep.subr.bf16.mxu0 0
      %619 = vmatpush2.bf16.msra.mxu0 0
      %620 = vmatprep.subr.bf16.mxu0 0
      %621 = vmatpush2.bf16.msra.mxu0 0
      %622 = vmatprep.subr.bf16.mxu0 0
      %623 = vmatpush2.bf16.msra.mxu0 0
      %624 = vmatprep.subr.bf16.mxu0 0
      %625 = vmatpush2.bf16.msra.mxu0 0
      %626 = vmatprep.subr.bf16.mxu0 0
      %627 = vmatpush2.bf16.msra.mxu0 0
      %628 = vmatprep.mubr.bf16.mxu0 0
      %629 = vmatmul.mubr.bf16.gmra.mxu0 %v530
      %v630 = vpop.f32.mrf.mxu0
      %v631 = vadd.f32 0.0, %v630
      %v632 = vpop.f32.mrf.mxu0
      %v633 = vpop.f32.mrf.mxu0
      %v634 = vpop.f32.mrf.mxu0
      %635 = vdwg.mxu0
      %v636 = vadd.f32 %v525, %v631
      %s637 = scalar_lea.vmem %s1, 256
      %v638 = vld [vmem:[%s637] sm:$0xf]
      %v639 = vld [vmem:[%s637 + $0x4] sm:$0xf]
      %v640 = vld [vmem:[%s637 + $0x8] sm:$0xf]
      %v641 = vld [vmem:[%s637 + $0xc] sm:$0xf]
      %v642 = vld [vmem:[%s637 + $0x10] sm:$0xf]
      %v643 = vld [vmem:[%s637 + $0x14] sm:$0xf]
      %v644 = vld [vmem:[%s637 + $0x18] sm:$0xf]
      %v645 = vld [vmem:[%s637 + $0x1c] sm:$0xf]
      %v646 = vld [vmem:[%s637 + $0x20] sm:$0xf]
      %v647 = vld [vmem:[%s637 + $0x24] sm:$0xf]
      %v648 = vld [vmem:[%s637 + $0x28] sm:$0xf]
      %v649 = vld [vmem:[%s637 + $0x2c] sm:$0xf]
      %v650 = vld [vmem:[%s637 + $0x30] sm:$0xf]
      %v651 = vld [vmem:[%s637 + $0x34] sm:$0xf]
      %v652 = vld [vmem:[%s637 + $0x38] sm:$0xf]
      %v653 = vld [vmem:[%s637 + $0x3c] sm:$0xf]
      %v655 = vunpack.c.h.b16 %v530
      %v656 = vpack.c.b16 %v655, %v655
      %v674 = vunpack.c.l.b16 %v638
      %v675 = vunpack.c.l.b16 %v639
      %v676 = vunpack.c.l.b16 %v640
      %v677 = vunpack.c.l.b16 %v641
      %v678 = vunpack.c.l.b16 %v642
      %v679 = vunpack.c.l.b16 %v643
      %v680 = vunpack.c.l.b16 %v644
      %v681 = vunpack.c.l.b16 %v645
      %v682 = vunpack.c.l.b16 %v646
      %v683 = vunpack.c.l.b16 %v647
      %v684 = vunpack.c.l.b16 %v648
      %v685 = vunpack.c.l.b16 %v649
      %v686 = vunpack.c.l.b16 %v650
      %v687 = vunpack.c.l.b16 %v651
      %v688 = vunpack.c.l.b16 %v652
      %v689 = vunpack.c.l.b16 %v653
      %v690 = vpack.c.b16 %v675, %v674
      %v691 = vpack.c.b16 %v677, %v676
      %v692 = vpack.c.b16 %v679, %v678
      %v693 = vpack.c.b16 %v681, %v680
      %v694 = vpack.c.b16 %v683, %v682
      %v695 = vpack.c.b16 %v685, %v684
      %v696 = vpack.c.b16 %v687, %v686
      %v697 = vpack.c.b16 %v689, %v688
      %706 = vmatprep.subr.bf16.mxu0 0
      %707 = vmatpush1.bf16.msra.mxu0 %v697
      %708 = vmatprep.subr.bf16.mxu0 0
      %709 = vmatpush1.bf16.msra.mxu0 %v696
      %710 = vmatprep.subr.bf16.mxu0 0
      %711 = vmatpush1.bf16.msra.mxu0 %v695
      %712 = vmatprep.subr.bf16.mxu0 0
      %713 = vmatpush1.bf16.msra.mxu0 %v694
      %714 = vmatprep.subr.bf16.mxu0 0
      %715 = vmatpush1.bf16.msra.mxu0 %v693
      %716 = vmatprep.subr.bf16.mxu0 0
      %717 = vmatpush1.bf16.msra.mxu0 %v692
      %718 = vmatprep.subr.bf16.mxu0 0
      %719 = vmatpush1.bf16.msra.mxu0 %v691
      %720 = vmatprep.subr.bf16.mxu0 0
      %721 = vmatpush1.bf16.msra.mxu0 %v690
      %722 = vmatprep.subr.bf16.mxu0 0
      %723 = vmatpush2.bf16.msra.mxu0 0
      %724 = vmatprep.subr.bf16.mxu0 0
      %725 = vmatpush2.bf16.msra.mxu0 0
      %726 = vmatprep.subr.bf16.mxu0 0
      %727 = vmatpush2.bf16.msra.mxu0 0
      %728 = vmatprep.subr.bf16.mxu0 0
      %729 = vmatpush2.bf16.msra.mxu0 0
      %730 = vmatprep.subr.bf16.mxu0 0
      %731 = vmatpush2.bf16.msra.mxu0 0
      %732 = vmatprep.subr.bf16.mxu0 0
      %733 = vmatpush2.bf16.msra.mxu0 0
      %734 = vmatprep.subr.bf16.mxu0 0
      %735 = vmatpush2.bf16.msra.mxu0 0
      %736 = vmatprep.subr.bf16.mxu0 0
      %737 = vmatpush2.bf16.msra.mxu0 0
      %738 = vmatprep.mubr.bf16.mxu0 0
      %739 = vmatmul.mubr.bf16.gmra.mxu0 %v656
      %v740 = vpop.f32.mrf.mxu0
      %v741 = vadd.f32 0.0, %v740
      %v742 = vpop.f32.mrf.mxu0
      %v743 = vpop.f32.mrf.mxu0
      %v744 = vpop.f32.mrf.mxu0
      %745 = vdwg.mxu0
      %v746 = vadd.f32 %v636, %v741
      %s747 = scalar_lea.vmem %s1, 320
      %v748 = vld [vmem:[%s747] sm:$0xf]
      %v749 = vld [vmem:[%s747 + $0x4] sm:$0xf]
      %v750 = vld [vmem:[%s747 + $0x8] sm:$0xf]
      %v751 = vld [vmem:[%s747 + $0xc] sm:$0xf]
      %v752 = vld [vmem:[%s747 + $0x10] sm:$0xf]
      %v753 = vld [vmem:[%s747 + $0x14] sm:$0xf]
      %v754 = vld [vmem:[%s747 + $0x18] sm:$0xf]
      %v755 = vld [vmem:[%s747 + $0x1c] sm:$0xf]
      %v756 = vld [vmem:[%s747 + $0x20] sm:$0xf]
      %v757 = vld [vmem:[%s747 + $0x24] sm:$0xf]
      %v758 = vld [vmem:[%s747 + $0x28] sm:$0xf]
      %v759 = vld [vmem:[%s747 + $0x2c] sm:$0xf]
      %v760 = vld [vmem:[%s747 + $0x30] sm:$0xf]
      %v761 = vld [vmem:[%s747 + $0x34] sm:$0xf]
      %v762 = vld [vmem:[%s747 + $0x38] sm:$0xf]
      %v763 = vld [vmem:[%s747 + $0x3c] sm:$0xf]
      %v764 = vunpack.c.l.b16 %v530
      %v765 = vpack.c.b16 %v764, %v764
      %v767 = vshrl.u32 %v765, 16
      %v769 = vshll.u32 %v765, 16
      %v771 = vrot.slane %v769, 1
      %v772 = vor.u32 %v767, %v771
      %v790 = vunpack.c.l.b16 %v748
      %v791 = vunpack.c.l.b16 %v749
      %v792 = vunpack.c.l.b16 %v750
      %v793 = vunpack.c.l.b16 %v751
      %v794 = vunpack.c.l.b16 %v752
      %v795 = vunpack.c.l.b16 %v753
      %v796 = vunpack.c.l.b16 %v754
      %v797 = vunpack.c.l.b16 %v755
      %v798 = vunpack.c.l.b16 %v756
      %v799 = vunpack.c.l.b16 %v757
      %v800 = vunpack.c.l.b16 %v758
      %v801 = vunpack.c.l.b16 %v759
      %v802 = vunpack.c.l.b16 %v760
      %v803 = vunpack.c.l.b16 %v761
      %v804 = vunpack.c.l.b16 %v762
      %v805 = vunpack.c.l.b16 %v763
      %v806 = vpack.c.b16 %v791, %v790
      %v807 = vpack.c.b16 %v793, %v792
      %v808 = vpack.c.b16 %v795, %v794
      %v809 = vpack.c.b16 %v797, %v796
      %v810 = vpack.c.b16 %v799, %v798
      %v811 = vpack.c.b16 %v801, %v800
      %v812 = vpack.c.b16 %v803, %v802
      %v813 = vpack.c.b16 %v805, %v804
      %822 = vmatprep.subr.bf16.mxu0 0
      %823 = vmatpush1.bf16.msra.mxu0 %v813
      %824 = vmatprep.subr.bf16.mxu0 0
      %825 = vmatpush1.bf16.msra.mxu0 %v812
      %826 = vmatprep.subr.bf16.mxu0 0
      %827 = vmatpush1.bf16.msra.mxu0 %v811
      %828 = vmatprep.subr.bf16.mxu0 0
      %829 = vmatpush1.bf16.msra.mxu0 %v810
      %830 = vmatprep.subr.bf16.mxu0 0
      %831 = vmatpush1.bf16.msra.mxu0 %v809
      %832 = vmatprep.subr.bf16.mxu0 0
      %833 = vmatpush1.bf16.msra.mxu0 %v808
      %834 = vmatprep.subr.bf16.mxu0 0
      %835 = vmatpush1.bf16.msra.mxu0 %v807
      %836 = vmatprep.subr.bf16.mxu0 0
      %837 = vmatpush1.bf16.msra.mxu0 %v806
      %838 = vmatprep.subr.bf16.mxu0 0
      %839 = vmatpush2.bf16.msra.mxu0 0
      %840 = vmatprep.subr.bf16.mxu0 0
      %841 = vmatpush2.bf16.msra.mxu0 0
      %842 = vmatprep.subr.bf16.mxu0 0
      %843 = vmatpush2.bf16.msra.mxu0 0
      %844 = vmatprep.subr.bf16.mxu0 0
      %845 = vmatpush2.bf16.msra.mxu0 0
      %846 = vmatprep.subr.bf16.mxu0 0
      %847 = vmatpush2.bf16.msra.mxu0 0
      %848 = vmatprep.subr.bf16.mxu0 0
      %849 = vmatpush2.bf16.msra.mxu0 0
      %850 = vmatprep.subr.bf16.mxu0 0
      %851 = vmatpush2.bf16.msra.mxu0 0
      %852 = vmatprep.subr.bf16.mxu0 0
      %853 = vmatpush2.bf16.msra.mxu0 0
      %854 = vmatprep.mubr.bf16.mxu0 0
      %855 = vmatmul.mubr.bf16.gmra.mxu0 %v772
      %v856 = vpop.f32.mrf.mxu0
      %v857 = vadd.f32 0.0, %v856
      %v858 = vpop.f32.mrf.mxu0
      %v859 = vpop.f32.mrf.mxu0
      %v860 = vpop.f32.mrf.mxu0
      %861 = vdwg.mxu0
      %v862 = vadd.f32 %v746, %v857
      %s863 = sadd.s32 %s192, 2
      %s864 = smul.u32 %s863, 2
      %s865 = smul.addr %s864, 4
      %s866 = scalar_lea.vmem %s182, %s865
      %v867 = vld [vmem:[%s866] sm:$0x77]
      %s868 = scalar_lea.vmem %s1, 384
      %v869 = vld [vmem:[%s868] sm:$0xf]
      %v870 = vld [vmem:[%s868 + $0x4] sm:$0xf]
      %v871 = vld [vmem:[%s868 + $0x8] sm:$0xf]
      %v872 = vld [vmem:[%s868 + $0xc] sm:$0xf]
      %v873 = vld [vmem:[%s868 + $0x10] sm:$0xf]
      %v874 = vld [vmem:[%s868 + $0x14] sm:$0xf]
      %v875 = vld [vmem:[%s868 + $0x18] sm:$0xf]
      %v876 = vld [vmem:[%s868 + $0x1c] sm:$0xf]
      %v877 = vld [vmem:[%s868 + $0x20] sm:$0xf]
      %v878 = vld [vmem:[%s868 + $0x24] sm:$0xf]
      %v879 = vld [vmem:[%s868 + $0x28] sm:$0xf]
      %v880 = vld [vmem:[%s868 + $0x2c] sm:$0xf]
      %v881 = vld [vmem:[%s868 + $0x30] sm:$0xf]
      %v882 = vld [vmem:[%s868 + $0x34] sm:$0xf]
      %v883 = vld [vmem:[%s868 + $0x38] sm:$0xf]
      %v884 = vld [vmem:[%s868 + $0x3c] sm:$0xf]
      %v901 = vunpack.c.l.b16 %v869
      %v902 = vunpack.c.l.b16 %v870
      %v903 = vunpack.c.l.b16 %v871
      %v904 = vunpack.c.l.b16 %v872
      %v905 = vunpack.c.l.b16 %v873
      %v906 = vunpack.c.l.b16 %v874
      %v907 = vunpack.c.l.b16 %v875
      %v908 = vunpack.c.l.b16 %v876
      %v909 = vunpack.c.l.b16 %v877
      %v910 = vunpack.c.l.b16 %v878
      %v911 = vunpack.c.l.b16 %v879
      %v912 = vunpack.c.l.b16 %v880
      %v913 = vunpack.c.l.b16 %v881
      %v914 = vunpack.c.l.b16 %v882
      %v915 = vunpack.c.l.b16 %v883
      %v916 = vunpack.c.l.b16 %v884
      %v917 = vpack.c.b16 %v902, %v901
      %v918 = vpack.c.b16 %v904, %v903
      %v919 = vpack.c.b16 %v906, %v905
      %v920 = vpack.c.b16 %v908, %v907
      %v921 = vpack.c.b16 %v910, %v909
      %v922 = vpack.c.b16 %v912, %v911
      %v923 = vpack.c.b16 %v914, %v913
      %v924 = vpack.c.b16 %v916, %v915
      %933 = vmatprep.subr.bf16.mxu0 0
      %934 = vmatpush1.bf16.msra.mxu0 %v924
      %935 = vmatprep.subr.bf16.mxu0 0
      %936 = vmatpush1.bf16.msra.mxu0 %v923
      %937 = vmatprep.subr.bf16.mxu0 0
      %938 = vmatpush1.bf16.msra.mxu0 %v922
      %939 = vmatprep.subr.bf16.mxu0 0
      %940 = vmatpush1.bf16.msra.mxu0 %v921
      %941 = vmatprep.subr.bf16.mxu0 0
      %942 = vmatpush1.bf16.msra.mxu0 %v920
      %943 = vmatprep.subr.bf16.mxu0 0
      %944 = vmatpush1.bf16.msra.mxu0 %v919
      %945 = vmatprep.subr.bf16.mxu0 0
      %946 = vmatpush1.bf16.msra.mxu0 %v918
      %947 = vmatprep.subr.bf16.mxu0 0
      %948 = vmatpush1.bf16.msra.mxu0 %v917
      %949 = vmatprep.subr.bf16.mxu0 0
      %950 = vmatpush2.bf16.msra.mxu0 0
      %951 = vmatprep.subr.bf16.mxu0 0
      %952 = vmatpush2.bf16.msra.mxu0 0
      %953 = vmatprep.subr.bf16.mxu0 0
      %954 = vmatpush2.bf16.msra.mxu0 0
      %955 = vmatprep.subr.bf16.mxu0 0
      %956 = vmatpush2.bf16.msra.mxu0 0
      %957 = vmatprep.subr.bf16.mxu0 0
      %958 = vmatpush2.bf16.msra.mxu0 0
      %959 = vmatprep.subr.bf16.mxu0 0
      %960 = vmatpush2.bf16.msra.mxu0 0
      %961 = vmatprep.subr.bf16.mxu0 0
      %962 = vmatpush2.bf16.msra.mxu0 0
      %963 = vmatprep.subr.bf16.mxu0 0
      %964 = vmatpush2.bf16.msra.mxu0 0
      %965 = vmatprep.mubr.bf16.mxu0 0
      %966 = vmatmul.mubr.bf16.gmra.mxu0 %v867
      %v967 = vpop.f32.mrf.mxu0
      %v968 = vadd.f32 0.0, %v967
      %v969 = vpop.f32.mrf.mxu0
      %v970 = vpop.f32.mrf.mxu0
      %v971 = vpop.f32.mrf.mxu0
      %972 = vdwg.mxu0
      %v973 = vadd.f32 %v862, %v968
      %s974 = scalar_lea.vmem %s1, 448
      %v975 = vld [vmem:[%s974] sm:$0xf]
      %v976 = vld [vmem:[%s974 + $0x4] sm:$0xf]
      %v977 = vld [vmem:[%s974 + $0x8] sm:$0xf]
      %v978 = vld [vmem:[%s974 + $0xc] sm:$0xf]
      %v979 = vld [vmem:[%s974 + $0x10] sm:$0xf]
      %v980 = vld [vmem:[%s974 + $0x14] sm:$0xf]
      %v981 = vld [vmem:[%s974 + $0x18] sm:$0xf]
      %v982 = vld [vmem:[%s974 + $0x1c] sm:$0xf]
      %v983 = vld [vmem:[%s974 + $0x20] sm:$0xf]
      %v984 = vld [vmem:[%s974 + $0x24] sm:$0xf]
      %v985 = vld [vmem:[%s974 + $0x28] sm:$0xf]
      %v986 = vld [vmem:[%s974 + $0x2c] sm:$0xf]
      %v987 = vld [vmem:[%s974 + $0x30] sm:$0xf]
      %v988 = vld [vmem:[%s974 + $0x34] sm:$0xf]
      %v989 = vld [vmem:[%s974 + $0x38] sm:$0xf]
      %v990 = vld [vmem:[%s974 + $0x3c] sm:$0xf]
      %v992 = vunpack.c.h.b16 %v867
      %v993 = vpack.c.b16 %v992, %v992
      %v1011 = vunpack.c.l.b16 %v975
      %v1012 = vunpack.c.l.b16 %v976
      %v1013 = vunpack.c.l.b16 %v977
      %v1014 = vunpack.c.l.b16 %v978
      %v1015 = vunpack.c.l.b16 %v979
      %v1016 = vunpack.c.l.b16 %v980
      %v1017 = vunpack.c.l.b16 %v981
      %v1018 = vunpack.c.l.b16 %v982
      %v1019 = vunpack.c.l.b16 %v983
      %v1020 = vunpack.c.l.b16 %v984
      %v1021 = vunpack.c.l.b16 %v985
      %v1022 = vunpack.c.l.b16 %v986
      %v1023 = vunpack.c.l.b16 %v987
      %v1024 = vunpack.c.l.b16 %v988
      %v1025 = vunpack.c.l.b16 %v989
      %v1026 = vunpack.c.l.b16 %v990
      %v1027 = vpack.c.b16 %v1012, %v1011
      %v1028 = vpack.c.b16 %v1014, %v1013
      %v1029 = vpack.c.b16 %v1016, %v1015
      %v1030 = vpack.c.b16 %v1018, %v1017
      %v1031 = vpack.c.b16 %v1020, %v1019
      %v1032 = vpack.c.b16 %v1022, %v1021
      %v1033 = vpack.c.b16 %v1024, %v1023
      %v1034 = vpack.c.b16 %v1026, %v1025
      %1043 = vmatprep.subr.bf16.mxu0 0
      %1044 = vmatpush1.bf16.msra.mxu0 %v1034
      %1045 = vmatprep.subr.bf16.mxu0 0
      %1046 = vmatpush1.bf16.msra.mxu0 %v1033
      %1047 = vmatprep.subr.bf16.mxu0 0
      %1048 = vmatpush1.bf16.msra.mxu0 %v1032
      %1049 = vmatprep.subr.bf16.mxu0 0
      %1050 = vmatpush1.bf16.msra.mxu0 %v1031
      %1051 = vmatprep.subr.bf16.mxu0 0
      %1052 = vmatpush1.bf16.msra.mxu0 %v1030
      %1053 = vmatprep.subr.bf16.mxu0 0
      %1054 = vmatpush1.bf16.msra.mxu0 %v1029
      %1055 = vmatprep.subr.bf16.mxu0 0
      %1056 = vmatpush1.bf16.msra.mxu0 %v1028
      %1057 = vmatprep.subr.bf16.mxu0 0
      %1058 = vmatpush1.bf16.msra.mxu0 %v1027
      %1059 = vmatprep.subr.bf16.mxu0 0
      %1060 = vmatpush2.bf16.msra.mxu0 0
      %1061 = vmatprep.subr.bf16.mxu0 0
      %1062 = vmatpush2.bf16.msra.mxu0 0
      %1063 = vmatprep.subr.bf16.mxu0 0
      %1064 = vmatpush2.bf16.msra.mxu0 0
      %1065 = vmatprep.subr.bf16.mxu0 0
      %1066 = vmatpush2.bf16.msra.mxu0 0
      %1067 = vmatprep.subr.bf16.mxu0 0
      %1068 = vmatpush2.bf16.msra.mxu0 0
      %1069 = vmatprep.subr.bf16.mxu0 0
      %1070 = vmatpush2.bf16.msra.mxu0 0
      %1071 = vmatprep.subr.bf16.mxu0 0
      %1072 = vmatpush2.bf16.msra.mxu0 0
      %1073 = vmatprep.subr.bf16.mxu0 0
      %1074 = vmatpush2.bf16.msra.mxu0 0
      %1075 = vmatprep.mubr.bf16.mxu0 0
      %1076 = vmatmul.mubr.bf16.gmra.mxu0 %v993
      %v1077 = vpop.f32.mrf.mxu0
      %v1078 = vadd.f32 0.0, %v1077
      %v1079 = vpop.f32.mrf.mxu0
      %v1080 = vpop.f32.mrf.mxu0
      %v1081 = vpop.f32.mrf.mxu0
      %1082 = vdwg.mxu0
      %v1083 = vadd.f32 %v973, %v1078
      %s1084 = scalar_lea.vmem %s1, 512
      %v1085 = vld [vmem:[%s1084] sm:$0xf]
      %v1086 = vld [vmem:[%s1084 + $0x4] sm:$0xf]
      %v1087 = vld [vmem:[%s1084 + $0x8] sm:$0xf]
      %v1088 = vld [vmem:[%s1084 + $0xc] sm:$0xf]
      %v1089 = vld [vmem:[%s1084 + $0x10] sm:$0xf]
      %v1090 = vld [vmem:[%s1084 + $0x14] sm:$0xf]
      %v1091 = vld [vmem:[%s1084 + $0x18] sm:$0xf]
      %v1092 = vld [vmem:[%s1084 + $0x1c] sm:$0xf]
      %v1093 = vld [vmem:[%s1084 + $0x20] sm:$0xf]
      %v1094 = vld [vmem:[%s1084 + $0x24] sm:$0xf]
      %v1095 = vld [vmem:[%s1084 + $0x28] sm:$0xf]
      %v1096 = vld [vmem:[%s1084 + $0x2c] sm:$0xf]
      %v1097 = vld [vmem:[%s1084 + $0x30] sm:$0xf]
      %v1098 = vld [vmem:[%s1084 + $0x34] sm:$0xf]
      %v1099 = vld [vmem:[%s1084 + $0x38] sm:$0xf]
      %v1100 = vld [vmem:[%s1084 + $0x3c] sm:$0xf]
      %v1101 = vunpack.c.l.b16 %v867
      %v1102 = vpack.c.b16 %v1101, %v1101
      %v1104 = vshrl.u32 %v1102, 16
      %v1106 = vshll.u32 %v1102, 16
      %v1108 = vrot.slane %v1106, 1
      %v1109 = vor.u32 %v1104, %v1108
      %v1127 = vunpack.c.l.b16 %v1085
      %v1128 = vunpack.c.l.b16 %v1086
      %v1129 = vunpack.c.l.b16 %v1087
      %v1130 = vunpack.c.l.b16 %v1088
      %v1131 = vunpack.c.l.b16 %v1089
      %v1132 = vunpack.c.l.b16 %v1090
      %v1133 = vunpack.c.l.b16 %v1091
      %v1134 = vunpack.c.l.b16 %v1092
      %v1135 = vunpack.c.l.b16 %v1093
      %v1136 = vunpack.c.l.b16 %v1094
      %v1137 = vunpack.c.l.b16 %v1095
      %v1138 = vunpack.c.l.b16 %v1096
      %v1139 = vunpack.c.l.b16 %v1097
      %v1140 = vunpack.c.l.b16 %v1098
      %v1141 = vunpack.c.l.b16 %v1099
      %v1142 = vunpack.c.l.b16 %v1100
      %v1143 = vpack.c.b16 %v1128, %v1127
      %v1144 = vpack.c.b16 %v1130, %v1129
      %v1145 = vpack.c.b16 %v1132, %v1131
      %v1146 = vpack.c.b16 %v1134, %v1133
      %v1147 = vpack.c.b16 %v1136, %v1135
      %v1148 = vpack.c.b16 %v1138, %v1137
      %v1149 = vpack.c.b16 %v1140, %v1139
      %v1150 = vpack.c.b16 %v1142, %v1141
      %1159 = vmatprep.subr.bf16.mxu0 0
      %1160 = vmatpush1.bf16.msra.mxu0 %v1150
      %1161 = vmatprep.subr.bf16.mxu0 0
      %1162 = vmatpush1.bf16.msra.mxu0 %v1149
      %1163 = vmatprep.subr.bf16.mxu0 0
      %1164 = vmatpush1.bf16.msra.mxu0 %v1148
      %1165 = vmatprep.subr.bf16.mxu0 0
      %1166 = vmatpush1.bf16.msra.mxu0 %v1147
      %1167 = vmatprep.subr.bf16.mxu0 0
      %1168 = vmatpush1.bf16.msra.mxu0 %v1146
      %1169 = vmatprep.subr.bf16.mxu0 0
      %1170 = vmatpush1.bf16.msra.mxu0 %v1145
      %1171 = vmatprep.subr.bf16.mxu0 0
      %1172 = vmatpush1.bf16.msra.mxu0 %v1144
      %1173 = vmatprep.subr.bf16.mxu0 0
      %1174 = vmatpush1.bf16.msra.mxu0 %v1143
      %1175 = vmatprep.subr.bf16.mxu0 0
      %1176 = vmatpush2.bf16.msra.mxu0 0
      %1177 = vmatprep.subr.bf16.mxu0 0
      %1178 = vmatpush2.bf16.msra.mxu0 0
      %1179 = vmatprep.subr.bf16.mxu0 0
      %1180 = vmatpush2.bf16.msra.mxu0 0
      %1181 = vmatprep.subr.bf16.mxu0 0
      %1182 = vmatpush2.bf16.msra.mxu0 0
      %1183 = vmatprep.subr.bf16.mxu0 0
      %1184 = vmatpush2.bf16.msra.mxu0 0
      %1185 = vmatprep.subr.bf16.mxu0 0
      %1186 = vmatpush2.bf16.msra.mxu0 0
      %1187 = vmatprep.subr.bf16.mxu0 0
      %1188 = vmatpush2.bf16.msra.mxu0 0
      %1189 = vmatprep.subr.bf16.mxu0 0
      %1190 = vmatpush2.bf16.msra.mxu0 0
      %1191 = vmatprep.mubr.bf16.mxu0 0
      %1192 = vmatmul.mubr.bf16.gmra.mxu0 %v1109
      %v1193 = vpop.f32.mrf.mxu0
      %v1194 = vadd.f32 0.0, %v1193
      %v1195 = vpop.f32.mrf.mxu0
      %v1196 = vpop.f32.mrf.mxu0
      %v1197 = vpop.f32.mrf.mxu0
      %1198 = vdwg.mxu0
      %v1199 = vadd.f32 %v1083, %v1194
      %v1200 = vld [vmem:[%s2] sm:$0x1]
      %v1202 = vlaneseq
      %v1203 = vshrl.u32 %v1202, 7
      %v1204 = vsub.s32 0, %v1203
      %v1205 = vrot.slane %v1200, %v1204
      %v1207 = vadd.f32 %v1199, %v1205
      %v1208 = vmax.f32 %v1207, 0.0
      %v1209 = vpack.c.bf16 %v1208, %v1208
      %1210 = vst [vmem:[%s190] sm:$0x3] %v1209
      %p1211 = scmp.lt.s32.totalorder %s18, 1
      %s1212 = scalar_select %p1211, %s18, 1
      %p1213 = scmp.lt.s32.totalorder %s19, 3
      %s1214 = scalar_select %p1213, %s19, 3
      %s1215 = smul.addr %s1212, 4
      %s1216 = sadd.s32 %s1214, %s1215
      %s1217 = smul.addr %s1216, 2
      %s1218 = scalar_lea.vmem %s3, %s1217
      // Predicated region
      $region33: #{branch_forward.11} parent=31 // pred_check
        %p1219 = pneg %p114
      $region34: #{branch_forward.11} parent=31 // pred_check_branch
        %1221 = sbr.rel (%p1219) target = $region36
      $region35: #{branch_forward.11} parent=31 // pred_region
        _
      $region36: #{branch_forward.11} parent=31 // pred_fallthru
        _
    $region32: #{branch_forward.11} parent=5 // pred_fallthru
      _
    %p1222 = scmp.le.s32.totalorder 2, %s9
    // Predicated region
    $region37: #{branch_forward.11} parent=5 // pred_check
      %p1223 = pneg %p1222
    $region38: #{branch_forward.11} parent=5 // pred_check_branch
      %1225 = sbr.rel (%p1223) target = $region40
    $region39: #{branch_forward.11} parent=5 // pred_region
      %s1226 = ssub.s32 %s9, 2
      // Predicated region
      $region41: #{branch_forward.11} parent=39 // pred_check
        %p1227 = pneg %p120
      $region42: #{branch_forward.11} parent=39 // pred_check_branch
        %1229 = sbr.rel (%p1227) target = $region44
      $region43: #{branch_forward.11} parent=39 // pred_region
        %p1230 = scmp.lt.s32.totalorder %s20, 1
        %s1231 = scalar_select %p1230, %s20, 1
        %p1232 = scmp.lt.s32.totalorder %s21, 3
        %s1233 = scalar_select %p1232, %s21, 3
        %s1234 = smul.addr %s1231, 4
        %s1235 = sadd.s32 %s1233, %s1234
        %s1236 = smul.addr %s1235, 2
        %s1237 = scalar_lea.vmem %s3, %s1236
      $region44: #{branch_forward.11} parent=39 // pred_fallthru
        _
    $region40: #{branch_forward.11} parent=5 // pred_fallthru
      _
  $region6: #{branch_forward.11} parent=0 // loop_footer
    %s13 = sadd.s32 1, %s9
  $region7: #{branch_forward.11} parent=0 // loop_footer_branch
    %8 = sbr.rel target = $region3
  $region8: #{branch_forward.11} parent=0 // loop_exit
    _

// kernel: branch_forward.14
$region0: #{branch_forward.14}
  #allocation0 [shape = 'u32[]', space=smem, size = 0x4, offset = 0x4, fixed_abs, tag = 'smem constant byte address 0x4 - core index']
  #allocation1 [shape = 'u32[144,128]{1,0:T(1,128)}', space=vmem, size = 0x12000, scoped, tag = 'internal scratch']
  %s0 = inlined_call_operand.vmem [shape: bf16[2,4,512], index: 0, kind: input, shape index: {}]
  %s1 = inlined_call_operand.vmem [shape: f32[8,4], index: 1, kind: input, shape index: {}]
  %s2 = inlined_call_operand.vmem [shape: bf16[2,8,1024], index: 2, kind: input, shape index: {}]
  %s3 = inlined_call_operand.vmem [shape: bf16[2,8,1024], index: 3, kind: output, shape index: {}]
  %s4 = sld [smem:[#allocation0]]
  $region45: #{branch_forward.14} parent=0
    _
  %s6 = ssub.s32 1, %s4
  %s7 = scalar_select 0, %s6, %s4
  loop: start=0, step=1, limit=4
  $region2: #{branch_forward.14} parent=0 // loop_pre_header
    _
  $region3: #{branch_forward.14} parent=0 // loop_header
    %s9 = sphi 0, %s13
    %p10 = scmp.ge.s32.totalorder %s9, 4
    %s19 = sphi 0, %s21
    %s22 = sphi 0, %s19
    %s23 = sphi 0, %s22
    %s39 = sphi 0, %s23
    %s43 = sphi 0, %s43
    %s45 = sphi 0, %s43
    %s46 = sphi 0, %s45
    %s60 = sphi 0, %s46
    %s66 = sphi 0, %s68
    %s69 = sphi 0, %s66
    %s70 = sphi 0, %s69
    %s86 = sphi 0, %s70
    %s92 = sphi 0, %s94
    %s95 = sphi 0, %s92
    %s96 = sphi 0, %s95
    %s112 = sphi 0, %s96
  $region4: #{branch_forward.14} parent=0 // loop_header_branch
    %12 = sbr.rel (%p10) target = $region8
  $region5: #{branch_forward.14} parent=0 // loop_body
    %s14 = ssub.s32 %s9, 1
    %s15 = ssub.s32 %s9, 2
    %s16 = sadd.s32 %s9, 1
    %s17 = ssub.s32 %s9, %s16
    %p18 = scmp.eq.s32.totalorder %s17, 0
    %s20 = sadd.s32 %s19, 1
    %s21 = scalar_select %p18, %s19, %s20
    %p24 = pneg %p18
    %p25 = scmp.eq.s32.totalorder %s9, 1
    %p26 = por %p24, %p25
    %p27 = scmp.ne.s32.totalorder %s19, %s22
    %p28 = scmp.eq.s32.totalorder %s9, 0
    %p29 = por %p27, %p28
    %p30 = scmp.ne.s32.totalorder %s19, %s22
    %p31 = scmp.eq.s32.totalorder %s14, 1
    %p32 = por %p30, %p31
    %p33 = scmp.ne.s32.totalorder %s22, %s23
    %p34 = scmp.eq.s32.totalorder %s14, 0
    %p35 = por %p33, %p34
    %p36 = scmp.ne.s32.totalorder %s22, %s23
    %p37 = scmp.eq.s32.totalorder %s15, 1
    %p38 = por %p36, %p37
    %p40 = scmp.ne.s32.totalorder %s23, %s39
    %p41 = scmp.eq.s32.totalorder %s15, 0
    %p42 = por %p40, %p41
    %s44 = sadd.s32 %s43, 1
    %p47 = scmp.eq.s32.totalorder %s9, 1
    %p48 = scmp.ne.s32.totalorder %s43, %s45
    %p49 = scmp.eq.s32.totalorder %s9, 0
    %p50 = por %p48, %p49
    %p51 = scmp.ne.s32.totalorder %s43, %s45
    %p52 = scmp.eq.s32.totalorder %s14, 1
    %p53 = por %p51, %p52
    %p54 = scmp.ne.s32.totalorder %s45, %s46
    %p55 = scmp.eq.s32.totalorder %s14, 0
    %p56 = por %p54, %p55
    %p57 = scmp.ne.s32.totalorder %s45, %s46
    %p58 = scmp.eq.s32.totalorder %s15, 1
    %p59 = por %p57, %p58
    %p61 = scmp.ne.s32.totalorder %s46, %s60
    %p62 = scmp.eq.s32.totalorder %s15, 0
    %p63 = por %p61, %p62
    %s64 = ssub.s32 %s9, %s16
    %p65 = scmp.eq.s32.totalorder %s64, 0
    %s67 = sadd.s32 %s66, 1
    %s68 = scalar_select %p65, %s66, %s67
    %p71 = pneg %p65
    %p72 = scmp.eq.s32.totalorder %s9, 1
    %p73 = por %p71, %p72
    %p74 = scmp.ne.s32.totalorder %s66, %s69
    %p75 = scmp.eq.s32.totalorder %s9, 0
    %p76 = por %p74, %p75
    %p77 = scmp.ne.s32.totalorder %s66, %s69
    %p78 = scmp.eq.s32.totalorder %s14, 1
    %p79 = por %p77, %p78
    %p80 = scmp.ne.s32.totalorder %s69, %s70
    %p81 = scmp.eq.s32.totalorder %s14, 0
    %p82 = por %p80, %p81
    %p83 = scmp.ne.s32.totalorder %s69, %s70
    %p84 = scmp.eq.s32.totalorder %s15, 1
    %p85 = por %p83, %p84
    %p87 = scmp.ne.s32.totalorder %s70, %s86
    %p88 = scmp.eq.s32.totalorder %s15, 0
    %p89 = por %p87, %p88
    %s90 = ssub.s32 %s9, %s16
    %p91 = scmp.eq.s32.totalorder %s90, 0
    %s93 = sadd.s32 %s92, 1
    %s94 = scalar_select %p91, %s92, %s93
    %p97 = pneg %p91
    %p98 = scmp.eq.s32.totalorder %s9, 1
    %p99 = por %p97, %p98
    %p100 = scmp.ne.s32.totalorder %s92, %s95
    %p101 = scmp.eq.s32.totalorder %s9, 0
    %p102 = por %p100, %p101
    %p103 = scmp.ne.s32.totalorder %s92, %s95
    %p104 = scmp.eq.s32.totalorder %s14, 1
    %p105 = por %p103, %p104
    %p106 = scmp.ne.s32.totalorder %s95, %s96
    %p107 = scmp.eq.s32.totalorder %s14, 0
    %p108 = por %p106, %p107
    %p109 = scmp.ne.s32.totalorder %s95, %s96
    %p110 = scmp.eq.s32.totalorder %s15, 1
    %p111 = por %p109, %p110
    %p113 = scmp.ne.s32.totalorder %s96, %s112
    %p114 = scmp.eq.s32.totalorder %s15, 0
    %p115 = por %p113, %p114
    %p116 = scmp.le.s32.totalorder 1, %s9
    %p117 = scmp.lt.s32.totalorder %s9, 3
    %p118 = pnand %p116, %p117
    %p119 = pneg %p118
    // Predicated region
    $region9: #{branch_forward.14} parent=5 // pred_check
      _
    $region10: #{branch_forward.14} parent=5 // pred_check_branch
      %121 = sbr.rel (%p118) target = $region12
    $region11: #{branch_forward.14} parent=5 // pred_region
      %s122 = ssub.s32 %s9, 1
      // Predicated region
      $region13: #{branch_forward.14} parent=11 // pred_check
        %p123 = pneg %p56
      $region14: #{branch_forward.14} parent=11 // pred_check_branch
        %125 = sbr.rel (%p123) target = $region16
      $region15: #{branch_forward.14} parent=11 // pred_region
        _
      $region16: #{branch_forward.14} parent=11 // pred_fallthru
        _
    $region12: #{branch_forward.14} parent=5 // pred_fallthru
      _
    %p126 = scmp.lt.s32.totalorder %s9, 2
    // Predicated region
    $region17: #{branch_forward.14} parent=5 // pred_check
      %p127 = pneg %p126
    $region18: #{branch_forward.14} parent=5 // pred_check_branch
      %129 = sbr.rel (%p127) target = $region20
    $region19: #{branch_forward.14} parent=5 // pred_region
      // Predicated region
      $region21: #{branch_forward.14} parent=19 // pred_check
        %p130 = pneg %p29
      $region22: #{branch_forward.14} parent=19 // pred_check_branch
        %132 = sbr.rel (%p130) target = $region24
      $region23: #{branch_forward.14} parent=19 // pred_region
        %p133 = scmp.lt.s32.totalorder %s9, 1
        %s134 = scalar_select %p133, %s9, 1
        %s135 = smul.addr %s134, 4
        %s136 = smul.addr %s135, 2
        %s137 = scalar_lea.vmem %s0, %s136
      $region24: #{branch_forward.14} parent=19 // pred_fallthru
        _
      // Predicated region
      $region25: #{branch_forward.14} parent=19 // pred_check
        %p138 = pneg %p76
      $region26: #{branch_forward.14} parent=19 // pred_check_branch
        %140 = sbr.rel (%p138) target = $region28
      $region27: #{branch_forward.14} parent=19 // pred_region
        %p141 = scmp.lt.s32.totalorder %s9, 1
        %s142 = scalar_select %p141, %s9, 1
        %s143 = smul.addr %s142, 8
        %s144 = smul.addr %s143, 4
        %s145 = scalar_lea.vmem %s2, %s144
      $region28: #{branch_forward.14} parent=19 // pred_fallthru
        _
    $region20: #{branch_forward.14} parent=5 // pred_fallthru
      _
    %p146 = scmp.le.s32.totalorder 1, %s9
    %p147 = scmp.lt.s32.totalorder %s9, 3
    %p148 = pnand %p146, %p147
    %p149 = pneg %p148
    // Predicated region
    $region29: #{branch_forward.14} parent=5 // pred_check
      _
    $region30: #{branch_forward.14} parent=5 // pred_check_branch
      %151 = sbr.rel (%p148) target = $region32
    $region31: #{branch_forward.14} parent=5 // pred_region
      %s152 = ssub.s32 %s9, 1
      %p153 = scmp.lt.s32.totalorder %s14, 1
      %s154 = scalar_select %p153, %s14, 1
      %s155 = smul.addr %s154, 4
      %s156 = smul.addr %s155, 2
      %s157 = scalar_lea.vmem %s0, %s156
      %p158 = pneg %p35
      %p159 = pneg %p32
      %p160 = pneg %p56
      %p161 = pneg %p53
      %p162 = scmp.lt.s32.totalorder %s14, 1
      %s163 = scalar_select %p162, %s14, 1
      %s164 = smul.addr %s163, 8
      %s165 = smul.addr %s164, 4
      %s166 = scalar_lea.vmem %s2, %s165
      %p167 = pneg %p82
      %p168 = pneg %p79
      %p169 = pneg %p108
      %p170 = pneg %p105
      %p171 = scmp.lt.s32.totalorder %s14, 1
      %s172 = scalar_select %p171, %s14, 1
      %s173 = smul.addr %s172, 8
      %s174 = smul.addr %s173, 4
      %s175 = scalar_lea.vmem %s3, %s174
      %p176 = scmp.lt.s32.totalorder %s14, 1
      %s177 = scalar_select %p176, %s14, 1
      %s178 = smul.addr %s177, 4
      %s179 = smul.addr %s178, 2
      %s180 = scalar_lea.vmem %s0, %s179
      %p181 = scmp.lt.s32.totalorder %s14, 1
      %s182 = scalar_select %p181, %s14, 1
      %s183 = smul.addr %s182, 8
      %s184 = smul.addr %s183, 4
      %s185 = scalar_lea.vmem %s2, %s184
      %p186 = scmp.lt.s32.totalorder %s14, 1
      %s187 = scalar_select %p186, %s14, 1
      %s188 = smul.addr %s187, 8
      %s189 = smul.addr %s188, 4
      %s190 = scalar_lea.vmem %s3, %s189
      %v191 = vld [vmem:[%s180] sm:$0xff]
      %v192 = vunpack.c.l.bf16 %v191
      %v193 = vunpack.c.h.bf16 %v191
      %v194 = vld [vmem:[%s1] sm:$0xff]
      %v197 = vcombine.high %v192, %v192
      %v198 = vcombine.high %v193, %v193
      %vm199 = vcmask 31744
      %v201 = vsel %vm199, %v194, 0
      %vm203 = vcmask 1043456
      %v204 = vsel %vm203, %v192, 0
      %v206 = vsel %vm203, %v197, 0
      %v208 = vsel %vm203, %v193, 0
      %v210 = vsel %vm203, %v198, 0
      %212 = vmatprep.subr.mxu0 0.0
      %213 = vmatpush1.msra.mxu0 0.0
      %214 = vmatprep.subr.mxu0 0.0
      %215 = vmatpush1.msra.mxu0 0.0
      %216 = vmatprep.subr.mxu0 0.0
      %217 = vmatpush1.msra.mxu0 0.0
      %218 = vmatprep.subr.mxu0 0.0
      %219 = vmatpush1.msra.mxu0 0.0
      %220 = vmatprep.subr.mxu0 0.0
      %221 = vmatpush1.msra.mxu0 0.0
      %222 = vmatprep.subr.mxu0 0.0
      %223 = vmatpush1.msra.mxu0 0.0
      %224 = vmatprep.subr.mxu0 0.0
      %225 = vmatpush1.msra.mxu0 0.0
      %226 = vmatprep.subr.mxu0 0.0
      %227 = vmatpush1.msra.mxu0 0.0
      %228 = vmatprep.subr.mxu0 0.0
      %229 = vmatpush1.msra.mxu0 0.0
      %230 = vmatprep.subr.mxu0 0.0
      %231 = vmatpush1.msra.mxu0 0.0
      %232 = vmatprep.subr.mxu0 0.0
      %233 = vmatpush1.msra.mxu0 0.0
      %234 = vmatprep.subr.mxu0 0.0
      %235 = vmatpush1.msra.mxu0 0.0
      %236 = vmatprep.subr.mxu0 0.0
      %237 = vmatpush1.msra.mxu0 0.0
      %238 = vmatprep.subr.mxu0 0.0
      %239 = vmatpush1.msra.mxu0 0.0
      %240 = vmatprep.subr.mxu0 0.0
      %241 = vmatpush1.msra.mxu0 0.0
      %242 = vmatprep.subr.mxu0 %v206
      %243 = vmatpush1.msra.mxu0 %v204
      %244 = vmatprep.subr.mxu0 0.0
      %245 = vmatpush2.msra.mxu0 0.0
      %246 = vmatprep.subr.mxu0 0.0
      %247 = vmatpush2.msra.mxu0 0.0
      %248 = vmatprep.subr.mxu0 0.0
      %249 = vmatpush2.msra.mxu0 0.0
      %250 = vmatprep.subr.mxu0 0.0
      %251 = vmatpush2.msra.mxu0 0.0
      %252 = vmatprep.subr.mxu0 0.0
      %253 = vmatpush2.msra.mxu0 0.0
      %254 = vmatprep.subr.mxu0 0.0
      %255 = vmatpush2.msra.mxu0 0.0
      %256 = vmatprep.subr.mxu0 0.0
      %257 = vmatpush2.msra.mxu0 0.0
      %258 = vmatprep.subr.mxu0 0.0
      %259 = vmatpush2.msra.mxu0 0.0
      %260 = vmatprep.subr.mxu0 0.0
      %261 = vmatpush2.msra.mxu0 0.0
      %262 = vmatprep.subr.mxu0 0.0
      %263 = vmatpush2.msra.mxu0 0.0
      %264 = vmatprep.subr.mxu0 0.0
      %265 = vmatpush2.msra.mxu0 0.0
      %266 = vmatprep.subr.mxu0 0.0
      %267 = vmatpush2.msra.mxu0 0.0
      %268 = vmatprep.subr.mxu0 0.0
      %269 = vmatpush2.msra.mxu0 0.0
      %270 = vmatprep.subr.mxu0 0.0
      %271 = vmatpush2.msra.mxu0 0.0
      %272 = vmatprep.subr.mxu0 0.0
      %273 = vmatpush2.msra.mxu0 0.0
      %274 = vmatprep.subr.mxu0 0.0
      %275 = vmatpush2.msra.mxu0 0.0
      %276 = vmatprep.mubr.f32.mxu0 0.0
      %277 = vmatmul.mubr.f32.gmra.mxu0 %v201
      %v278 = vpop.f32.mrf.mxu0
      %v279 = vadd.f32 0.0, %v278
      %v280 = vpop.f32.mrf.mxu0
      %v281 = vadd.f32 0.0, %v280
      %282 = vdwg.mxu0
      %283 = vmatprep.subr.mxu0 0.0
      %284 = vmatpush1.msra.mxu0 0.0
      %285 = vmatprep.subr.mxu0 0.0
      %286 = vmatpush1.msra.mxu0 0.0
      %287 = vmatprep.subr.mxu0 0.0
      %288 = vmatpush1.msra.mxu0 0.0
      %289 = vmatprep.subr.mxu0 0.0
      %290 = vmatpush1.msra.mxu0 0.0
      %291 = vmatprep.subr.mxu0 0.0
      %292 = vmatpush1.msra.mxu0 0.0
      %293 = vmatprep.subr.mxu0 0.0
      %294 = vmatpush1.msra.mxu0 0.0
      %295 = vmatprep.subr.mxu0 0.0
      %296 = vmatpush1.msra.mxu0 0.0
      %297 = vmatprep.subr.mxu0 0.0
      %298 = vmatpush1.msra.mxu0 0.0
      %299 = vmatprep.subr.mxu0 0.0
      %300 = vmatpush1.msra.mxu0 0.0
      %301 = vmatprep.subr.mxu0 0.0
      %302 = vmatpush1.msra.mxu0 0.0
      %303 = vmatprep.subr.mxu0 0.0
      %304 = vmatpush1.msra.mxu0 0.0
      %305 = vmatprep.subr.mxu0 0.0
      %306 = vmatpush1.msra.mxu0 0.0
      %307 = vmatprep.subr.mxu0 0.0
      %308 = vmatpush1.msra.mxu0 0.0
      %309 = vmatprep.subr.mxu0 0.0
      %310 = vmatpush1.msra.mxu0 0.0
      %311 = vmatprep.subr.mxu0 0.0
      %312 = vmatpush1.msra.mxu0 0.0
      %313 = vmatprep.subr.mxu0 %v210
      %314 = vmatpush1.msra.mxu0 %v208
      %315 = vmatprep.subr.mxu0 0.0
      %316 = vmatpush2.msra.mxu0 0.0
      %317 = vmatprep.subr.mxu0 0.0
      %318 = vmatpush2.msra.mxu0 0.0
      %319 = vmatprep.subr.mxu0 0.0
      %320 = vmatpush2.msra.mxu0 0.0
      %321 = vmatprep.subr.mxu0 0.0
      %322 = vmatpush2.msra.mxu0 0.0
      %323 = vmatprep.subr.mxu0 0.0
      %324 = vmatpush2.msra.mxu0 0.0
      %325 = vmatprep.subr.mxu0 0.0
      %326 = vmatpush2.msra.mxu0 0.0
      %327 = vmatprep.subr.mxu0 0.0
      %328 = vmatpush2.msra.mxu0 0.0
      %329 = vmatprep.subr.mxu0 0.0
      %330 = vmatpush2.msra.mxu0 0.0
      %331 = vmatprep.subr.mxu0 0.0
      %332 = vmatpush2.msra.mxu0 0.0
      %333 = vmatprep.subr.mxu0 0.0
      %334 = vmatpush2.msra.mxu0 0.0
      %335 = vmatprep.subr.mxu0 0.0
      %336 = vmatpush2.msra.mxu0 0.0
      %337 = vmatprep.subr.mxu0 0.0
      %338 = vmatpush2.msra.mxu0 0.0
      %339 = vmatprep.subr.mxu0 0.0
      %340 = vmatpush2.msra.mxu0 0.0
      %341 = vmatprep.subr.mxu0 0.0
      %342 = vmatpush2.msra.mxu0 0.0
      %343 = vmatprep.subr.mxu0 0.0
      %344 = vmatpush2.msra.mxu0 0.0
      %345 = vmatprep.subr.mxu0 0.0
      %346 = vmatpush2.msra.mxu0 0.0
      %347 = vmatprep.mubr.f32.mxu0 0.0
      %348 = vmatmul.mubr.f32.gmra.mxu0 %v201
      %v349 = vpop.f32.mrf.mxu0
      %v350 = vadd.f32 0.0, %v349
      %v351 = vpop.f32.mrf.mxu0
      %v352 = vadd.f32 0.0, %v351
      %353 = vdwg.mxu0
      %v354 = vmul.f32 %v281, 0.0
      %v355 = vadd.f32 %v279, %v354
      %v356 = vmul.f32 %v279, 0.5714286
      %v357 = vmul.f32 %v281, 0.42857143
      %v358 = vadd.f32 %v356, %v357
      %v359 = vmul.f32 %v279, 0.14285715
      %v360 = vmul.f32 %v281, 0.85714287
      %v361 = vadd.f32 %v359, %v360
      %v362 = vmul.f32 %v281, 0.71428573
      %v363 = vmul.f32 %v350, 0.2857143
      %v364 = vadd.f32 %v362, %v363
      %v365 = vmul.f32 %v281, 0.2857143
      %v366 = vmul.f32 %v350, 0.71428573
      %v367 = vadd.f32 %v365, %v366
      %v368 = vmul.f32 %v350, 0.85714287
      %v369 = vmul.f32 %v352, 0.14285715
      %v370 = vadd.f32 %v368, %v369
      %v371 = vmul.f32 %v350, 0.42857143
      %v372 = vmul.f32 %v352, 0.5714286
      %v373 = vadd.f32 %v371, %v372
      %v374 = vmul.f32 %v352, 0.0
      %v375 = vadd.f32 %v352, %v374
      %v376 = vld [vmem:[%s185] sm:$0xff]
      %v377 = vld [vmem:[%s185 + $0x8] sm:$0xff]
      %v378 = vld [vmem:[%s185 + $0x10] sm:$0xff]
      %v379 = vld [vmem:[%s185 + $0x18] sm:$0xff]
      %v380 = vunpack.c.l.bf16 %v376
      %v381 = vunpack.c.h.bf16 %v376
      %v382 = vunpack.c.l.bf16 %v377
      %v383 = vunpack.c.h.bf16 %v377
      %v384 = vunpack.c.l.bf16 %v378
      %v385 = vunpack.c.h.bf16 %v378
      %v386 = vunpack.c.l.bf16 %v379
      %v387 = vunpack.c.h.bf16 %v379
      %v388 = vadd.f32 %v355, %v380
      %v389 = vadd.f32 %v358, %v381
      %v390 = vadd.f32 %v361, %v382
      %v391 = vadd.f32 %v364, %v383
      %v392 = vadd.f32 %v367, %v384
      %v393 = vadd.f32 %v370, %v385
      %v394 = vadd.f32 %v373, %v386
      %v395 = vadd.f32 %v375, %v387
      %v396 = vpack.c.bf16 %v388, %v388
      %v397 = vpack.c.bf16 %v389, %v389
      %v398 = vpack.c.bf16 %v390, %v390
      %v399 = vpack.c.bf16 %v391, %v391
      %v400 = vpack.c.bf16 %v392, %v392
      %v401 = vpack.c.bf16 %v393, %v393
      %v402 = vpack.c.bf16 %v394, %v394
      %v403 = vpack.c.bf16 %v395, %v395
      %v412 = vunpack.c.l.b16 %v396
      %v413 = vunpack.c.l.b16 %v397
      %v414 = vunpack.c.l.b16 %v398
      %v415 = vunpack.c.l.b16 %v399
      %v416 = vunpack.c.l.b16 %v400
      %v417 = vunpack.c.l.b16 %v401
      %v418 = vunpack.c.l.b16 %v402
      %v419 = vunpack.c.l.b16 %v403
      %v420 = vpack.c.b16 %v413, %v412
      %v421 = vpack.c.b16 %v415, %v414
      %v422 = vpack.c.b16 %v417, %v416
      %v423 = vpack.c.b16 %v419, %v418
      %428 = vst [vmem:[%s190] sm:$0xff] %v420
      %429 = vst [vmem:[%s190 + $0x8] sm:$0xff] %v421
      %430 = vst [vmem:[%s190 + $0x10] sm:$0xff] %v422
      %431 = vst [vmem:[%s190 + $0x18] sm:$0xff] %v423
      %p432 = scmp.lt.s32.totalorder %s14, 1
      %s433 = scalar_select %p432, %s14, 1
      %s434 = smul.addr %s433, 8
      %s435 = smul.addr %s434, 4
      %s436 = scalar_lea.vmem %s3, %s435
      // Predicated region
      $region33: #{branch_forward.14} parent=31 // pred_check
        %p437 = pneg %p105
      $region34: #{branch_forward.14} parent=31 // pred_check_branch
        %439 = sbr.rel (%p437) target = $region36
      $region35: #{branch_forward.14} parent=31 // pred_region
        _
      $region36: #{branch_forward.14} parent=31 // pred_fallthru
        _
    $region32: #{branch_forward.14} parent=5 // pred_fallthru
      _
    %p440 = scmp.le.s32.totalorder 2, %s9
    // Predicated region
    $region37: #{branch_forward.14} parent=5 // pred_check
      %p441 = pneg %p440
    $region38: #{branch_forward.14} parent=5 // pred_check_branch
      %443 = sbr.rel (%p441) target = $region40
    $region39: #{branch_forward.14} parent=5 // pred_region
      %s444 = ssub.s32 %s9, 2
      // Predicated region
      $region41: #{branch_forward.14} parent=39 // pred_check
        %p445 = pneg %p111
      $region42: #{branch_forward.14} parent=39 // pred_check_branch
        %447 = sbr.rel (%p445) target = $region44
      $region43: #{branch_forward.14} parent=39 // pred_region
        %p448 = scmp.lt.s32.totalorder %s15, 1
        %s449 = scalar_select %p448, %s15, 1
        %s450 = smul.addr %s449, 8
        %s451 = smul.addr %s450, 4
        %s452 = scalar_lea.vmem %s3, %s451
      $region44: #{branch_forward.14} parent=39 // pred_fallthru
        _
    $region40: #{branch_forward.14} parent=5 // pred_fallthru
      _
  $region6: #{branch_forward.14} parent=0 // loop_footer
    %s13 = sadd.s32 1, %s9
  $region7: #{branch_forward.14} parent=0 // loop_footer_branch
    %8 = sbr.rel target = $region3
  $region8: #{branch_forward.14} parent=0 // loop_exit
    _

// kernel: branch_forward.18
$region0: #{branch_forward.18}
  #allocation0 [shape = 'u32[]', space=smem, size = 0x4, offset = 0x4, fixed_abs, tag = 'smem constant byte address 0x4 - core index']
  #allocation1 [shape = 'u32[144,128]{1,0:T(1,128)}', space=vmem, size = 0x12000, scoped, tag = 'internal scratch']
  %s0 = inlined_call_operand.vmem [shape: bf16[2,8,1024], index: 0, kind: input, shape index: {}]
  %s1 = inlined_call_operand.vmem [shape: f32[16,8], index: 1, kind: input, shape index: {}]
  %s2 = inlined_call_operand.vmem [shape: f32[2,16,2048], index: 2, kind: output, shape index: {}]
  %s3 = sld [smem:[#allocation0]]
  $region41: #{branch_forward.18} parent=0
    _
  %s5 = ssub.s32 1, %s3
  %s6 = scalar_select 0, %s5, %s3
  loop: start=0, step=1, limit=4
  $region2: #{branch_forward.18} parent=0 // loop_pre_header
    _
  $region3: #{branch_forward.18} parent=0 // loop_header
    %s8 = sphi 0, %s12
    %p9 = scmp.ge.s32.totalorder %s8, 4
    %s18 = sphi 0, %s20
    %s21 = sphi 0, %s18
    %s22 = sphi 0, %s21
    %s38 = sphi 0, %s22
    %s42 = sphi 0, %s42
    %s44 = sphi 0, %s42
    %s45 = sphi 0, %s44
    %s59 = sphi 0, %s45
    %s65 = sphi 0, %s67
    %s68 = sphi 0, %s65
    %s69 = sphi 0, %s68
    %s85 = sphi 0, %s69
  $region4: #{branch_forward.18} parent=0 // loop_header_branch
    %11 = sbr.rel (%p9) target = $region8
  $region5: #{branch_forward.18} parent=0 // loop_body
    %s13 = ssub.s32 %s8, 1
    %s14 = ssub.s32 %s8, 2
    %s15 = sadd.s32 %s8, 1
    %s16 = ssub.s32 %s8, %s15
    %p17 = scmp.eq.s32.totalorder %s16, 0
    %s19 = sadd.s32 %s18, 1
    %s20 = scalar_select %p17, %s18, %s19
    %p23 = pneg %p17
    %p24 = scmp.eq.s32.totalorder %s8, 1
    %p25 = por %p23, %p24
    %p26 = scmp.ne.s32.totalorder %s18, %s21
    %p27 = scmp.eq.s32.totalorder %s8, 0
    %p28 = por %p26, %p27
    %p29 = scmp.ne.s32.totalorder %s18, %s21
    %p30 = scmp.eq.s32.totalorder %s13, 1
    %p31 = por %p29, %p30
    %p32 = scmp.ne.s32.totalorder %s21, %s22
    %p33 = scmp.eq.s32.totalorder %s13, 0
    %p34 = por %p32, %p33
    %p35 = scmp.ne.s32.totalorder %s21, %s22
    %p36 = scmp.eq.s32.totalorder %s14, 1
    %p37 = por %p35, %p36
    %p39 = scmp.ne.s32.totalorder %s22, %s38
    %p40 = scmp.eq.s32.totalorder %s14, 0
    %p41 = por %p39, %p40
    %s43 = sadd.s32 %s42, 1
    %p46 = scmp.eq.s32.totalorder %s8, 1
    %p47 = scmp.ne.s32.totalorder %s42, %s44
    %p48 = scmp.eq.s32.totalorder %s8, 0
    %p49 = por %p47, %p48
    %p50 = scmp.ne.s32.totalorder %s42, %s44
    %p51 = scmp.eq.s32.totalorder %s13, 1
    %p52 = por %p50, %p51
    %p53 = scmp.ne.s32.totalorder %s44, %s45
    %p54 = scmp.eq.s32.totalorder %s13, 0
    %p55 = por %p53, %p54
    %p56 = scmp.ne.s32.totalorder %s44, %s45
    %p57 = scmp.eq.s32.totalorder %s14, 1
    %p58 = por %p56, %p57
    %p60 = scmp.ne.s32.totalorder %s45, %s59
    %p61 = scmp.eq.s32.totalorder %s14, 0
    %p62 = por %p60, %p61
    %s63 = ssub.s32 %s8, %s15
    %p64 = scmp.eq.s32.totalorder %s63, 0
    %s66 = sadd.s32 %s65, 1
    %s67 = scalar_select %p64, %s65, %s66
    %p70 = pneg %p64
    %p71 = scmp.eq.s32.totalorder %s8, 1
    %p72 = por %p70, %p71
    %p73 = scmp.ne.s32.totalorder %s65, %s68
    %p74 = scmp.eq.s32.totalorder %s8, 0
    %p75 = por %p73, %p74
    %p76 = scmp.ne.s32.totalorder %s65, %s68
    %p77 = scmp.eq.s32.totalorder %s13, 1
    %p78 = por %p76, %p77
    %p79 = scmp.ne.s32.totalorder %s68, %s69
    %p80 = scmp.eq.s32.totalorder %s13, 0
    %p81 = por %p79, %p80
    %p82 = scmp.ne.s32.totalorder %s68, %s69
    %p83 = scmp.eq.s32.totalorder %s14, 1
    %p84 = por %p82, %p83
    %p86 = scmp.ne.s32.totalorder %s69, %s85
    %p87 = scmp.eq.s32.totalorder %s14, 0
    %p88 = por %p86, %p87
    %p89 = scmp.le.s32.totalorder 1, %s8
    %p90 = scmp.lt.s32.totalorder %s8, 3
    %p91 = pnand %p89, %p90
    %p92 = pneg %p91
    // Predicated region
    $region9: #{branch_forward.18} parent=5 // pred_check
      _
    $region10: #{branch_forward.18} parent=5 // pred_check_branch
      %94 = sbr.rel (%p91) target = $region12
    $region11: #{branch_forward.18} parent=5 // pred_region
      %s95 = ssub.s32 %s8, 1
      // Predicated region
      $region13: #{branch_forward.18} parent=11 // pred_check
        %p96 = pneg %p55
      $region14: #{branch_forward.18} parent=11 // pred_check_branch
        %98 = sbr.rel (%p96) target = $region16
      $region15: #{branch_forward.18} parent=11 // pred_region
        _
      $region16: #{branch_forward.18} parent=11 // pred_fallthru
        _
    $region12: #{branch_forward.18} parent=5 // pred_fallthru
      _
    %p99 = scmp.lt.s32.totalorder %s8, 2
    // Predicated region
    $region17: #{branch_forward.18} parent=5 // pred_check
      %p100 = pneg %p99
    $region18: #{branch_forward.18} parent=5 // pred_check_branch
      %102 = sbr.rel (%p100) target = $region20
    $region19: #{branch_forward.18} parent=5 // pred_region
      // Predicated region
      $region21: #{branch_forward.18} parent=19 // pred_check
        %p103 = pneg %p28
      $region22: #{branch_forward.18} parent=19 // pred_check_branch
        %105 = sbr.rel (%p103) target = $region24
      $region23: #{branch_forward.18} parent=19 // pred_region
        %p106 = scmp.lt.s32.totalorder %s8, 1
        %s107 = scalar_select %p106, %s8, 1
        %s108 = smul.addr %s107, 8
        %s109 = smul.addr %s108, 4
        %s110 = scalar_lea.vmem %s0, %s109
      $region24: #{branch_forward.18} parent=19 // pred_fallthru
        _
    $region20: #{branch_forward.18} parent=5 // pred_fallthru
      _
    %p111 = scmp.le.s32.totalorder 1, %s8
    %p112 = scmp.lt.s32.totalorder %s8, 3
    %p113 = pnand %p111, %p112
    %p114 = pneg %p113
    // Predicated region
    $region25: #{branch_forward.18} parent=5 // pred_check
      _
    $region26: #{branch_forward.18} parent=5 // pred_check_branch
      %116 = sbr.rel (%p113) target = $region28
    $region27: #{branch_forward.18} parent=5 // pred_region
      %s117 = ssub.s32 %s8, 1
      %p118 = scmp.lt.s32.totalorder %s13, 1
      %s119 = scalar_select %p118, %s13, 1
      %s120 = smul.addr %s119, 8
      %s121 = smul.addr %s120, 4
      %s122 = scalar_lea.vmem %s0, %s121
      %p123 = pneg %p34
      %p124 = pneg %p31
      %p125 = pneg %p55
      %p126 = pneg %p52
      %p127 = pneg %p81
      %p128 = pneg %p78
      %p129 = scmp.lt.s32.totalorder %s13, 1
      %s130 = scalar_select %p129, %s13, 1
      %s131 = smul.addr %s130, 32
      %s132 = smul.addr %s131, 8
      %s133 = scalar_lea.vmem %s2, %s132
      %p134 = scmp.lt.s32.totalorder %s13, 1
      %s135 = scalar_select %p134, %s13, 1
      %s136 = smul.addr %s135, 8
      %s137 = smul.addr %s136, 4
      %s138 = scalar_lea.vmem %s0, %s137
      %p139 = scmp.lt.s32.totalorder %s13, 1
      %s140 = scalar_select %p139, %s13, 1
      %s141 = smul.addr %s140, 32
      %s142 = smul.addr %s141, 8
      %s143 = scalar_lea.vmem %s2, %s142
      %v144 = vld [vmem:[%s138] sm:$0xff]
      %v145 = vld [vmem:[%s138 + $0x8] sm:$0xff]
      %v146 = vld [vmem:[%s138 + $0x10] sm:$0xff]
      %v147 = vld [vmem:[%s138 + $0x18] sm:$0xff]
      %v148 = vunpack.c.l.bf16 %v144
      %v149 = vunpack.c.h.bf16 %v144
      %v150 = vunpack.c.l.bf16 %v145
      %v151 = vunpack.c.h.bf16 %v145
      %v152 = vunpack.c.l.bf16 %v146
      %v153 = vunpack.c.h.bf16 %v146
      %v154 = vunpack.c.l.bf16 %v147
      %v155 = vunpack.c.h.bf16 %v147
      %v156 = vld [vmem:[%s1] sm:$0xff]
      %v157 = vld [vmem:[%s1 + $0x8] sm:$0xff]
      %vm158 = vcmask 64512
      %v160 = vsel %vm158, %v156, 0
      %v163 = vsel %vm158, %v157, 0
      %165 = vmatprep.subr.mxu0 0.0
      %166 = vmatpush1.msra.mxu0 0.0
      %167 = vmatprep.subr.mxu0 0.0
      %168 = vmatpush1.msra.mxu0 0.0
      %169 = vmatprep.subr.mxu0 0.0
      %170 = vmatpush1.msra.mxu0 0.0
      %171 = vmatprep.subr.mxu0 0.0
      %172 = vmatpush1.msra.mxu0 0.0
      %173 = vmatprep.subr.mxu0 0.0
      %174 = vmatpush1.msra.mxu0 0.0
      %175 = vmatprep.subr.mxu0 0.0
      %176 = vmatpush1.msra.mxu0 0.0
      %177 = vmatprep.subr.mxu0 0.0
      %178 = vmatpush1.msra.mxu0 0.0
      %179 = vmatprep.subr.mxu0 0.0
      %180 = vmatpush1.msra.mxu0 0.0
      %181 = vmatprep.subr.mxu0 0.0
      %182 = vmatpush1.msra.mxu0 0.0
      %183 = vmatprep.subr.mxu0 0.0
      %184 = vmatpush1.msra.mxu0 0.0
      %185 = vmatprep.subr.mxu0 0.0
      %186 = vmatpush1.msra.mxu0 0.0
      %187 = vmatprep.subr.mxu0 0.0
      %188 = vmatpush1.msra.mxu0 0.0
      %189 = vmatprep.subr.mxu0 0.0
      %190 = vmatpush1.msra.mxu0 0.0
      %191 = vmatprep.subr.mxu0 0.0
      %192 = vmatpush1.msra.mxu0 0.0
      %193 = vmatprep.subr.mxu0 0.0
      %194 = vmatpush1.msra.mxu0 0.0
      %195 = vmatprep.subr.mxu0 %v149
      %196 = vmatpush1.msra.mxu0 %v148
      %197 = vmatprep.subr.mxu0 0.0
      %198 = vmatpush2.msra.mxu0 0.0
      %199 = vmatprep.subr.mxu0 0.0
      %200 = vmatpush2.msra.mxu0 0.0
      %201 = vmatprep.subr.mxu0 0.0
      %202 = vmatpush2.msra.mxu0 0.0
      %203 = vmatprep.subr.mxu0 0.0
      %204 = vmatpush2.msra.mxu0 0.0
      %205 = vmatprep.subr.mxu0 0.0
      %206 = vmatpush2.msra.mxu0 0.0
      %207 = vmatprep.subr.mxu0 0.0
      %208 = vmatpush2.msra.mxu0 0.0
      %209 = vmatprep.subr.mxu0 0.0
      %210 = vmatpush2.msra.mxu0 0.0
      %211 = vmatprep.subr.mxu0 0.0
      %212 = vmatpush2.msra.mxu0 0.0
      %213 = vmatprep.subr.mxu0 0.0
      %214 = vmatpush2.msra.mxu0 0.0
      %215 = vmatprep.subr.mxu0 0.0
      %216 = vmatpush2.msra.mxu0 0.0
      %217 = vmatprep.subr.mxu0 0.0
      %218 = vmatpush2.msra.mxu0 0.0
      %219 = vmatprep.subr.mxu0 0.0
      %220 = vmatpush2.msra.mxu0 0.0
      %221 = vmatprep.subr.mxu0 0.0
      %222 = vmatpush2.msra.mxu0 0.0
      %223 = vmatprep.subr.mxu0 0.0
      %224 = vmatpush2.msra.mxu0 0.0
      %225 = vmatprep.subr.mxu0 0.0
      %226 = vmatpush2.msra.mxu0 0.0
      %227 = vmatprep.subr.mxu0 0.0
      %228 = vmatpush2.msra.mxu0 0.0
      %229 = vmatprep.mubr.f32.mxu0 0.0
      %230 = vmatmul.mubr.f32.gmra.mxu0 %v160
      %v231 = vpop.f32.mrf.mxu0
      %v232 = vadd.f32 0.0, %v231
      %v233 = vpop.f32.mrf.mxu0
      %v234 = vadd.f32 0.0, %v233
      %235 = vmatprep.mubr.f32.mxu0 0.0
      %236 = vmatmul.mubr.f32.gmra.mxu0 %v163
      %v237 = vpop.f32.mrf.mxu0
      %v238 = vadd.f32 0.0, %v237
      %v239 = vpop.f32.mrf.mxu0
      %v240 = vadd.f32 0.0, %v239
      %241 = vdwg.mxu0
      %242 = vmatprep.subr.mxu0 0.0
      %243 = vmatpush1.msra.mxu0 0.0
      %244 = vmatprep.subr.mxu0 0.0
      %245 = vmatpush1.msra.mxu0 0.0
      %246 = vmatprep.subr.mxu0 0.0
      %247 = vmatpush1.msra.mxu0 0.0
      %248 = vmatprep.subr.mxu0 0.0
      %249 = vmatpush1.msra.mxu0 0.0
      %250 = vmatprep.subr.mxu0 0.0
      %251 = vmatpush1.msra.mxu0 0.0
      %252 = vmatprep.subr.mxu0 0.0
      %253 = vmatpush1.msra.mxu0 0.0
      %254 = vmatprep.subr.mxu0 0.0
      %255 = vmatpush1.msra.mxu0 0.0
      %256 = vmatprep.subr.mxu0 0.0
      %257 = vmatpush1.msra.mxu0 0.0
      %258 = vmatprep.subr.mxu0 0.0
      %259 = vmatpush1.msra.mxu0 0.0
      %260 = vmatprep.subr.mxu0 0.0
      %261 = vmatpush1.msra.mxu0 0.0
      %262 = vmatprep.subr.mxu0 0.0
      %263 = vmatpush1.msra.mxu0 0.0
      %264 = vmatprep.subr.mxu0 0.0
      %265 = vmatpush1.msra.mxu0 0.0
      %266 = vmatprep.subr.mxu0 0.0
      %267 = vmatpush1.msra.mxu0 0.0
      %268 = vmatprep.subr.mxu0 0.0
      %269 = vmatpush1.msra.mxu0 0.0
      %270 = vmatprep.subr.mxu0 0.0
      %271 = vmatpush1.msra.mxu0 0.0
      %272 = vmatprep.subr.mxu0 %v151
      %273 = vmatpush1.msra.mxu0 %v150
      %274 = vmatprep.subr.mxu0 0.0
      %275 = vmatpush2.msra.mxu0 0.0
      %276 = vmatprep.subr.mxu0 0.0
      %277 = vmatpush2.msra.mxu0 0.0
      %278 = vmatprep.subr.mxu0 0.0
      %279 = vmatpush2.msra.mxu0 0.0
      %280 = vmatprep.subr.mxu0 0.0
      %281 = vmatpush2.msra.mxu0 0.0
      %282 = vmatprep.subr.mxu0 0.0
      %283 = vmatpush2.msra.mxu0 0.0
      %284 = vmatprep.subr.mxu0 0.0
      %285 = vmatpush2.msra.mxu0 0.0
      %286 = vmatprep.subr.mxu0 0.0
      %287 = vmatpush2.msra.mxu0 0.0
      %288 = vmatprep.subr.mxu0 0.0
      %289 = vmatpush2.msra.mxu0 0.0
      %290 = vmatprep.subr.mxu0 0.0
      %291 = vmatpush2.msra.mxu0 0.0
      %292 = vmatprep.subr.mxu0 0.0
      %293 = vmatpush2.msra.mxu0 0.0
      %294 = vmatprep.subr.mxu0 0.0
      %295 = vmatpush2.msra.mxu0 0.0
      %296 = vmatprep.subr.mxu0 0.0
      %297 = vmatpush2.msra.mxu0 0.0
      %298 = vmatprep.subr.mxu0 0.0
      %299 = vmatpush2.msra.mxu0 0.0
      %300 = vmatprep.subr.mxu0 0.0
      %301 = vmatpush2.msra.mxu0 0.0
      %302 = vmatprep.subr.mxu0 0.0
      %303 = vmatpush2.msra.mxu0 0.0
      %304 = vmatprep.subr.mxu0 0.0
      %305 = vmatpush2.msra.mxu0 0.0
      %306 = vmatprep.mubr.f32.mxu0 0.0
      %307 = vmatmul.mubr.f32.gmra.mxu0 %v160
      %v308 = vpop.f32.mrf.mxu0
      %v309 = vadd.f32 0.0, %v308
      %v310 = vpop.f32.mrf.mxu0
      %v311 = vadd.f32 0.0, %v310
      %312 = vmatprep.mubr.f32.mxu0 0.0
      %313 = vmatmul.mubr.f32.gmra.mxu0 %v163
      %v314 = vpop.f32.mrf.mxu0
      %v315 = vadd.f32 0.0, %v314
      %v316 = vpop.f32.mrf.mxu0
      %v317 = vadd.f32 0.0, %v316
      %318 = vdwg.mxu0
      %319 = vmatprep.subr.mxu0 0.0
      %320 = vmatpush1.msra.mxu0 0.0
      %321 = vmatprep.subr.mxu0 0.0
      %322 = vmatpush1.msra.mxu0 0.0
      %323 = vmatprep.subr.mxu0 0.0
      %324 = vmatpush1.msra.mxu0 0.0
      %325 = vmatprep.subr.mxu0 0.0
      %326 = vmatpush1.msra.mxu0 0.0
      %327 = vmatprep.subr.mxu0 0.0
      %328 = vmatpush1.msra.mxu0 0.0
      %329 = vmatprep.subr.mxu0 0.0
      %330 = vmatpush1.msra.mxu0 0.0
      %331 = vmatprep.subr.mxu0 0.0
      %332 = vmatpush1.msra.mxu0 0.0
      %333 = vmatprep.subr.mxu0 0.0
      %334 = vmatpush1.msra.mxu0 0.0
      %335 = vmatprep.subr.mxu0 0.0
      %336 = vmatpush1.msra.mxu0 0.0
      %337 = vmatprep.subr.mxu0 0.0
      %338 = vmatpush1.msra.mxu0 0.0
      %339 = vmatprep.subr.mxu0 0.0
      %340 = vmatpush1.msra.mxu0 0.0
      %341 = vmatprep.subr.mxu0 0.0
      %342 = vmatpush1.msra.mxu0 0.0
      %343 = vmatprep.subr.mxu0 0.0
      %344 = vmatpush1.msra.mxu0 0.0
      %345 = vmatprep.subr.mxu0 0.0
      %346 = vmatpush1.msra.mxu0 0.0
      %347 = vmatprep.subr.mxu0 0.0
      %348 = vmatpush1.msra.mxu0 0.0
      %349 = vmatprep.subr.mxu0 %v153
      %350 = vmatpush1.msra.mxu0 %v152
      %351 = vmatprep.subr.mxu0 0.0
      %352 = vmatpush2.msra.mxu0 0.0
      %353 = vmatprep.subr.mxu0 0.0
      %354 = vmatpush2.msra.mxu0 0.0
      %355 = vmatprep.subr.mxu0 0.0
      %356 = vmatpush2.msra.mxu0 0.0
      %357 = vmatprep.subr.mxu0 0.0
      %358 = vmatpush2.msra.mxu0 0.0
      %359 = vmatprep.subr.mxu0 0.0
      %360 = vmatpush2.msra.mxu0 0.0
      %361 = vmatprep.subr.mxu0 0.0
      %362 = vmatpush2.msra.mxu0 0.0
      %363 = vmatprep.subr.mxu0 0.0
      %364 = vmatpush2.msra.mxu0 0.0
      %365 = vmatprep.subr.mxu0 0.0
      %366 = vmatpush2.msra.mxu0 0.0
      %367 = vmatprep.subr.mxu0 0.0
      %368 = vmatpush2.msra.mxu0 0.0
      %369 = vmatprep.subr.mxu0 0.0
      %370 = vmatpush2.msra.mxu0 0.0
      %371 = vmatprep.subr.mxu0 0.0
      %372 = vmatpush2.msra.mxu0 0.0
      %373 = vmatprep.subr.mxu0 0.0
      %374 = vmatpush2.msra.mxu0 0.0
      %375 = vmatprep.subr.mxu0 0.0
      %376 = vmatpush2.msra.mxu0 0.0
      %377 = vmatprep.subr.mxu0 0.0
      %378 = vmatpush2.msra.mxu0 0.0
      %379 = vmatprep.subr.mxu0 0.0
      %380 = vmatpush2.msra.mxu0 0.0
      %381 = vmatprep.subr.mxu0 0.0
      %382 = vmatpush2.msra.mxu0 0.0
      %383 = vmatprep.mubr.f32.mxu0 0.0
      %384 = vmatmul.mubr.f32.gmra.mxu0 %v160
      %v385 = vpop.f32.mrf.mxu0
      %v386 = vadd.f32 0.0, %v385
      %v387 = vpop.f32.mrf.mxu0
      %v388 = vadd.f32 0.0, %v387
      %389 = vmatprep.mubr.f32.mxu0 0.0
      %390 = vmatmul.mubr.f32.gmra.mxu0 %v163
      %v391 = vpop.f32.mrf.mxu0
      %v392 = vadd.f32 0.0, %v391
      %v393 = vpop.f32.mrf.mxu0
      %v394 = vadd.f32 0.0, %v393
      %395 = vdwg.mxu0
      %396 = vmatprep.subr.mxu0 0.0
      %397 = vmatpush1.msra.mxu0 0.0
      %398 = vmatprep.subr.mxu0 0.0
      %399 = vmatpush1.msra.mxu0 0.0
      %400 = vmatprep.subr.mxu0 0.0
      %401 = vmatpush1.msra.mxu0 0.0
      %402 = vmatprep.subr.mxu0 0.0
      %403 = vmatpush1.msra.mxu0 0.0
      %404 = vmatprep.subr.mxu0 0.0
      %405 = vmatpush1.msra.mxu0 0.0
      %406 = vmatprep.subr.mxu0 0.0
      %407 = vmatpush1.msra.mxu0 0.0
      %408 = vmatprep.subr.mxu0 0.0
      %409 = vmatpush1.msra.mxu0 0.0
      %410 = vmatprep.subr.mxu0 0.0
      %411 = vmatpush1.msra.mxu0 0.0
      %412 = vmatprep.subr.mxu0 0.0
      %413 = vmatpush1.msra.mxu0 0.0
      %414 = vmatprep.subr.mxu0 0.0
      %415 = vmatpush1.msra.mxu0 0.0
      %416 = vmatprep.subr.mxu0 0.0
      %417 = vmatpush1.msra.mxu0 0.0
      %418 = vmatprep.subr.mxu0 0.0
      %419 = vmatpush1.msra.mxu0 0.0
      %420 = vmatprep.subr.mxu0 0.0
      %421 = vmatpush1.msra.mxu0 0.0
      %422 = vmatprep.subr.mxu0 0.0
      %423 = vmatpush1.msra.mxu0 0.0
      %424 = vmatprep.subr.mxu0 0.0
      %425 = vmatpush1.msra.mxu0 0.0
      %426 = vmatprep.subr.mxu0 %v155
      %427 = vmatpush1.msra.mxu0 %v154
      %428 = vmatprep.subr.mxu0 0.0
      %429 = vmatpush2.msra.mxu0 0.0
      %430 = vmatprep.subr.mxu0 0.0
      %431 = vmatpush2.msra.mxu0 0.0
      %432 = vmatprep.subr.mxu0 0.0
      %433 = vmatpush2.msra.mxu0 0.0
      %434 = vmatprep.subr.mxu0 0.0
      %435 = vmatpush2.msra.mxu0 0.0
      %436 = vmatprep.subr.mxu0 0.0
      %437 = vmatpush2.msra.mxu0 0.0
      %438 = vmatprep.subr.mxu0 0.0
      %439 = vmatpush2.msra.mxu0 0.0
      %440 = vmatprep.subr.mxu0 0.0
      %441 = vmatpush2.msra.mxu0 0.0
      %442 = vmatprep.subr.mxu0 0.0
      %443 = vmatpush2.msra.mxu0 0.0
      %444 = vmatprep.subr.mxu0 0.0
      %445 = vmatpush2.msra.mxu0 0.0
      %446 = vmatprep.subr.mxu0 0.0
      %447 = vmatpush2.msra.mxu0 0.0
      %448 = vmatprep.subr.mxu0 0.0
      %449 = vmatpush2.msra.mxu0 0.0
      %450 = vmatprep.subr.mxu0 0.0
      %451 = vmatpush2.msra.mxu0 0.0
      %452 = vmatprep.subr.mxu0 0.0
      %453 = vmatpush2.msra.mxu0 0.0
      %454 = vmatprep.subr.mxu0 0.0
      %455 = vmatpush2.msra.mxu0 0.0
      %456 = vmatprep.subr.mxu0 0.0
      %457 = vmatpush2.msra.mxu0 0.0
      %458 = vmatprep.subr.mxu0 0.0
      %459 = vmatpush2.msra.mxu0 0.0
      %460 = vmatprep.mubr.f32.mxu0 0.0
      %461 = vmatmul.mubr.f32.gmra.mxu0 %v160
      %v462 = vpop.f32.mrf.mxu0
      %v463 = vadd.f32 0.0, %v462
      %v464 = vpop.f32.mrf.mxu0
      %v465 = vadd.f32 0.0, %v464
      %466 = vmatprep.mubr.f32.mxu0 0.0
      %467 = vmatmul.mubr.f32.gmra.mxu0 %v163
      %v468 = vpop.f32.mrf.mxu0
      %v469 = vadd.f32 0.0, %v468
      %v470 = vpop.f32.mrf.mxu0
      %v471 = vadd.f32 0.0, %v470
      %472 = vdwg.mxu0
      %v473 = vmul.f32 %v234, 0.0
      %v474 = vmul.f32 %v240, 0.0
      %v475 = vadd.f32 %v232, %v473
      %v476 = vadd.f32 %v238, %v474
      %v477 = vmul.f32 %v232, 0.53333336
      %v478 = vmul.f32 %v238, 0.53333336
      %v479 = vmul.f32 %v234, 0.46666667
      %v480 = vmul.f32 %v240, 0.46666667
      %v481 = vadd.f32 %v477, %v479
      %v482 = vadd.f32 %v478, %v480
      %v483 = vmul.f32 %v232, 0.06666667
      %v484 = vmul.f32 %v238, 0.06666667
      %v485 = vmul.f32 %v234, 0.93333334
      %v486 = vmul.f32 %v240, 0.93333334
      %v487 = vadd.f32 %v483, %v485
      %v488 = vadd.f32 %v484, %v486
      %v489 = vmul.f32 %v234, 0.6
      %v490 = vmul.f32 %v240, 0.6
      %v491 = vmul.f32 %v309, 0.4
      %v492 = vmul.f32 %v315, 0.4
      %v493 = vadd.f32 %v489, %v491
      %v494 = vadd.f32 %v490, %v492
      %v495 = vmul.f32 %v234, 0.13333334
      %v496 = vmul.f32 %v240, 0.13333334
      %v497 = vmul.f32 %v309, 0.8666667
      %v498 = vmul.f32 %v315, 0.8666667
      %v499 = vadd.f32 %v495, %v497
      %v500 = vadd.f32 %v496, %v498
      %v501 = vmul.f32 %v309, 0.6666667
      %v502 = vmul.f32 %v315, 0.6666667
      %v503 = vmul.f32 %v311, 0.33333334
      %v504 = vmul.f32 %v317, 0.33333334
      %v505 = vadd.f32 %v501, %v503
      %v506 = vadd.f32 %v502, %v504
      %v507 = vmul.f32 %v309, 0.2
      %v508 = vmul.f32 %v315, 0.2
      %v509 = vmul.f32 %v311, 0.8
      %v510 = vmul.f32 %v317, 0.8
      %v511 = vadd.f32 %v507, %v509
      %v512 = vadd.f32 %v508, %v510
      %v513 = vmul.f32 %v311, 0.73333335
      %v514 = vmul.f32 %v317, 0.73333335
      %v515 = vmul.f32 %v386, 0.26666668
      %v516 = vmul.f32 %v392, 0.26666668
      %v517 = vadd.f32 %v513, %v515
      %v518 = vadd.f32 %v514, %v516
      %v519 = vmul.f32 %v311, 0.26666668
      %v520 = vmul.f32 %v317, 0.26666668
      %v521 = vmul.f32 %v386, 0.73333335
      %v522 = vmul.f32 %v392, 0.73333335
      %v523 = vadd.f32 %v519, %v521
      %v524 = vadd.f32 %v520, %v522
      %v525 = vmul.f32 %v386, 0.8
      %v526 = vmul.f32 %v392, 0.8
      %v527 = vmul.f32 %v388, 0.2
      %v528 = vmul.f32 %v394, 0.2
      %v529 = vadd.f32 %v525, %v527
      %v530 = vadd.f32 %v526, %v528
      %v531 = vmul.f32 %v386, 0.33333334
      %v532 = vmul.f32 %v392, 0.33333334
      %v533 = vmul.f32 %v388, 0.6666667
      %v534 = vmul.f32 %v394, 0.6666667
      %v535 = vadd.f32 %v531, %v533
      %v536 = vadd.f32 %v532, %v534
      %v537 = vmul.f32 %v388, 0.8666667
      %v538 = vmul.f32 %v394, 0.8666667
      %v539 = vmul.f32 %v463, 0.13333334
      %v540 = vmul.f32 %v469, 0.13333334
      %v541 = vadd.f32 %v537, %v539
      %v542 = vadd.f32 %v538, %v540
      %v543 = vmul.f32 %v388, 0.4
      %v544 = vmul.f32 %v394, 0.4
      %v545 = vmul.f32 %v463, 0.6
      %v546 = vmul.f32 %v469, 0.6
      %v547 = vadd.f32 %v543, %v545
      %v548 = vadd.f32 %v544, %v546
      %v549 = vmul.f32 %v463, 0.93333334
      %v550 = vmul.f32 %v469, 0.93333334
      %v551 = vmul.f32 %v465, 0.06666667
      %v552 = vmul.f32 %v471, 0.06666667
      %v553 = vadd.f32 %v549, %v551
      %v554 = vadd.f32 %v550, %v552
      %v555 = vmul.f32 %v463, 0.46666667
      %v556 = vmul.f32 %v469, 0.46666667
      %v557 = vmul.f32 %v465, 0.53333336
      %v558 = vmul.f32 %v471, 0.53333336
      %v559 = vadd.f32 %v555, %v557
      %v560 = vadd.f32 %v556, %v558
      %v561 = vmul.f32 %v465, 0.0
      %v562 = vmul.f32 %v471, 0.0
      %v563 = vadd.f32 %v465, %v561
      %v564 = vadd.f32 %v471, %v562
      %565 = vst [vmem:[%s143] sm:$0xff] %v475
      %566 = vst [vmem:[%s143 + $0x8] sm:$0xff] %v481
      %567 = vst [vmem:[%s143 + $0x10] sm:$0xff] %v487
      %568 = vst [vmem:[%s143 + $0x18] sm:$0xff] %v493
      %569 = vst [vmem:[%s143 + $0x20] sm:$0xff] %v499
      %570 = vst [vmem:[%s143 + $0x28] sm:$0xff] %v505
      %571 = vst [vmem:[%s143 + $0x30] sm:$0xff] %v511
      %572 = vst [vmem:[%s143 + $0x38] sm:$0xff] %v517
      %573 = vst [vmem:[%s143 + $0x40] sm:$0xff] %v523
      %574 = vst [vmem:[%s143 + $0x48] sm:$0xff] %v529
      %575 = vst [vmem:[%s143 + $0x50] sm:$0xff] %v535
      %576 = vst [vmem:[%s143 + $0x58] sm:$0xff] %v541
      %577 = vst [vmem:[%s143 + $0x60] sm:$0xff] %v547
      %578 = vst [vmem:[%s143 + $0x68] sm:$0xff] %v553
      %579 = vst [vmem:[%s143 + $0x70] sm:$0xff] %v559
      %580 = vst [vmem:[%s143 + $0x78] sm:$0xff] %v563
      %581 = vst [vmem:[%s143 + $0x80] sm:$0xff] %v476
      %582 = vst [vmem:[%s143 + $0x88] sm:$0xff] %v482
      %583 = vst [vmem:[%s143 + $0x90] sm:$0xff] %v488
      %584 = vst [vmem:[%s143 + $0x98] sm:$0xff] %v494
      %585 = vst [vmem:[%s143 + $0xa0] sm:$0xff] %v500
      %586 = vst [vmem:[%s143 + $0xa8] sm:$0xff] %v506
      %587 = vst [vmem:[%s143 + $0xb0] sm:$0xff] %v512
      %588 = vst [vmem:[%s143 + $0xb8] sm:$0xff] %v518
      %589 = vst [vmem:[%s143 + $0xc0] sm:$0xff] %v524
      %590 = vst [vmem:[%s143 + $0xc8] sm:$0xff] %v530
      %591 = vst [vmem:[%s143 + $0xd0] sm:$0xff] %v536
      %592 = vst [vmem:[%s143 + $0xd8] sm:$0xff] %v542
      %593 = vst [vmem:[%s143 + $0xe0] sm:$0xff] %v548
      %594 = vst [vmem:[%s143 + $0xe8] sm:$0xff] %v554
      %595 = vst [vmem:[%s143 + $0xf0] sm:$0xff] %v560
      %596 = vst [vmem:[%s143 + $0xf8] sm:$0xff] %v564
      %p597 = scmp.lt.s32.totalorder %s13, 1
      %s598 = scalar_select %p597, %s13, 1
      %s599 = smul.addr %s598, 32
      %s600 = smul.addr %s599, 8
      %s601 = scalar_lea.vmem %s2, %s600
      // Predicated region
      $region29: #{branch_forward.18} parent=27 // pred_check
        %p602 = pneg %p78
      $region30: #{branch_forward.18} parent=27 // pred_check_branch
        %604 = sbr.rel (%p602) target = $region32
      $region31: #{branch_forward.18} parent=27 // pred_region
        _
      $region32: #{branch_forward.18} parent=27 // pred_fallthru
        _
    $region28: #{branch_forward.18} parent=5 // pred_fallthru
      _
    %p605 = scmp.le.s32.totalorder 2, %s8
    // Predicated region
    $region33: #{branch_forward.18} parent=5 // pred_check
      %p606 = pneg %p605
    $region34: #{branch_forward.18} parent=5 // pred_check_branch
      %608 = sbr.rel (%p606) target = $region36
    $region35: #{branch_forward.18} parent=5 // pred_region
      %s609 = ssub.s32 %s8, 2
      // Predicated region
      $region37: #{branch_forward.18} parent=35 // pred_check
        %p610 = pneg %p84
      $region38: #{branch_forward.18} parent=35 // pred_check_branch
        %612 = sbr.rel (%p610) target = $region40
      $region39: #{branch_forward.18} parent=35 // pred_region
        %p613 = scmp.lt.s32.totalorder %s14, 1
        %s614 = scalar_select %p613, %s14, 1
        %s615 = smul.addr %s614, 32
        %s616 = smul.addr %s615, 8
        %s617 = scalar_lea.vmem %s2, %s616
      $region40: #{branch_forward.18} parent=35 // pred_fallthru
        _
    $region36: #{branch_forward.18} parent=5 // pred_fallthru
      _
  $region6: #{branch_forward.18} parent=0 // loop_footer
    %s12 = sadd.s32 1, %s8
  $region7: #{branch_forward.18} parent=0 // loop_footer_branch
    %7 = sbr.rel target = $region3
  $region8: #{branch_forward.18} parent=0 // loop_exit
    _

// kernel: branch_forward.15
$region0: #{branch_forward.15}
  #allocation0 [shape = 'u32[]', space=smem, size = 0x4, offset = 0x4, fixed_abs, tag = 'smem constant byte address 0x4 - core index']
  #allocation1 [shape = 'u32[144,128]{1,0:T(1,128)}', space=vmem, size = 0x12000, scoped, tag = 'internal scratch']
  %s0 = inlined_call_operand.vmem [shape: bf16[2,10,10,128], index: 0, kind: input, shape index: {}]
  %s1 = inlined_call_operand.vmem [shape: bf16[9,128,128], index: 1, kind: input, shape index: {}]
  %s2 = inlined_call_operand.vmem [shape: f32[1,128], index: 2, kind: input, shape index: {}]
  %s3 = inlined_call_operand.vmem [shape: bf16[2,8,8,128], index: 3, kind: output, shape index: {}]
  %s4 = sld [smem:[#allocation0]]
  $region45: #{branch_forward.15} parent=0
    _
  %s6 = ssub.s32 1, %s4
  %s7 = scalar_select 0, %s6, %s4
  loop: start=0, step=1, limit=18
  $region2: #{branch_forward.15} parent=0 // loop_pre_header
    _
  $region3: #{branch_forward.15} parent=0 // loop_header
    %s9 = sphi 0, %s13
    %p10 = scmp.ge.s32.totalorder %s9, 18
    %s16 = sphi 0, %s28
    %s17 = sphi 0, %s24
    %s18 = sphi 0, %s16
    %s19 = sphi 0, %s17
    %s20 = sphi 0, %s18
    %s21 = sphi 0, %s19
    %s31 = sphi 0, %s33
    %s34 = sphi 0, %s31
    %s35 = sphi 0, %s34
    %s51 = sphi 0, %s35
    %s55 = sphi 0, %s55
    %s57 = sphi 0, %s55
    %s58 = sphi 0, %s57
    %s72 = sphi 0, %s58
    %s76 = sphi 0, %s76
    %s78 = sphi 0, %s76
    %s79 = sphi 0, %s78
    %s93 = sphi 0, %s79
    %s101 = sphi 0, %s103
    %s104 = sphi 0, %s101
    %s105 = sphi 0, %s104
    %s121 = sphi 0, %s105
  $region4: #{branch_forward.15} parent=0 // loop_header_branch
    %12 = sbr.rel (%p10) target = $region8
  $region5: #{branch_forward.15} parent=0 // loop_body
    %s14 = ssub.s32 %s9, 1
    %s15 = ssub.s32 %s9, 2
    %s22 = sadd.s32 1, %s17
    %p23 = scmp.ge.s32.totalorder %s22, 8
    %s24 = scalar_select %p23, 0, %s22
    %s25 = sadd.s32 1, %s16
    %s26 = scalar_select %p23, %s25, %s16
    %p27 = scmp.ge.s32.totalorder %s26, 2
    %s28 = scalar_select %p27, 0, %s26
    %s29 = ssub.s32 %s16, %s28
    %p30 = scmp.eq.s32.totalorder %s29, 0
    %s32 = sadd.s32 %s31, 1
    %s33 = scalar_select %p30, %s31, %s32
    %p36 = pneg %p30
    %p37 = scmp.eq.s32.totalorder %s9, 15
    %p38 = por %p36, %p37
    %p39 = scmp.ne.s32.totalorder %s31, %s34
    %p40 = scmp.eq.s32.totalorder %s9, 0
    %p41 = por %p39, %p40
    %p42 = scmp.ne.s32.totalorder %s31, %s34
    %p43 = scmp.eq.s32.totalorder %s14, 15
    %p44 = por %p42, %p43
    %p45 = scmp.ne.s32.totalorder %s34, %s35
    %p46 = scmp.eq.s32.totalorder %s14, 0
    %p47 = por %p45, %p46
    %p48 = scmp.ne.s32.totalorder %s34, %s35
    %p49 = scmp.eq.s32.totalorder %s15, 15
    %p50 = por %p48, %p49
    %p52 = scmp.ne.s32.totalorder %s35, %s51
    %p53 = scmp.eq.s32.totalorder %s15, 0
    %p54 = por %p52, %p53
    %s56 = sadd.s32 %s55, 1
    %p59 = scmp.eq.s32.totalorder %s9, 15
    %p60 = scmp.ne.s32.totalorder %s55, %s57
    %p61 = scmp.eq.s32.totalorder %s9, 0
    %p62 = por %p60, %p61
    %p63 = scmp.ne.s32.totalorder %s55, %s57
    %p64 = scmp.eq.s32.totalorder %s14, 15
    %p65 = por %p63, %p64
    %p66 = scmp.ne.s32.totalorder %s57, %s58
    %p67 = scmp.eq.s32.totalorder %s14, 0
    %p68 = por %p66, %p67
    %p69 = scmp.ne.s32.totalorder %s57, %s58
    %p70 = scmp.eq.s32.totalorder %s15, 15
    %p71 = por %p69, %p70
    %p73 = scmp.ne.s32.totalorder %s58, %s72
    %p74 = scmp.eq.s32.totalorder %s15, 0
    %p75 = por %p73, %p74
    %s77 = sadd.s32 %s76, 1
    %p80 = scmp.eq.s32.totalorder %s9, 15
    %p81 = scmp.ne.s32.totalorder %s76, %s78
    %p82 = scmp.eq.s32.totalorder %s9, 0
    %p83 = por %p81, %p82
    %p84 = scmp.ne.s32.totalorder %s76, %s78
    %p85 = scmp.eq.s32.totalorder %s14, 15
    %p86 = por %p84, %p85
    %p87 = scmp.ne.s32.totalorder %s78, %s79
    %p88 = scmp.eq.s32.totalorder %s14, 0
    %p89 = por %p87, %p88
    %p90 = scmp.ne.s32.totalorder %s78, %s79
    %p91 = scmp.eq.s32.totalorder %s15, 15
    %p92 = por %p90, %p91
    %p94 = scmp.ne.s32.totalorder %s79, %s93
    %p95 = scmp.eq.s32.totalorder %s15, 0
    %p96 = por %p94, %p95
    %s97 = ssub.s32 %s16, %s28
    %s98 = ssub.s32 %s17, %s24
    %s99 = sor.u32 %s97, %s98
    %p100 = scmp.eq.s32.totalorder %s99, 0
    %s102 = sadd.s32 %s101, 1
    %s103 = scalar_select %p100, %s101, %s102
    %p106 = pneg %p100
    %p107 = scmp.eq.s32.totalorder %s9, 15
    %p108 = por %p106, %p107
    %p109 = scmp.ne.s32.totalorder %s101, %s104
    %p110 = scmp.eq.s32.totalorder %s9, 0
    %p111 = por %p109, %p110
    %p112 = scmp.ne.s32.totalorder %s101, %s104
    %p113 = scmp.eq.s32.totalorder %s14, 15
    %p114 = por %p112, %p113
    %p115 = scmp.ne.s32.totalorder %s104, %s105
    %p116 = scmp.eq.s32.totalorder %s14, 0
    %p117 = por %p115, %p116
    %p118 = scmp.ne.s32.totalorder %s104, %s105
    %p119 = scmp.eq.s32.totalorder %s15, 15
    %p120 = por %p118, %p119
    %p122 = scmp.ne.s32.totalorder %s105, %s121
    %p123 = scmp.eq.s32.totalorder %s15, 0
    %p124 = por %p122, %p123
    %p125 = scmp.le.s32.totalorder 1, %s9
    %p126 = scmp.lt.s32.totalorder %s9, 17
    %p127 = pnand %p125, %p126
    %p128 = pneg %p127
    // Predicated region
    $region9: #{branch_forward.15} parent=5 // pred_check
      _
    $region10: #{branch_forward.15} parent=5 // pred_check_branch
      %130 = sbr.rel (%p127) target = $region12
    $region11: #{branch_forward.15} parent=5 // pred_region
      %s131 = ssub.s32 %s9, 1
      // Predicated region
      $region13: #{branch_forward.15} parent=11 // pred_check
        %p132 = pneg %p68
      $region14: #{branch_forward.15} parent=11 // pred_check_branch
        %134 = sbr.rel (%p132) target = $region16
      $region15: #{branch_forward.15} parent=11 // pred_region
        _
      $region16: #{branch_forward.15} parent=11 // pred_fallthru
        _
      // Predicated region
      $region17: #{branch_forward.15} parent=11 // pred_check
        %p135 = pneg %p89
      $region18: #{branch_forward.15} parent=11 // pred_check_branch
        %137 = sbr.rel (%p135) target = $region20
      $region19: #{branch_forward.15} parent=11 // pred_region
        _
      $region20: #{branch_forward.15} parent=11 // pred_fallthru
        _
    $region12: #{branch_forward.15} parent=5 // pred_fallthru
      _
    %p138 = scmp.lt.s32.totalorder %s9, 16
    // Predicated region
    $region21: #{branch_forward.15} parent=5 // pred_check
      %p139 = pneg %p138
    $region22: #{branch_forward.15} parent=5 // pred_check_branch
      %141 = sbr.rel (%p139) target = $region24
    $region23: #{branch_forward.15} parent=5 // pred_region
      // Predicated region
      $region25: #{branch_forward.15} parent=23 // pred_check
        %p142 = pneg %p41
      $region26: #{branch_forward.15} parent=23 // pred_check_branch
        %144 = sbr.rel (%p142) target = $region28
      $region27: #{branch_forward.15} parent=23 // pred_region
        %p145 = scmp.lt.s32.totalorder %s16, 1
        %s146 = scalar_select %p145, %s16, 1
        %s147 = smul.addr %s146, 20
        %s148 = smul.addr %s147, 4
        %s149 = scalar_lea.vmem %s0, %s148
      $region28: #{branch_forward.15} parent=23 // pred_fallthru
        _
    $region24: #{branch_forward.15} parent=5 // pred_fallthru
      _
    %p150 = scmp.le.s32.totalorder 1, %s9
    %p151 = scmp.lt.s32.totalorder %s9, 17
    %p152 = pnand %p150, %p151
    %p153 = pneg %p152
    // Predicated region
    $region29: #{branch_forward.15} parent=5 // pred_check
      _
    $region30: #{branch_forward.15} parent=5 // pred_check_branch
      %155 = sbr.rel (%p152) target = $region32
    $region31: #{branch_forward.15} parent=5 // pred_region
      %s156 = ssub.s32 %s9, 1
      %p157 = scmp.lt.s32.totalorder %s18, 1
      %s158 = scalar_select %p157, %s18, 1
      %s159 = smul.addr %s158, 20
      %s160 = smul.addr %s159, 4
      %s161 = scalar_lea.vmem %s0, %s160
      %p162 = pneg %p47
      %p163 = pneg %p44
      %p164 = pneg %p68
      %p165 = pneg %p65
      %p166 = pneg %p89
      %p167 = pneg %p86
      %p168 = pneg %p117
      %p169 = pneg %p114
      %p170 = scmp.lt.s32.totalorder %s18, 1
      %s171 = scalar_select %p170, %s18, 1
      %p172 = scmp.lt.s32.totalorder %s19, 7
      %s173 = scalar_select %p172, %s19, 7
      %s174 = smul.addr %s171, 8
      %s175 = sadd.s32 %s173, %s174
      %s176 = smul.addr %s175, 4
      %s177 = scalar_lea.vmem %s3, %s176
      %p178 = scmp.lt.s32.totalorder %s18, 1
      %s179 = scalar_select %p178, %s18, 1
      %s180 = smul.addr %s179, 20
      %s181 = smul.addr %s180, 4
      %s182 = scalar_lea.vmem %s0, %s181
      %p183 = scmp.lt.s32.totalorder %s18, 1
      %s184 = scalar_select %p183, %s18, 1
      %p185 = scmp.lt.s32.totalorder %s19, 7
      %s186 = scalar_select %p185, %s19, 7
      %s187 = smul.addr %s184, 8
      %s188 = sadd.s32 %s186, %s187
      %s189 = smul.addr %s188, 4
      %s190 = scalar_lea.vmem %s3, %s189
      %s192 = smul.u32 %s19, 2
      %s193 = smul.addr %s192, 4
      %s194 = scalar_lea.vmem %s182, %s193
      %v195 = vld [vmem:[%s194] sm:$0xf]
      %v196 = vld [vmem:[%s194 + $0x4] sm:$0x1]
      %v197 = vld [vmem:[%s1] sm:$0xf]
      %v198 = vld [vmem:[%s1 + $0x4] sm:$0xf]
      %v199 = vld [vmem:[%s1 + $0x8] sm:$0xf]
      %v200 = vld [vmem:[%s1 + $0xc] sm:$0xf]
      %v201 = vld [vmem:[%s1 + $0x10] sm:$0xf]
      %v202 = vld [vmem:[%s1 + $0x14] sm:$0xf]
      %v203 = vld [vmem:[%s1 + $0x18] sm:$0xf]
      %v204 = vld [vmem:[%s1 + $0x1c] sm:$0xf]
      %v205 = vld [vmem:[%s1 + $0x20] sm:$0xf]
      %v206 = vld [vmem:[%s1 + $0x24] sm:$0xf]
      %v207 = vld [vmem:[%s1 + $0x28] sm:$0xf]
      %v208 = vld [vmem:[%s1 + $0x2c] sm:$0xf]
      %v209 = vld [vmem:[%s1 + $0x30] sm:$0xf]
      %v210 = vld [vmem:[%s1 + $0x34] sm:$0xf]
      %v211 = vld [vmem:[%s1 + $0x38] sm:$0xf]
      %v212 = vld [vmem:[%s1 + $0x3c] sm:$0xf]
      %s213 = scalar_lea.vmem %s1, 64
      %v214 = vld [vmem:[%s213] sm:$0xf]
      %v215 = vld [vmem:[%s213 + $0x4] sm:$0xf]
      %v216 = vld [vmem:[%s213 + $0x8] sm:$0xf]
      %v217 = vld [vmem:[%s213 + $0xc] sm:$0xf]
      %v218 = vld [vmem:[%s213 + $0x10] sm:$0xf]
      %v219 = vld [vmem:[%s213 + $0x14] sm:$0xf]
      %v220 = vld [vmem:[%s213 + $0x18] sm:$0xf]
      %v221 = vld [vmem:[%s213 + $0x1c] sm:$0xf]
      %v222 = vld [vmem:[%s213 + $0x20] sm:$0xf]
      %v223 = vld [vmem:[%s213 + $0x24] sm:$0xf]
      %v224 = vld [vmem:[%s213 + $0x28] sm:$0xf]
      %v225 = vld [vmem:[%s213 + $0x2c] sm:$0xf]
      %v226 = vld [vmem:[%s213 + $0x30] sm:$0xf]
      %v227 = vld [vmem:[%s213 + $0x34] sm:$0xf]
      %v228 = vld [vmem:[%s213 + $0x38] sm:$0xf]
      %v229 = vld [vmem:[%s213 + $0x3c] sm:$0xf]
      %v232 = vunpack.c.l.b16 %v195
      %v233 = vunpack.c.l.b16 %v196
      %v234 = vpack.c.b16 %v233, %v232
      %v236 = vshrl.u32 %v234, 16
      %v238 = vshll.u32 %v234, 16
      %v240 = vrot.slane %v238, 1
      %v241 = vor.u32 %v236, %v240
      %v259 = vunpack.c.l.b16 %v214
      %v260 = vunpack.c.l.b16 %v215
      %v261 = vunpack.c.l.b16 %v216
      %v262 = vunpack.c.l.b16 %v217
      %v263 = vunpack.c.l.b16 %v218
      %v264 = vunpack.c.l.b16 %v219
      %v265 = vunpack.c.l.b16 %v220
      %v266 = vunpack.c.l.b16 %v221
      %v267 = vunpack.c.l.b16 %v222
      %v268 = vunpack.c.l.b16 %v223
      %v269 = vunpack.c.l.b16 %v224
      %v270 = vunpack.c.l.b16 %v225
      %v271 = vunpack.c.l.b16 %v226
      %v272 = vunpack.c.l.b16 %v227
      %v273 = vunpack.c.l.b16 %v228
      %v274 = vunpack.c.l.b16 %v229
      %v275 = vpack.c.b16 %v260, %v259
      %v276 = vpack.c.b16 %v262, %v261
      %v277 = vpack.c.b16 %v264, %v263
      %v278 = vpack.c.b16 %v266, %v265
      %v279 = vpack.c.b16 %v268, %v267
      %v280 = vpack.c.b16 %v270, %v269
      %v281 = vpack.c.b16 %v272, %v271
      %v282 = vpack.c.b16 %v274, %v273
      %291 = vmatprep.subr.bf16.mxu0 0
      %292 = vmatpush1.bf16.msra.mxu0 %v282
      %293 = vmatprep.subr.bf16.mxu0 0
      %294 = vmatpush1.bf16.msra.mxu0 %v281
      %295 = vmatprep.subr.bf16.mxu0 0
      %296 = vmatpush1.bf16.msra.mxu0 %v280
      %297 = vmatprep.subr.bf16.mxu0 0
      %298 = vmatpush1.bf16.msra.mxu0 %v279
      %299 = vmatprep.subr.bf16.mxu0 0
      %300 = vmatpush1.bf16.msra.mxu0 %v278
      %301 = vmatprep.subr.bf16.mxu0 0
      %302 = vmatpush1.bf16.msra.mxu0 %v277
      %303 = vmatprep.subr.bf16.mxu0 0
      %304 = vmatpush1.bf16.msra.mxu0 %v276
      %305 = vmatprep.subr.bf16.mxu0 0
      %306 = vmatpush1.bf16.msra.mxu0 %v275
      %307 = vmatprep.subr.bf16.mxu0 0
      %308 = vmatpush2.bf16.msra.mxu0 0
      %309 = vmatprep.subr.bf16.mxu0 0
      %310 = vmatpush2.bf16.msra.mxu0 0
      %311 = vmatprep.subr.bf16.mxu0 0
      %312 = vmatpush2.bf16.msra.mxu0 0
      %313 = vmatprep.subr.bf16.mxu0 0
      %314 = vmatpush2.bf16.msra.mxu0 0
      %315 = vmatprep.subr.bf16.mxu0 0
      %316 = vmatpush2.bf16.msra.mxu0 0
      %317 = vmatprep.subr.bf16.mxu0 0
      %318 = vmatpush2.bf16.msra.mxu0 0
      %319 = vmatprep.subr.bf16.mxu0 0
      %320 = vmatpush2.bf16.msra.mxu0 0
      %321 = vmatprep.subr.bf16.mxu0 0
      %322 = vmatpush2.bf16.msra.mxu0 0
      %323 = vmatprep.mubr.bf16.mxu0 0
      %324 = vmatmul.mubr.bf16.gmra.mxu0 %v241
      %v325 = vpop.f32.mrf.mxu0
      %v326 = vadd.f32 0.0, %v325
      %v327 = vpop.f32.mrf.mxu0
      %v328 = vpop.f32.mrf.mxu0
      %v329 = vpop.f32.mrf.mxu0
      %330 = vdwg.mxu0
      %v347 = vunpack.c.l.b16 %v197
      %v348 = vunpack.c.l.b16 %v198
      %v349 = vunpack.c.l.b16 %v199
      %v350 = vunpack.c.l.b16 %v200
      %v351 = vunpack.c.l.b16 %v201
      %v352 = vunpack.c.l.b16 %v202
      %v353 = vunpack.c.l.b16 %v203
      %v354 = vunpack.c.l.b16 %v204
      %v355 = vunpack.c.l.b16 %v205
      %v356 = vunpack.c.l.b16 %v206
      %v357 = vunpack.c.l.b16 %v207
      %v358 = vunpack.c.l.b16 %v208
      %v359 = vunpack.c.l.b16 %v209
      %v360 = vunpack.c.l.b16 %v210
      %v361 = vunpack.c.l.b16 %v211
      %v362 = vunpack.c.l.b16 %v212
      %v363 = vpack.c.b16 %v348, %v347
      %v364 = vpack.c.b16 %v350, %v349
      %v365 = vpack.c.b16 %v352, %v351
      %v366 = vpack.c.b16 %v354, %v353
      %v367 = vpack.c.b16 %v356, %v355
      %v368 = vpack.c.b16 %v358, %v357
      %v369 = vpack.c.b16 %v360, %v359
      %v370 = vpack.c.b16 %v362, %v361
      %379 = vmatprep.subr.bf16.mxu0 0
      %380 = vmatpush1.bf16.msra.mxu0 %v370
      %381 = vmatprep.subr.bf16.mxu0 0
      %382 = vmatpush1.bf16.msra.mxu0 %v369
      %383 = vmatprep.subr.bf16.mxu0 0
      %384 = vmatpush1.bf16.msra.mxu0 %v368
      %385 = vmatprep.subr.bf16.mxu0 0
      %386 = vmatpush1.bf16.msra.mxu0 %v367
      %387 = vmatprep.subr.bf16.mxu0 0
      %388 = vmatpush1.bf16.msra.mxu0 %v366
      %389 = vmatprep.subr.bf16.mxu0 0
      %390 = vmatpush1.bf16.msra.mxu0 %v365
      %391 = vmatprep.subr.bf16.mxu0 0
      %392 = vmatpush1.bf16.msra.mxu0 %v364
      %393 = vmatprep.subr.bf16.mxu0 0
      %394 = vmatpush1.bf16.msra.mxu0 %v363
      %395 = vmatprep.subr.bf16.mxu0 0
      %396 = vmatpush2.bf16.msra.mxu0 0
      %397 = vmatprep.subr.bf16.mxu0 0
      %398 = vmatpush2.bf16.msra.mxu0 0
      %399 = vmatprep.subr.bf16.mxu0 0
      %400 = vmatpush2.bf16.msra.mxu0 0
      %401 = vmatprep.subr.bf16.mxu0 0
      %402 = vmatpush2.bf16.msra.mxu0 0
      %403 = vmatprep.subr.bf16.mxu0 0
      %404 = vmatpush2.bf16.msra.mxu0 0
      %405 = vmatprep.subr.bf16.mxu0 0
      %406 = vmatpush2.bf16.msra.mxu0 0
      %407 = vmatprep.subr.bf16.mxu0 0
      %408 = vmatpush2.bf16.msra.mxu0 0
      %409 = vmatprep.subr.bf16.mxu0 0
      %410 = vmatpush2.bf16.msra.mxu0 0
      %411 = vmatprep.mubr.bf16.mxu0 0
      %412 = vmatmul.mubr.bf16.gmra.mxu0 %v195
      %v413 = vpop.f32.mrf.mxu0
      %v414 = vadd.f32 %v326, %v413
      %v415 = vpop.f32.mrf.mxu0
      %v416 = vpop.f32.mrf.mxu0
      %v417 = vpop.f32.mrf.mxu0
      %418 = vdwg.mxu0
      %s419 = scalar_lea.vmem %s1, 128
      %v420 = vld [vmem:[%s419] sm:$0xf]
      %v421 = vld [vmem:[%s419 + $0x4] sm:$0xf]
      %v422 = vld [vmem:[%s419 + $0x8] sm:$0xf]
      %v423 = vld [vmem:[%s419 + $0xc] sm:$0xf]
      %v424 = vld [vmem:[%s419 + $0x10] sm:$0xf]
      %v425 = vld [vmem:[%s419 + $0x14] sm:$0xf]
      %v426 = vld [vmem:[%s419 + $0x18] sm:$0xf]
      %v427 = vld [vmem:[%s419 + $0x1c] sm:$0xf]
      %v428 = vld [vmem:[%s419 + $0x20] sm:$0xf]
      %v429 = vld [vmem:[%s419 + $0x24] sm:$0xf]
      %v430 = vld [vmem:[%s419 + $0x28] sm:$0xf]
      %v431 = vld [vmem:[%s419 + $0x2c] sm:$0xf]
      %v432 = vld [vmem:[%s419 + $0x30] sm:$0xf]
      %v433 = vld [vmem:[%s419 + $0x34] sm:$0xf]
      %v434 = vld [vmem:[%s419 + $0x38] sm:$0xf]
      %v435 = vld [vmem:[%s419 + $0x3c] sm:$0xf]
      %v436 = vrot.slane %v234, 1
      %v454 = vunpack.c.l.b16 %v420
      %v455 = vunpack.c.l.b16 %v421
      %v456 = vunpack.c.l.b16 %v422
      %v457 = vunpack.c.l.b16 %v423
      %v458 = vunpack.c.l.b16 %v424
      %v459 = vunpack.c.l.b16 %v425
      %v460 = vunpack.c.l.b16 %v426
      %v461 = vunpack.c.l.b16 %v427
      %v462 = vunpack.c.l.b16 %v428
      %v463 = vunpack.c.l.b16 %v429
      %v464 = vunpack.c.l.b16 %v430
      %v465 = vunpack.c.l.b16 %v431
      %v466 = vunpack.c.l.b16 %v432
      %v467 = vunpack.c.l.b16 %v433
      %v468 = vunpack.c.l.b16 %v434
      %v469 = vunpack.c.l.b16 %v435
      %v470 = vpack.c.b16 %v455, %v454
      %v471 = vpack.c.b16 %v457, %v456
      %v472 = vpack.c.b16 %v459, %v458
      %v473 = vpack.c.b16 %v461, %v460
      %v474 = vpack.c.b16 %v463, %v462
      %v475 = vpack.c.b16 %v465, %v464
      %v476 = vpack.c.b16 %v467, %v466
      %v477 = vpack.c.b16 %v469, %v468
      %486 = vmatprep.subr.bf16.mxu0 0
      %487 = vmatpush1.bf16.msra.mxu0 %v477
      %488 = vmatprep.subr.bf16.mxu0 0
      %489 = vmatpush1.bf16.msra.mxu0 %v476
      %490 = vmatprep.subr.bf16.mxu0 0
      %491 = vmatpush1.bf16.msra.mxu0 %v475
      %492 = vmatprep.subr.bf16.mxu0 0
      %493 = vmatpush1.bf16.msra.mxu0 %v474
      %494 = vmatprep.subr.bf16.mxu0 0
      %495 = vmatpush1.bf16.msra.mxu0 %v473
      %496 = vmatprep.subr.bf16.mxu0 0
      %497 = vmatpush1.bf16.msra.mxu0 %v472
      %498 = vmatprep.subr.bf16.mxu0 0
      %499 = vmatpush1.bf16.msra.mxu0 %v471
      %500 = vmatprep.subr.bf16.mxu0 0
      %501 = vmatpush1.bf16.msra.mxu0 %v470
      %502 = vmatprep.subr.bf16.mxu0 0
      %503 = vmatpush2.bf16.msra.mxu0 0
      %504 = vmatprep.subr.bf16.mxu0 0
      %505 = vmatpush2.bf16.msra.mxu0 0
      %506 = vmatprep.subr.bf16.mxu0 0
      %507 = vmatpush2.bf16.msra.mxu0 0
      %508 = vmatprep.subr.bf16.mxu0 0
      %509 = vmatpush2.bf16.msra.mxu0 0
      %510 = vmatprep.subr.bf16.mxu0 0
      %511 = vmatpush2.bf16.msra.mxu0 0
      %512 = vmatprep.subr.bf16.mxu0 0
      %513 = vmatpush2.bf16.msra.mxu0 0
      %514 = vmatprep.subr.bf16.mxu0 0
      %515 = vmatpush2.bf16.msra.mxu0 0
      %516 = vmatprep.subr.bf16.mxu0 0
      %517 = vmatpush2.bf16.msra.mxu0 0
      %518 = vmatprep.mubr.bf16.mxu0 0
      %519 = vmatmul.mubr.bf16.gmra.mxu0 %v436
      %v520 = vpop.f32.mrf.mxu0
      %v521 = vadd.f32 0.0, %v520
      %v522 = vpop.f32.mrf.mxu0
      %v523 = vpop.f32.mrf.mxu0
      %v524 = vpop.f32.mrf.mxu0
      %525 = vdwg.mxu0
      %v526 = vadd.f32 %v414, %v521
      %s527 = sadd.s32 %s19, 1
      %s528 = smul.u32 %s527, 2
      %s529 = smul.addr %s528, 4
      %s530 = scalar_lea.vmem %s182, %s529
      %v531 = vld [vmem:[%s530] sm:$0xf]
      %v532 = vld [vmem:[%s530 + $0x4] sm:$0x1]
      %s533 = scalar_lea.vmem %s1, 192
      %v534 = vld [vmem:[%s533] sm:$0xf]
      %v535 = vld [vmem:[%s533 + $0x4] sm:$0xf]
      %v536 = vld [vmem:[%s533 + $0x8] sm:$0xf]
      %v537 = vld [vmem:[%s533 + $0xc] sm:$0xf]
      %v538 = vld [vmem:[%s533 + $0x10] sm:$0xf]
      %v539 = vld [vmem:[%s533 + $0x14] sm:$0xf]
      %v540 = vld [vmem:[%s533 + $0x18] sm:$0xf]
      %v541 = vld [vmem:[%s533 + $0x1c] sm:$0xf]
      %v542 = vld [vmem:[%s533 + $0x20] sm:$0xf]
      %v543 = vld [vmem:[%s533 + $0x24] sm:$0xf]
      %v544 = vld [vmem:[%s533 + $0x28] sm:$0xf]
      %v545 = vld [vmem:[%s533 + $0x2c] sm:$0xf]
      %v546 = vld [vmem:[%s533 + $0x30] sm:$0xf]
      %v547 = vld [vmem:[%s533 + $0x34] sm:$0xf]
      %v548 = vld [vmem:[%s533 + $0x38] sm:$0xf]
      %v549 = vld [vmem:[%s533 + $0x3c] sm:$0xf]
      %v566 = vunpack.c.l.b16 %v534
      %v567 = vunpack.c.l.b16 %v535
      %v568 = vunpack.c.l.b16 %v536
      %v569 = vunpack.c.l.b16 %v537
      %v570 = vunpack.c.l.b16 %v538
      %v571 = vunpack.c.l.b16 %v539
      %v572 = vunpack.c.l.b16 %v540
      %v573 = vunpack.c.l.b16 %v541
      %v574 = vunpack.c.l.b16 %v542
      %v575 = vunpack.c.l.b16 %v543
      %v576 = vunpack.c.l.b16 %v544
      %v577 = vunpack.c.l.b16 %v545
      %v578 = vunpack.c.l.b16 %v546
      %v579 = vunpack.c.l.b16 %v547
      %v580 = vunpack.c.l.b16 %v548
      %v581 = vunpack.c.l.b16 %v549
      %v582 = vpack.c.b16 %v567, %v566
      %v583 = vpack.c.b16 %v569, %v568
      %v584 = vpack.c.b16 %v571, %v570
      %v585 = vpack.c.b16 %v573, %v572
      %v586 = vpack.c.b16 %v575, %v574
      %v587 = vpack.c.b16 %v577, %v576
      %v588 = vpack.c.b16 %v579, %v578
      %v589 = vpack.c.b16 %v581, %v580
      %598 = vmatprep.subr.bf16.mxu0 0
      %599 = vmatpush1.bf16.msra.mxu0 %v589
      %600 = vmatprep.subr.bf16.mxu0 0
      %601 = vmatpush1.bf16.msra.mxu0 %v588
      %602 = vmatprep.subr.bf16.mxu0 0
      %603 = vmatpush1.bf16.msra.mxu0 %v587
      %604 = vmatprep.subr.bf16.mxu0 0
      %605 = vmatpush1.bf16.msra.mxu0 %v586
      %606 = vmatprep.subr.bf16.mxu0 0
      %607 = vmatpush1.bf16.msra.mxu0 %v585
      %608 = vmatprep.subr.bf16.mxu0 0
      %609 = vmatpush1.bf16.msra.mxu0 %v584
      %610 = vmatprep.subr.bf16.mxu0 0
      %611 = vmatpush1.bf16.msra.mxu0 %v583
      %612 = vmatprep.subr.bf16.mxu0 0
      %613 = vmatpush1.bf16.msra.mxu0 %v582
      %614 = vmatprep.subr.bf16.mxu0 0
      %615 = vmatpush2.bf16.msra.mxu0 0
      %616 = vmatprep.subr.bf16.mxu0 0
      %617 = vmatpush2.bf16.msra.mxu0 0
      %618 = vmatprep.subr.bf16.mxu0 0
      %619 = vmatpush2.bf16.msra.mxu0 0
      %620 = vmatprep.subr.bf16.mxu0 0
      %621 = vmatpush2.bf16.msra.mxu0 0
      %622 = vmatprep.subr.bf16.mxu0 0
      %623 = vmatpush2.bf16.msra.mxu0 0
      %624 = vmatprep.subr.bf16.mxu0 0
      %625 = vmatpush2.bf16.msra.mxu0 0
      %626 = vmatprep.subr.bf16.mxu0 0
      %627 = vmatpush2.bf16.msra.mxu0 0
      %628 = vmatprep.subr.bf16.mxu0 0
      %629 = vmatpush2.bf16.msra.mxu0 0
      %630 = vmatprep.mubr.bf16.mxu0 0
      %631 = vmatmul.mubr.bf16.gmra.mxu0 %v531
      %v632 = vpop.f32.mrf.mxu0
      %v633 = vadd.f32 0.0, %v632
      %v634 = vpop.f32.mrf.mxu0
      %v635 = vpop.f32.mrf.mxu0
      %v636 = vpop.f32.mrf.mxu0
      %637 = vdwg.mxu0
      %v638 = vadd.f32 %v526, %v633
      %s639 = scalar_lea.vmem %s1, 256
      %v640 = vld [vmem:[%s639] sm:$0xf]
      %v641 = vld [vmem:[%s639 + $0x4] sm:$0xf]
      %v642 = vld [vmem:[%s639 + $0x8] sm:$0xf]
      %v643 = vld [vmem:[%s639 + $0xc] sm:$0xf]
      %v644 = vld [vmem:[%s639 + $0x10] sm:$0xf]
      %v645 = vld [vmem:[%s639 + $0x14] sm:$0xf]
      %v646 = vld [vmem:[%s639 + $0x18] sm:$0xf]
      %v647 = vld [vmem:[%s639 + $0x1c] sm:$0xf]
      %v648 = vld [vmem:[%s639 + $0x20] sm:$0xf]
      %v649 = vld [vmem:[%s639 + $0x24] sm:$0xf]
      %v650 = vld [vmem:[%s639 + $0x28] sm:$0xf]
      %v651 = vld [vmem:[%s639 + $0x2c] sm:$0xf]
      %v652 = vld [vmem:[%s639 + $0x30] sm:$0xf]
      %v653 = vld [vmem:[%s639 + $0x34] sm:$0xf]
      %v654 = vld [vmem:[%s639 + $0x38] sm:$0xf]
      %v655 = vld [vmem:[%s639 + $0x3c] sm:$0xf]
      %v658 = vunpack.c.l.b16 %v531
      %v659 = vunpack.c.l.b16 %v532
      %v660 = vpack.c.b16 %v659, %v658
      %v662 = vshrl.u32 %v660, 16
      %v664 = vshll.u32 %v660, 16
      %v666 = vrot.slane %v664, 1
      %v667 = vor.u32 %v662, %v666
      %v685 = vunpack.c.l.b16 %v640
      %v686 = vunpack.c.l.b16 %v641
      %v687 = vunpack.c.l.b16 %v642
      %v688 = vunpack.c.l.b16 %v643
      %v689 = vunpack.c.l.b16 %v644
      %v690 = vunpack.c.l.b16 %v645
      %v691 = vunpack.c.l.b16 %v646
      %v692 = vunpack.c.l.b16 %v647
      %v693 = vunpack.c.l.b16 %v648
      %v694 = vunpack.c.l.b16 %v649
      %v695 = vunpack.c.l.b16 %v650
      %v696 = vunpack.c.l.b16 %v651
      %v697 = vunpack.c.l.b16 %v652
      %v698 = vunpack.c.l.b16 %v653
      %v699 = vunpack.c.l.b16 %v654
      %v700 = vunpack.c.l.b16 %v655
      %v701 = vpack.c.b16 %v686, %v685
      %v702 = vpack.c.b16 %v688, %v687
      %v703 = vpack.c.b16 %v690, %v689
      %v704 = vpack.c.b16 %v692, %v691
      %v705 = vpack.c.b16 %v694, %v693
      %v706 = vpack.c.b16 %v696, %v695
      %v707 = vpack.c.b16 %v698, %v697
      %v708 = vpack.c.b16 %v700, %v699
      %717 = vmatprep.subr.bf16.mxu0 0
      %718 = vmatpush1.bf16.msra.mxu0 %v708
      %719 = vmatprep.subr.bf16.mxu0 0
      %720 = vmatpush1.bf16.msra.mxu0 %v707
      %721 = vmatprep.subr.bf16.mxu0 0
      %722 = vmatpush1.bf16.msra.mxu0 %v706
      %723 = vmatprep.subr.bf16.mxu0 0
      %724 = vmatpush1.bf16.msra.mxu0 %v705
      %725 = vmatprep.subr.bf16.mxu0 0
      %726 = vmatpush1.bf16.msra.mxu0 %v704
      %727 = vmatprep.subr.bf16.mxu0 0
      %728 = vmatpush1.bf16.msra.mxu0 %v703
      %729 = vmatprep.subr.bf16.mxu0 0
      %730 = vmatpush1.bf16.msra.mxu0 %v702
      %731 = vmatprep.subr.bf16.mxu0 0
      %732 = vmatpush1.bf16.msra.mxu0 %v701
      %733 = vmatprep.subr.bf16.mxu0 0
      %734 = vmatpush2.bf16.msra.mxu0 0
      %735 = vmatprep.subr.bf16.mxu0 0
      %736 = vmatpush2.bf16.msra.mxu0 0
      %737 = vmatprep.subr.bf16.mxu0 0
      %738 = vmatpush2.bf16.msra.mxu0 0
      %739 = vmatprep.subr.bf16.mxu0 0
      %740 = vmatpush2.bf16.msra.mxu0 0
      %741 = vmatprep.subr.bf16.mxu0 0
      %742 = vmatpush2.bf16.msra.mxu0 0
      %743 = vmatprep.subr.bf16.mxu0 0
      %744 = vmatpush2.bf16.msra.mxu0 0
      %745 = vmatprep.subr.bf16.mxu0 0
      %746 = vmatpush2.bf16.msra.mxu0 0
      %747 = vmatprep.subr.bf16.mxu0 0
      %748 = vmatpush2.bf16.msra.mxu0 0
      %749 = vmatprep.mubr.bf16.mxu0 0
      %750 = vmatmul.mubr.bf16.gmra.mxu0 %v667
      %v751 = vpop.f32.mrf.mxu0
      %v752 = vadd.f32 0.0, %v751
      %v753 = vpop.f32.mrf.mxu0
      %v754 = vpop.f32.mrf.mxu0
      %v755 = vpop.f32.mrf.mxu0
      %756 = vdwg.mxu0
      %v757 = vadd.f32 %v638, %v752
      %s758 = scalar_lea.vmem %s1, 320
      %v759 = vld [vmem:[%s758] sm:$0xf]
      %v760 = vld [vmem:[%s758 + $0x4] sm:$0xf]
      %v761 = vld [vmem:[%s758 + $0x8] sm:$0xf]
      %v762 = vld [vmem:[%s758 + $0xc] sm:$0xf]
      %v763 = vld [vmem:[%s758 + $0x10] sm:$0xf]
      %v764 = vld [vmem:[%s758 + $0x14] sm:$0xf]
      %v765 = vld [vmem:[%s758 + $0x18] sm:$0xf]
      %v766 = vld [vmem:[%s758 + $0x1c] sm:$0xf]
      %v767 = vld [vmem:[%s758 + $0x20] sm:$0xf]
      %v768 = vld [vmem:[%s758 + $0x24] sm:$0xf]
      %v769 = vld [vmem:[%s758 + $0x28] sm:$0xf]
      %v770 = vld [vmem:[%s758 + $0x2c] sm:$0xf]
      %v771 = vld [vmem:[%s758 + $0x30] sm:$0xf]
      %v772 = vld [vmem:[%s758 + $0x34] sm:$0xf]
      %v773 = vld [vmem:[%s758 + $0x38] sm:$0xf]
      %v774 = vld [vmem:[%s758 + $0x3c] sm:$0xf]
      %v775 = vrot.slane %v660, 1
      %v793 = vunpack.c.l.b16 %v759
      %v794 = vunpack.c.l.b16 %v760
      %v795 = vunpack.c.l.b16 %v761
      %v796 = vunpack.c.l.b16 %v762
      %v797 = vunpack.c.l.b16 %v763
      %v798 = vunpack.c.l.b16 %v764
      %v799 = vunpack.c.l.b16 %v765
      %v800 = vunpack.c.l.b16 %v766
      %v801 = vunpack.c.l.b16 %v767
      %v802 = vunpack.c.l.b16 %v768
      %v803 = vunpack.c.l.b16 %v769
      %v804 = vunpack.c.l.b16 %v770
      %v805 = vunpack.c.l.b16 %v771
      %v806 = vunpack.c.l.b16 %v772
      %v807 = vunpack.c.l.b16 %v773
      %v808 = vunpack.c.l.b16 %v774
      %v809 = vpack.c.b16 %v794, %v793
      %v810 = vpack.c.b16 %v796, %v795
      %v811 = vpack.c.b16 %v798, %v797
      %v812 = vpack.c.b16 %v800, %v799
      %v813 = vpack.c.b16 %v802, %v801
      %v814 = vpack.c.b16 %v804, %v803
      %v815 = vpack.c.b16 %v806, %v805
      %v816 = vpack.c.b16 %v808, %v807
      %825 = vmatprep.subr.bf16.mxu0 0
      %826 = vmatpush1.bf16.msra.mxu0 %v816
      %827 = vmatprep.subr.bf16.mxu0 0
      %828 = vmatpush1.bf16.msra.mxu0 %v815
      %829 = vmatprep.subr.bf16.mxu0 0
      %830 = vmatpush1.bf16.msra.mxu0 %v814
      %831 = vmatprep.subr.bf16.mxu0 0
      %832 = vmatpush1.bf16.msra.mxu0 %v813
      %833 = vmatprep.subr.bf16.mxu0 0
      %834 = vmatpush1.bf16.msra.mxu0 %v812
      %835 = vmatprep.subr.bf16.mxu0 0
      %836 = vmatpush1.bf16.msra.mxu0 %v811
      %837 = vmatprep.subr.bf16.mxu0 0
      %838 = vmatpush1.bf16.msra.mxu0 %v810
      %839 = vmatprep.subr.bf16.mxu0 0
      %840 = vmatpush1.bf16.msra.mxu0 %v809
      %841 = vmatprep.subr.bf16.mxu0 0
      %842 = vmatpush2.bf16.msra.mxu0 0
      %843 = vmatprep.subr.bf16.mxu0 0
      %844 = vmatpush2.bf16.msra.mxu0 0
      %845 = vmatprep.subr.bf16.mxu0 0
      %846 = vmatpush2.bf16.msra.mxu0 0
      %847 = vmatprep.subr.bf16.mxu0 0
      %848 = vmatpush2.bf16.msra.mxu0 0
      %849 = vmatprep.subr.bf16.mxu0 0
      %850 = vmatpush2.bf16.msra.mxu0 0
      %851 = vmatprep.subr.bf16.mxu0 0
      %852 = vmatpush2.bf16.msra.mxu0 0
      %853 = vmatprep.subr.bf16.mxu0 0
      %854 = vmatpush2.bf16.msra.mxu0 0
      %855 = vmatprep.subr.bf16.mxu0 0
      %856 = vmatpush2.bf16.msra.mxu0 0
      %857 = vmatprep.mubr.bf16.mxu0 0
      %858 = vmatmul.mubr.bf16.gmra.mxu0 %v775
      %v859 = vpop.f32.mrf.mxu0
      %v860 = vadd.f32 0.0, %v859
      %v861 = vpop.f32.mrf.mxu0
      %v862 = vpop.f32.mrf.mxu0
      %v863 = vpop.f32.mrf.mxu0
      %864 = vdwg.mxu0
      %v865 = vadd.f32 %v757, %v860
      %s866 = sadd.s32 %s19, 2
      %s867 = smul.u32 %s866, 2
      %s868 = smul.addr %s867, 4
      %s869 = scalar_lea.vmem %s182, %s868
      %v870 = vld [vmem:[%s869] sm:$0xf]
      %v871 = vld [vmem:[%s869 + $0x4] sm:$0x1]
      %s872 = scalar_lea.vmem %s1, 384
      %v873 = vld [vmem:[%s872] sm:$0xf]
      %v874 = vld [vmem:[%s872 + $0x4] sm:$0xf]
      %v875 = vld [vmem:[%s872 + $0x8] sm:$0xf]
      %v876 = vld [vmem:[%s872 + $0xc] sm:$0xf]
      %v877 = vld [vmem:[%s872 + $0x10] sm:$0xf]
      %v878 = vld [vmem:[%s872 + $0x14] sm:$0xf]
      %v879 = vld [vmem:[%s872 + $0x18] sm:$0xf]
      %v880 = vld [vmem:[%s872 + $0x1c] sm:$0xf]
      %v881 = vld [vmem:[%s872 + $0x20] sm:$0xf]
      %v882 = vld [vmem:[%s872 + $0x24] sm:$0xf]
      %v883 = vld [vmem:[%s872 + $0x28] sm:$0xf]
      %v884 = vld [vmem:[%s872 + $0x2c] sm:$0xf]
      %v885 = vld [vmem:[%s872 + $0x30] sm:$0xf]
      %v886 = vld [vmem:[%s872 + $0x34] sm:$0xf]
      %v887 = vld [vmem:[%s872 + $0x38] sm:$0xf]
      %v888 = vld [vmem:[%s872 + $0x3c] sm:$0xf]
      %v905 = vunpack.c.l.b16 %v873
      %v906 = vunpack.c.l.b16 %v874
      %v907 = vunpack.c.l.b16 %v875
      %v908 = vunpack.c.l.b16 %v876
      %v909 = vunpack.c.l.b16 %v877
      %v910 = vunpack.c.l.b16 %v878
      %v911 = vunpack.c.l.b16 %v879
      %v912 = vunpack.c.l.b16 %v880
      %v913 = vunpack.c.l.b16 %v881
      %v914 = vunpack.c.l.b16 %v882
      %v915 = vunpack.c.l.b16 %v883
      %v916 = vunpack.c.l.b16 %v884
      %v917 = vunpack.c.l.b16 %v885
      %v918 = vunpack.c.l.b16 %v886
      %v919 = vunpack.c.l.b16 %v887
      %v920 = vunpack.c.l.b16 %v888
      %v921 = vpack.c.b16 %v906, %v905
      %v922 = vpack.c.b16 %v908, %v907
      %v923 = vpack.c.b16 %v910, %v909
      %v924 = vpack.c.b16 %v912, %v911
      %v925 = vpack.c.b16 %v914, %v913
      %v926 = vpack.c.b16 %v916, %v915
      %v927 = vpack.c.b16 %v918, %v917
      %v928 = vpack.c.b16 %v920, %v919
      %937 = vmatprep.subr.bf16.mxu0 0
      %938 = vmatpush1.bf16.msra.mxu0 %v928
      %939 = vmatprep.subr.bf16.mxu0 0
      %940 = vmatpush1.bf16.msra.mxu0 %v927
      %941 = vmatprep.subr.bf16.mxu0 0
      %942 = vmatpush1.bf16.msra.mxu0 %v926
      %943 = vmatprep.subr.bf16.mxu0 0
      %944 = vmatpush1.bf16.msra.mxu0 %v925
      %945 = vmatprep.subr.bf16.mxu0 0
      %946 = vmatpush1.bf16.msra.mxu0 %v924
      %947 = vmatprep.subr.bf16.mxu0 0
      %948 = vmatpush1.bf16.msra.mxu0 %v923
      %949 = vmatprep.subr.bf16.mxu0 0
      %950 = vmatpush1.bf16.msra.mxu0 %v922
      %951 = vmatprep.subr.bf16.mxu0 0
      %952 = vmatpush1.bf16.msra.mxu0 %v921
      %953 = vmatprep.subr.bf16.mxu0 0
      %954 = vmatpush2.bf16.msra.mxu0 0
      %955 = vmatprep.subr.bf16.mxu0 0
      %956 = vmatpush2.bf16.msra.mxu0 0
      %957 = vmatprep.subr.bf16.mxu0 0
      %958 = vmatpush2.bf16.msra.mxu0 0
      %959 = vmatprep.subr.bf16.mxu0 0
      %960 = vmatpush2.bf16.msra.mxu0 0
      %961 = vmatprep.subr.bf16.mxu0 0
      %962 = vmatpush2.bf16.msra.mxu0 0
      %963 = vmatprep.subr.bf16.mxu0 0
      %964 = vmatpush2.bf16.msra.mxu0 0
      %965 = vmatprep.subr.bf16.mxu0 0
      %966 = vmatpush2.bf16.msra.mxu0 0
      %967 = vmatprep.subr.bf16.mxu0 0
      %968 = vmatpush2.bf16.msra.mxu0 0
      %969 = vmatprep.mubr.bf16.mxu0 0
      %970 = vmatmul.mubr.bf16.gmra.mxu0 %v870
      %v971 = vpop.f32.mrf.mxu0
      %v972 = vadd.f32 0.0, %v971
      %v973 = vpop.f32.mrf.mxu0
      %v974 = vpop.f32.mrf.mxu0
      %v975 = vpop.f32.mrf.mxu0
      %976 = vdwg.mxu0
      %v977 = vadd.f32 %v865, %v972
      %s978 = scalar_lea.vmem %s1, 448
      %v979 = vld [vmem:[%s978] sm:$0xf]
      %v980 = vld [vmem:[%s978 + $0x4] sm:$0xf]
      %v981 = vld [vmem:[%s978 + $0x8] sm:$0xf]
      %v982 = vld [vmem:[%s978 + $0xc] sm:$0xf]
      %v983 = vld [vmem:[%s978 + $0x10] sm:$0xf]
      %v984 = vld [vmem:[%s978 + $0x14] sm:$0xf]
      %v985 = vld [vmem:[%s978 + $0x18] sm:$0xf]
      %v986 = vld [vmem:[%s978 + $0x1c] sm:$0xf]
      %v987 = vld [vmem:[%s978 + $0x20] sm:$0xf]
      %v988 = vld [vmem:[%s978 + $0x24] sm:$0xf]
      %v989 = vld [vmem:[%s978 + $0x28] sm:$0xf]
      %v990 = vld [vmem:[%s978 + $0x2c] sm:$0xf]
      %v991 = vld [vmem:[%s978 + $0x30] sm:$0xf]
      %v992 = vld [vmem:[%s978 + $0x34] sm:$0xf]
      %v993 = vld [vmem:[%s978 + $0x38] sm:$0xf]
      %v994 = vld [vmem:[%s978 + $0x3c] sm:$0xf]
      %v997 = vunpack.c.l.b16 %v870
      %v998 = vunpack.c.l.b16 %v871
      %v999 = vpack.c.b16 %v998, %v997
      %v1001 = vshrl.u32 %v999, 16
      %v1003 = vshll.u32 %v999, 16
      %v1005 = vrot.slane %v1003, 1
      %v1006 = vor.u32 %v1001, %v1005
      %v1024 = vunpack.c.l.b16 %v979
      %v1025 = vunpack.c.l.b16 %v980
      %v1026 = vunpack.c.l.b16 %v981
      %v1027 = vunpack.c.l.b16 %v982
      %v1028 = vunpack.c.l.b16 %v983
      %v1029 = vunpack.c.l.b16 %v984
      %v1030 = vunpack.c.l.b16 %v985
      %v1031 = vunpack.c.l.b16 %v986
      %v1032 = vunpack.c.l.b16 %v987
      %v1033 = vunpack.c.l.b16 %v988
      %v1034 = vunpack.c.l.b16 %v989
      %v1035 = vunpack.c.l.b16 %v990
      %v1036 = vunpack.c.l.b16 %v991
      %v1037 = vunpack.c.l.b16 %v992
      %v1038 = vunpack.c.l.b16 %v993
      %v1039 = vunpack.c.l.b16 %v994
      %v1040 = vpack.c.b16 %v1025, %v1024
      %v1041 = vpack.c.b16 %v1027, %v1026
      %v1042 = vpack.c.b16 %v1029, %v1028
      %v1043 = vpack.c.b16 %v1031, %v1030
      %v1044 = vpack.c.b16 %v1033, %v1032
      %v1045 = vpack.c.b16 %v1035, %v1034
      %v1046 = vpack.c.b16 %v1037, %v1036
      %v1047 = vpack.c.b16 %v1039, %v1038
      %1056 = vmatprep.subr.bf16.mxu0 0
      %1057 = vmatpush1.bf16.msra.mxu0 %v1047
      %1058 = vmatprep.subr.bf16.mxu0 0
      %1059 = vmatpush1.bf16.msra.mxu0 %v1046
      %1060 = vmatprep.subr.bf16.mxu0 0
      %1061 = vmatpush1.bf16.msra.mxu0 %v1045
      %1062 = vmatprep.subr.bf16.mxu0 0
      %1063 = vmatpush1.bf16.msra.mxu0 %v1044
      %1064 = vmatprep.subr.bf16.mxu0 0
      %1065 = vmatpush1.bf16.msra.mxu0 %v1043
      %1066 = vmatprep.subr.bf16.mxu0 0
      %1067 = vmatpush1.bf16.msra.mxu0 %v1042
      %1068 = vmatprep.subr.bf16.mxu0 0
      %1069 = vmatpush1.bf16.msra.mxu0 %v1041
      %1070 = vmatprep.subr.bf16.mxu0 0
      %1071 = vmatpush1.bf16.msra.mxu0 %v1040
      %1072 = vmatprep.subr.bf16.mxu0 0
      %1073 = vmatpush2.bf16.msra.mxu0 0
      %1074 = vmatprep.subr.bf16.mxu0 0
      %1075 = vmatpush2.bf16.msra.mxu0 0
      %1076 = vmatprep.subr.bf16.mxu0 0
      %1077 = vmatpush2.bf16.msra.mxu0 0
      %1078 = vmatprep.subr.bf16.mxu0 0
      %1079 = vmatpush2.bf16.msra.mxu0 0
      %1080 = vmatprep.subr.bf16.mxu0 0
      %1081 = vmatpush2.bf16.msra.mxu0 0
      %1082 = vmatprep.subr.bf16.mxu0 0
      %1083 = vmatpush2.bf16.msra.mxu0 0
      %1084 = vmatprep.subr.bf16.mxu0 0
      %1085 = vmatpush2.bf16.msra.mxu0 0
      %1086 = vmatprep.subr.bf16.mxu0 0
      %1087 = vmatpush2.bf16.msra.mxu0 0
      %1088 = vmatprep.mubr.bf16.mxu0 0
      %1089 = vmatmul.mubr.bf16.gmra.mxu0 %v1006
      %v1090 = vpop.f32.mrf.mxu0
      %v1091 = vadd.f32 0.0, %v1090
      %v1092 = vpop.f32.mrf.mxu0
      %v1093 = vpop.f32.mrf.mxu0
      %v1094 = vpop.f32.mrf.mxu0
      %1095 = vdwg.mxu0
      %v1096 = vadd.f32 %v977, %v1091
      %s1097 = scalar_lea.vmem %s1, 512
      %v1098 = vld [vmem:[%s1097] sm:$0xf]
      %v1099 = vld [vmem:[%s1097 + $0x4] sm:$0xf]
      %v1100 = vld [vmem:[%s1097 + $0x8] sm:$0xf]
      %v1101 = vld [vmem:[%s1097 + $0xc] sm:$0xf]
      %v1102 = vld [vmem:[%s1097 + $0x10] sm:$0xf]
      %v1103 = vld [vmem:[%s1097 + $0x14] sm:$0xf]
      %v1104 = vld [vmem:[%s1097 + $0x18] sm:$0xf]
      %v1105 = vld [vmem:[%s1097 + $0x1c] sm:$0xf]
      %v1106 = vld [vmem:[%s1097 + $0x20] sm:$0xf]
      %v1107 = vld [vmem:[%s1097 + $0x24] sm:$0xf]
      %v1108 = vld [vmem:[%s1097 + $0x28] sm:$0xf]
      %v1109 = vld [vmem:[%s1097 + $0x2c] sm:$0xf]
      %v1110 = vld [vmem:[%s1097 + $0x30] sm:$0xf]
      %v1111 = vld [vmem:[%s1097 + $0x34] sm:$0xf]
      %v1112 = vld [vmem:[%s1097 + $0x38] sm:$0xf]
      %v1113 = vld [vmem:[%s1097 + $0x3c] sm:$0xf]
      %v1114 = vrot.slane %v999, 1
      %v1132 = vunpack.c.l.b16 %v1098
      %v1133 = vunpack.c.l.b16 %v1099
      %v1134 = vunpack.c.l.b16 %v1100
      %v1135 = vunpack.c.l.b16 %v1101
      %v1136 = vunpack.c.l.b16 %v1102
      %v1137 = vunpack.c.l.b16 %v1103
      %v1138 = vunpack.c.l.b16 %v1104
      %v1139 = vunpack.c.l.b16 %v1105
      %v1140 = vunpack.c.l.b16 %v1106
      %v1141 = vunpack.c.l.b16 %v1107
      %v1142 = vunpack.c.l.b16 %v1108
      %v1143 = vunpack.c.l.b16 %v1109
      %v1144 = vunpack.c.l.b16 %v1110
      %v1145 = vunpack.c.l.b16 %v1111
      %v1146 = vunpack.c.l.b16 %v1112
      %v1147 = vunpack.c.l.b16 %v1113
      %v1148 = vpack.c.b16 %v1133, %v1132
      %v1149 = vpack.c.b16 %v1135, %v1134
      %v1150 = vpack.c.b16 %v1137, %v1136
      %v1151 = vpack.c.b16 %v1139, %v1138
      %v1152 = vpack.c.b16 %v1141, %v1140
      %v1153 = vpack.c.b16 %v1143, %v1142
      %v1154 = vpack.c.b16 %v1145, %v1144
      %v1155 = vpack.c.b16 %v1147, %v1146
      %1164 = vmatprep.subr.bf16.mxu0 0
      %1165 = vmatpush1.bf16.msra.mxu0 %v1155
      %1166 = vmatprep.subr.bf16.mxu0 0
      %1167 = vmatpush1.bf16.msra.mxu0 %v1154
      %1168 = vmatprep.subr.bf16.mxu0 0
      %1169 = vmatpush1.bf16.msra.mxu0 %v1153
      %1170 = vmatprep.subr.bf16.mxu0 0
      %1171 = vmatpush1.bf16.msra.mxu0 %v1152
      %1172 = vmatprep.subr.bf16.mxu0 0
      %1173 = vmatpush1.bf16.msra.mxu0 %v1151
      %1174 = vmatprep.subr.bf16.mxu0 0
      %1175 = vmatpush1.bf16.msra.mxu0 %v1150
      %1176 = vmatprep.subr.bf16.mxu0 0
      %1177 = vmatpush1.bf16.msra.mxu0 %v1149
      %1178 = vmatprep.subr.bf16.mxu0 0
      %1179 = vmatpush1.bf16.msra.mxu0 %v1148
      %1180 = vmatprep.subr.bf16.mxu0 0
      %1181 = vmatpush2.bf16.msra.mxu0 0
      %1182 = vmatprep.subr.bf16.mxu0 0
      %1183 = vmatpush2.bf16.msra.mxu0 0
      %1184 = vmatprep.subr.bf16.mxu0 0
      %1185 = vmatpush2.bf16.msra.mxu0 0
      %1186 = vmatprep.subr.bf16.mxu0 0
      %1187 = vmatpush2.bf16.msra.mxu0 0
      %1188 = vmatprep.subr.bf16.mxu0 0
      %1189 = vmatpush2.bf16.msra.mxu0 0
      %1190 = vmatprep.subr.bf16.mxu0 0
      %1191 = vmatpush2.bf16.msra.mxu0 0
      %1192 = vmatprep.subr.bf16.mxu0 0
      %1193 = vmatpush2.bf16.msra.mxu0 0
      %1194 = vmatprep.subr.bf16.mxu0 0
      %1195 = vmatpush2.bf16.msra.mxu0 0
      %1196 = vmatprep.mubr.bf16.mxu0 0
      %1197 = vmatmul.mubr.bf16.gmra.mxu0 %v1114
      %v1198 = vpop.f32.mrf.mxu0
      %v1199 = vadd.f32 0.0, %v1198
      %v1200 = vpop.f32.mrf.mxu0
      %v1201 = vpop.f32.mrf.mxu0
      %v1202 = vpop.f32.mrf.mxu0
      %1203 = vdwg.mxu0
      %v1204 = vadd.f32 %v1096, %v1199
      %v1205 = vld [vmem:[%s2] sm:$0x1]
      %v1207 = vlaneseq
      %v1208 = vshrl.u32 %v1207, 7
      %v1209 = vsub.s32 0, %v1208
      %v1210 = vrot.slane %v1205, %v1209
      %v1212 = vadd.f32 %v1204, %v1210
      %v1213 = vmax.f32 %v1212, 0.0
      %v1214 = vpack.c.bf16 %v1213, %v1213
      %1215 = vst [vmem:[%s190] sm:$0xf] %v1214
      %p1216 = scmp.lt.s32.totalorder %s18, 1
      %s1217 = scalar_select %p1216, %s18, 1
      %p1218 = scmp.lt.s32.totalorder %s19, 7
      %s1219 = scalar_select %p1218, %s19, 7
      %s1220 = smul.addr %s1217, 8
      %s1221 = sadd.s32 %s1219, %s1220
      %s1222 = smul.addr %s1221, 4
      %s1223 = scalar_lea.vmem %s3, %s1222
      // Predicated region
      $region33: #{branch_forward.15} parent=31 // pred_check
        %p1224 = pneg %p114
      $region34: #{branch_forward.15} parent=31 // pred_check_branch
        %1226 = sbr.rel (%p1224) target = $region36
      $region35: #{branch_forward.15} parent=31 // pred_region
        _
      $region36: #{branch_forward.15} parent=31 // pred_fallthru
        _
    $region32: #{branch_forward.15} parent=5 // pred_fallthru
      _
    %p1227 = scmp.le.s32.totalorder 2, %s9
    // Predicated region
    $region37: #{branch_forward.15} parent=5 // pred_check
      %p1228 = pneg %p1227
    $region38: #{branch_forward.15} parent=5 // pred_check_branch
      %1230 = sbr.rel (%p1228) target = $region40
    $region39: #{branch_forward.15} parent=5 // pred_region
      %s1231 = ssub.s32 %s9, 2
      // Predicated region
      $region41: #{branch_forward.15} parent=39 // pred_check
        %p1232 = pneg %p120
      $region42: #{branch_forward.15} parent=39 // pred_check_branch
        %1234 = sbr.rel (%p1232) target = $region44
      $region43: #{branch_forward.15} parent=39 // pred_region
        %p1235 = scmp.lt.s32.totalorder %s20, 1
        %s1236 = scalar_select %p1235, %s20, 1
        %p1237 = scmp.lt.s32.totalorder %s21, 7
        %s1238 = scalar_select %p1237, %s21, 7
        %s1239 = smul.addr %s1236, 8
        %s1240 = sadd.s32 %s1238, %s1239
        %s1241 = smul.addr %s1240, 4
        %s1242 = scalar_lea.vmem %s3, %s1241
      $region44: #{branch_forward.15} parent=39 // pred_fallthru
        _
    $region40: #{branch_forward.15} parent=5 // pred_fallthru
      _
  $region6: #{branch_forward.15} parent=0 // loop_footer
    %s13 = sadd.s32 1, %s9
  $region7: #{branch_forward.15} parent=0 // loop_footer_branch
    %8 = sbr.rel target = $region3
  $region8: #{branch_forward.15} parent=0 // loop_exit
    _

</llo_original>
